<compile_context>
chip_gen: v5e
topology: v5e:2x2
jax: 0.10.0
libtpu: 0.0.40
codegen_flags: <defaults>
</compile_context>

<pallas_src>
import jax
import jax.numpy as jnp
from jax.experimental import pallas as pl
from jax.experimental.pallas import tpu as pltpu


def _make_kernel(batch_block, c_in, c_out, wp, s_out):
    """Fused conv3d(3x3x3) + BatchNorm(eval) + ReLU kernel body (closure over statics)."""

    def kernel(x0_ref, x1_ref, x2_ref, w_ref, scale_ref, shift_ref, o_ref):
        # x*_ref : (BN, 1, C_in, (H+3)*(W+2))   padded depth slabs d+0, d+1, d+2
        # w_ref  : (3, 3, C_out, 3*C_in)        weights, columns ordered (kw, ci)
        # scale/shift : (C_out, 1)              folded conv-bias + BatchNorm (eval)
        # o_ref  : (BN, 1, C_out, H*(W+2))
        scale = scale_ref[...]
        shift = shift_ref[...]
        x_refs = (x0_ref, x1_ref, x2_ref)
        for b in range(batch_block):                       # small static unroll
            acc = jnp.zeros((c_out, s_out), dtype=jnp.float32)
            for kd in range(3):
                slab = x_refs[kd][b, 0]                    # (C_in, (H+3)*(W+2))
                for kh in range(3):
                    base = kh * wp
                    # The three kw taps are constant-offset lane slices of the slab;
                    # stacked over sublanes they form a (3*C_in, H*(W+2)) patch.
                    patch = jnp.concatenate(
                        [slab[:, base + kw: base + kw + s_out] for kw in range(3)],
                        axis=0)
                    acc = acc + jnp.dot(w_ref[kd, kh], patch,
                                        preferred_element_type=jnp.float32)
            y = jnp.maximum(acc * scale + shift, 0.0)      # fused BN(eval) + ReLU
            o_ref[b, 0] = y.astype(o_ref.dtype)

    return kernel


def common_3d_forward(x, conv_w, conv_b, gamma, beta, running_mean, running_var,
                      eps=1e-5, batch_block=None, use_bf16_inputs=False):
    """relu(batchnorm3d(conv3d(x))).  x: (N, C_in, D, H, W) -> (N, C_out, D, H, W)."""
    N, C_in, D, H, W = x.shape
    C_out = conv_w.shape[0]
    # +1 halo on every side; H gets 2 trailing pad rows so every (kh, kw) tap slice
    # (start <= 2*(W+2)+2, length H*(W+2)) stays inside the slab.
    Dp, Hp, Wp = D + 2, H + 3, W + 2
    Sin, Sout = Hp * Wp, H * Wp

    # --- pad once; per-(n, dp) slabs are channels-major and spatially flattened ----------
    xp = jnp.pad(x, ((0, 0), (0, 0), (1, 1), (1, 2), (1, 1)))       # (N, C_in, Dp, Hp, Wp)
    xp = jnp.transpose(xp, (0, 2, 1, 3, 4)).reshape(N, Dp, C_in, Sin)

    # --- weights: (kd, kh, C_out, kw*C_in) to match the in-kernel patch ordering ---------
    w_mat = jnp.transpose(conv_w, (2, 3, 0, 4, 1)).reshape(3, 3, C_out, 3 * C_in)

    # --- fold conv bias + BatchNorm(eval) into per-channel scale / shift -----------------
    inv_std = 1.0 / jnp.sqrt(running_var.astype(jnp.float32) + eps)
    scale = (gamma * inv_std).astype(jnp.float32).reshape(C_out, 1)
    shift = (beta + (conv_b - running_mean) * gamma * inv_std).astype(
        jnp.float32).reshape(C_out, 1)

    if use_bf16_inputs:
        # Optional: halves the dominant HBM read stream; accumulation stays f32.
        xp = xp.astype(jnp.bfloat16)
        w_mat = w_mat.astype(jnp.bfloat16)
    in_itemsize = xp.dtype.itemsize

    # --- per-step batch block: as large as the batch allows within a VMEM budget --------
    if batch_block is None:
        per_b = (2 * (3 * C_in * Sin * in_itemsize + C_out * Sout * 4)   # double-buffered blocks
                 + (3 * C_in + 2 * C_out) * Sout * 4)                    # in-kernel patch + acc
        budget = 24 * 1024 * 1024
        batch_block = 1
        for cand in range(1, N + 1):
            if N % cand == 0 and cand * per_b <= budget:
                batch_block = cand
    assert N % batch_block == 0, "batch_block must divide N"
    BN = batch_block

    # --- VMEM limit from the actual footprint, capped per generation --------------------
    step_bytes = (2 * BN * (3 * C_in * Sin * in_itemsize + C_out * Sout * 4)
                  + 9 * C_out * 3 * C_in * in_itemsize
                  + BN * (3 * C_in + 2 * C_out) * Sout * 4)
    try:
        vmem_cap = int(pltpu.get_tpu_info().vmem_capacity_bytes)
    except Exception:  # conservative fallback (v7x has 64 MiB per TensorCore)
        vmem_cap = 64 * 1024 * 1024
    vmem_limit = int(min(0.75 * vmem_cap, max(32 * 1024 * 1024, 2 * step_bytes)))

    kernel = _make_kernel(BN, C_in, C_out, Wp, Sout)

    grid = (N // BN, D)          # fully parallel; even total -> both v7x TCs stay busy

    def slab_spec(kd):
        return pl.BlockSpec((BN, 1, C_in, Sin),
                            lambda ib, d, kd=kd: (ib, d + kd, 0, 0))

    flops = 2 * N * D * 27 * C_in * C_out * Sout
    bytes_accessed = (3 * xp.size * in_itemsize                 # three kd-shifted slab reads
                      + w_mat.size * in_itemsize + 2 * C_out * 4
                      + N * D * C_out * Sout * 4)

    out = pl.pallas_call(
        kernel,
        out_shape=jax.ShapeDtypeStruct((N, D, C_out, Sout), jnp.float32),
        grid=grid,
        in_specs=[
            slab_spec(0), slab_spec(1), slab_spec(2),
            pl.BlockSpec((3, 3, C_out, 3 * C_in), lambda ib, d: (0, 0, 0, 0)),
            pl.BlockSpec((C_out, 1), lambda ib, d: (0, 0)),
            pl.BlockSpec((C_out, 1), lambda ib, d: (0, 0)),
        ],
        out_specs=pl.BlockSpec((BN, 1, C_out, Sout), lambda ib, d: (ib, d, 0, 0)),
        compiler_params=pltpu.CompilerParams(
            dimension_semantics=("parallel", "parallel"),
            vmem_limit_bytes=vmem_limit,
        ),
        cost_estimate=pl.CostEstimate(flops=flops, transcendentals=0,
                                      bytes_accessed=bytes_accessed),
    )(xp, xp, xp, w_mat, scale, shift)

    # Output columns are (h, w') with w' in [0, W+2); the last 2 columns per row are
    # out-of-image garbage -> crop, then back to NCDHW (required by the module spec).
    out = out.reshape(N, D, C_out, H, Wp)[..., :W]
    return jnp.transpose(out, (0, 2, 1, 3, 4))


def _reference(x, conv_w, conv_b, gamma, beta, mean, var, eps=1e-5):
    z = jax.lax.conv_general_dilated(
        x, conv_w, window_strides=(1, 1, 1),
        padding=((1, 1), (1, 1), (1, 1)),
        dimension_numbers=("NCDHW", "OIDHW", "NCDHW"),
        precision=jax.lax.Precision.HIGHEST)
    z = z + conv_b[None, :, None, None, None]
    z = (z - mean[None, :, None, None, None]) / jnp.sqrt(var + eps)[None, :, None, None, None]
    z = z * gamma[None, :, None, None, None] + beta[None, :, None, None, None]
    return jnp.maximum(z, 0.0)


if __name__ == "__main__":
    N, C_in, C_out = 2, 4, 32
    D, H, W = 8, 16, 16

    key = jax.random.PRNGKey(0)
    k_x, k_w, k_b, k_g, k_be, k_m, k_v = jax.random.split(key, 7)

    x = jax.random.normal(k_x, (N, C_in, D, H, W), dtype=jnp.float32)
    fan_in = C_in * 3 * 3 * 3
    conv_w = jax.random.normal(k_w, (C_out, C_in, 3, 3, 3), dtype=jnp.float32) / jnp.sqrt(
        jnp.float32(fan_in))
    conv_b = 0.1 * jax.random.normal(k_b, (C_out,), dtype=jnp.float32)
    gamma = 1.0 + 0.1 * jax.random.normal(k_g, (C_out,), dtype=jnp.float32)
    beta = 0.1 * jax.random.normal(k_be, (C_out,), dtype=jnp.float32)
    running_mean = 0.1 * jax.random.normal(k_m, (C_out,), dtype=jnp.float32)
    running_var = jnp.abs(1.0 + 0.1 * jax.random.normal(k_v, (C_out,), dtype=jnp.float32))

    out = common_3d_forward(x, conv_w, conv_b, gamma, beta, running_mean, running_var)
    out = jax.block_until_ready(out)

    ref = _reference(x, conv_w, conv_b, gamma, beta, running_mean, running_var)
    assert out.shape == (N, C_out, D, H, W)
    assert jnp.allclose(out, ref, atol=1e-4, rtol=1e-4), float(jnp.max(jnp.abs(out - ref)))
    print("KERNEL_OK")
</pallas_src>

<mosaic_0001>
module attributes {stable_mosaic.version = 11 : i64} {
  func.func @kernel(%arg0: i32, %arg1: i32, %arg2: memref<2x1x4x342xf32, #tpu.memory_space<vmem>>, %arg3: memref<2x1x4x342xf32, #tpu.memory_space<vmem>>, %arg4: memref<2x1x4x342xf32, #tpu.memory_space<vmem>>, %arg5: memref<3x3x32x12xf32, #tpu.memory_space<vmem>>, %arg6: memref<32x1xf32, #tpu.memory_space<vmem>>, %arg7: memref<32x1xf32, #tpu.memory_space<vmem>>, %arg8: memref<2x1x32x288xf32, #tpu.memory_space<vmem>>) attributes {dimension_semantics = [#tpu.dimension_semantics<parallel>, #tpu.dimension_semantics<parallel>], iteration_bounds = array<i64: 1, 8>, scalar_prefetch = 0 : i64, scratch_operands = 0 : i64, tpu.core_type = #tpu.core_type<tc>, window_params = [{transform_indices = @transform_0, window_bounds = array<i64: 2, 1, 4, 342>}, {transform_indices = @transform_1, window_bounds = array<i64: 2, 1, 4, 342>}, {transform_indices = @transform_2, window_bounds = array<i64: 2, 1, 4, 342>}, {pipeline_mode = #tpu.pipeline_mode<synchronous>, transform_indices = @transform_3, window_bounds = array<i64: 3, 3, 32, 12>}, {pipeline_mode = #tpu.pipeline_mode<synchronous>, transform_indices = @transform_4, window_bounds = array<i64: 32, 1>}, {pipeline_mode = #tpu.pipeline_mode<synchronous>, transform_indices = @transform_5, window_bounds = array<i64: 32, 1>}, {transform_indices = @transform_6, window_bounds = array<i64: 2, 1, 32, 288>}]} {
    %c0 = arith.constant 0 : index
    %c0_0 = arith.constant 0 : index
    %0 = vector.load %arg6[%c0, %c0_0] : memref<32x1xf32, #tpu.memory_space<vmem>>, vector<32x1xf32>
    %c0_1 = arith.constant 0 : index
    %c0_2 = arith.constant 0 : index
    %1 = vector.load %arg7[%c0_1, %c0_2] : memref<32x1xf32, #tpu.memory_space<vmem>>, vector<32x1xf32>
    %cst = arith.constant 0.000000e+00 : f32
    %2 = vector.broadcast %cst : f32 to vector<32x288xf32>
    %c0_3 = arith.constant 0 : index
    %c0_4 = arith.constant 0 : index
    %c0_5 = arith.constant 0 : index
    %c0_6 = arith.constant 0 : index
    %3 = vector.load %arg2[%c0_3, %c0_4, %c0_5, %c0_6] : memref<2x1x4x342xf32, #tpu.memory_space<vmem>>, vector<1x1x4x342xf32>
    %4 = vector.shape_cast %3 : vector<1x1x4x342xf32> to vector<4x342xf32>
    %5 = vector.extract_strided_slice %4 {offsets = [0, 0], sizes = [4, 288], strides = [1, 1]} : vector<4x342xf32> to vector<4x288xf32>
    %6 = vector.extract_strided_slice %4 {offsets = [0, 1], sizes = [4, 288], strides = [1, 1]} : vector<4x342xf32> to vector<4x288xf32>
    %7 = vector.extract_strided_slice %4 {offsets = [0, 2], sizes = [4, 288], strides = [1, 1]} : vector<4x342xf32> to vector<4x288xf32>
    %8 = tpu.concatenate %5, %6, %7 in 0 : vector<4x288xf32>, vector<4x288xf32>, vector<4x288xf32> -> vector<12x288xf32>
    %c0_7 = arith.constant 0 : index
    %c0_8 = arith.constant 0 : index
    %c0_9 = arith.constant 0 : index
    %c0_10 = arith.constant 0 : index
    %9 = vector.load %arg5[%c0_7, %c0_8, %c0_9, %c0_10] : memref<3x3x32x12xf32, #tpu.memory_space<vmem>>, vector<1x1x32x12xf32>
    %10 = vector.shape_cast %9 : vector<1x1x32x12xf32> to vector<32x12xf32>
    %cst_11 = arith.constant dense<0.000000e+00> : vector<32x288xf32>
    %11 = tpu.matmul %10, %8, %cst_11 {dimension_numbers = #tpu.dot_dimension_numbers<[1], [0], [0], [1], [0, 0, 1, 1], [], []>} : vector<32x12xf32>, vector<12x288xf32>, vector<32x288xf32> -> vector<32x288xf32>
    %12 = arith.addf %2, %11 : vector<32x288xf32>
    %13 = vector.extract_strided_slice %4 {offsets = [0, 18], sizes = [4, 288], strides = [1, 1]} : vector<4x342xf32> to vector<4x288xf32>
    %14 = vector.extract_strided_slice %4 {offsets = [0, 19], sizes = [4, 288], strides = [1, 1]} : vector<4x342xf32> to vector<4x288xf32>
    %15 = vector.extract_strided_slice %4 {offsets = [0, 20], sizes = [4, 288], strides = [1, 1]} : vector<4x342xf32> to vector<4x288xf32>
    %16 = tpu.concatenate %13, %14, %15 in 0 : vector<4x288xf32>, vector<4x288xf32>, vector<4x288xf32> -> vector<12x288xf32>
    %c0_12 = arith.constant 0 : index
    %c1 = arith.constant 1 : index
    %c0_13 = arith.constant 0 : index
    %c0_14 = arith.constant 0 : index
    %17 = vector.load %arg5[%c0_12, %c1, %c0_13, %c0_14] : memref<3x3x32x12xf32, #tpu.memory_space<vmem>>, vector<1x1x32x12xf32>
    %18 = vector.shape_cast %17 : vector<1x1x32x12xf32> to vector<32x12xf32>
    %cst_15 = arith.constant dense<0.000000e+00> : vector<32x288xf32>
    %19 = tpu.matmul %18, %16, %cst_15 {dimension_numbers = #tpu.dot_dimension_numbers<[1], [0], [0], [1], [0, 0, 1, 1], [], []>} : vector<32x12xf32>, vector<12x288xf32>, vector<32x288xf32> -> vector<32x288xf32>
    %20 = arith.addf %12, %19 : vector<32x288xf32>
    %21 = vector.extract_strided_slice %4 {offsets = [0, 36], sizes = [4, 288], strides = [1, 1]} : vector<4x342xf32> to vector<4x288xf32>
    %22 = vector.extract_strided_slice %4 {offsets = [0, 37], sizes = [4, 288], strides = [1, 1]} : vector<4x342xf32> to vector<4x288xf32>
    %23 = vector.extract_strided_slice %4 {offsets = [0, 38], sizes = [4, 288], strides = [1, 1]} : vector<4x342xf32> to vector<4x288xf32>
    %24 = tpu.concatenate %21, %22, %23 in 0 : vector<4x288xf32>, vector<4x288xf32>, vector<4x288xf32> -> vector<12x288xf32>
    %c0_16 = arith.constant 0 : index
    %c2 = arith.constant 2 : index
    %c0_17 = arith.constant 0 : index
    %c0_18 = arith.constant 0 : index
    %25 = vector.load %arg5[%c0_16, %c2, %c0_17, %c0_18] : memref<3x3x32x12xf32, #tpu.memory_space<vmem>>, vector<1x1x32x12xf32>
    %26 = vector.shape_cast %25 : vector<1x1x32x12xf32> to vector<32x12xf32>
    %cst_19 = arith.constant dense<0.000000e+00> : vector<32x288xf32>
    %27 = tpu.matmul %26, %24, %cst_19 {dimension_numbers = #tpu.dot_dimension_numbers<[1], [0], [0], [1], [0, 0, 1, 1], [], []>} : vector<32x12xf32>, vector<12x288xf32>, vector<32x288xf32> -> vector<32x288xf32>
    %28 = arith.addf %20, %27 : vector<32x288xf32>
    %c0_20 = arith.constant 0 : index
    %c0_21 = arith.constant 0 : index
    %c0_22 = arith.constant 0 : index
    %c0_23 = arith.constant 0 : index
    %29 = vector.load %arg3[%c0_20, %c0_21, %c0_22, %c0_23] : memref<2x1x4x342xf32, #tpu.memory_space<vmem>>, vector<1x1x4x342xf32>
    %30 = vector.shape_cast %29 : vector<1x1x4x342xf32> to vector<4x342xf32>
    %31 = vector.extract_strided_slice %30 {offsets = [0, 0], sizes = [4, 288], strides = [1, 1]} : vector<4x342xf32> to vector<4x288xf32>
    %32 = vector.extract_strided_slice %30 {offsets = [0, 1], sizes = [4, 288], strides = [1, 1]} : vector<4x342xf32> to vector<4x288xf32>
    %33 = vector.extract_strided_slice %30 {offsets = [0, 2], sizes = [4, 288], strides = [1, 1]} : vector<4x342xf32> to vector<4x288xf32>
    %34 = tpu.concatenate %31, %32, %33 in 0 : vector<4x288xf32>, vector<4x288xf32>, vector<4x288xf32> -> vector<12x288xf32>
    %c1_24 = arith.constant 1 : index
    %c0_25 = arith.constant 0 : index
    %c0_26 = arith.constant 0 : index
    %c0_27 = arith.constant 0 : index
    %35 = vector.load %arg5[%c1_24, %c0_25, %c0_26, %c0_27] : memref<3x3x32x12xf32, #tpu.memory_space<vmem>>, vector<1x1x32x12xf32>
    %36 = vector.shape_cast %35 : vector<1x1x32x12xf32> to vector<32x12xf32>
    %cst_28 = arith.constant dense<0.000000e+00> : vector<32x288xf32>
    %37 = tpu.matmul %36, %34, %cst_28 {dimension_numbers = #tpu.dot_dimension_numbers<[1], [0], [0], [1], [0, 0, 1, 1], [], []>} : vector<32x12xf32>, vector<12x288xf32>, vector<32x288xf32> -> vector<32x288xf32>
    %38 = arith.addf %28, %37 : vector<32x288xf32>
    %39 = vector.extract_strided_slice %30 {offsets = [0, 18], sizes = [4, 288], strides = [1, 1]} : vector<4x342xf32> to vector<4x288xf32>
    %40 = vector.extract_strided_slice %30 {offsets = [0, 19], sizes = [4, 288], strides = [1, 1]} : vector<4x342xf32> to vector<4x288xf32>
    %41 = vector.extract_strided_slice %30 {offsets = [0, 20], sizes = [4, 288], strides = [1, 1]} : vector<4x342xf32> to vector<4x288xf32>
    %42 = tpu.concatenate %39, %40, %41 in 0 : vector<4x288xf32>, vector<4x288xf32>, vector<4x288xf32> -> vector<12x288xf32>
    %c1_29 = arith.constant 1 : index
    %c1_30 = arith.constant 1 : index
    %c0_31 = arith.constant 0 : index
    %c0_32 = arith.constant 0 : index
    %43 = vector.load %arg5[%c1_29, %c1_30, %c0_31, %c0_32] : memref<3x3x32x12xf32, #tpu.memory_space<vmem>>, vector<1x1x32x12xf32>
    %44 = vector.shape_cast %43 : vector<1x1x32x12xf32> to vector<32x12xf32>
    %cst_33 = arith.constant dense<0.000000e+00> : vector<32x288xf32>
    %45 = tpu.matmul %44, %42, %cst_33 {dimension_numbers = #tpu.dot_dimension_numbers<[1], [0], [0], [1], [0, 0, 1, 1], [], []>} : vector<32x12xf32>, vector<12x288xf32>, vector<32x288xf32> -> vector<32x288xf32>
    %46 = arith.addf %38, %45 : vector<32x288xf32>
    %47 = vector.extract_strided_slice %30 {offsets = [0, 36], sizes = [4, 288], strides = [1, 1]} : vector<4x342xf32> to vector<4x288xf32>
    %48 = vector.extract_strided_slice %30 {offsets = [0, 37], sizes = [4, 288], strides = [1, 1]} : vector<4x342xf32> to vector<4x288xf32>
    %49 = vector.extract_strided_slice %30 {offsets = [0, 38], sizes = [4, 288], strides = [1, 1]} : vector<4x342xf32> to vector<4x288xf32>
    %50 = tpu.concatenate %47, %48, %49 in 0 : vector<4x288xf32>, vector<4x288xf32>, vector<4x288xf32> -> vector<12x288xf32>
    %c1_34 = arith.constant 1 : index
    %c2_35 = arith.constant 2 : index
    %c0_36 = arith.constant 0 : index
    %c0_37 = arith.constant 0 : index
    %51 = vector.load %arg5[%c1_34, %c2_35, %c0_36, %c0_37] : memref<3x3x32x12xf32, #tpu.memory_space<vmem>>, vector<1x1x32x12xf32>
    %52 = vector.shape_cast %51 : vector<1x1x32x12xf32> to vector<32x12xf32>
    %cst_38 = arith.constant dense<0.000000e+00> : vector<32x288xf32>
    %53 = tpu.matmul %52, %50, %cst_38 {dimension_numbers = #tpu.dot_dimension_numbers<[1], [0], [0], [1], [0, 0, 1, 1], [], []>} : vector<32x12xf32>, vector<12x288xf32>, vector<32x288xf32> -> vector<32x288xf32>
    %54 = arith.addf %46, %53 : vector<32x288xf32>
    %c0_39 = arith.constant 0 : index
    %c0_40 = arith.constant 0 : index
    %c0_41 = arith.constant 0 : index
    %c0_42 = arith.constant 0 : index
    %55 = vector.load %arg4[%c0_39, %c0_40, %c0_41, %c0_42] : memref<2x1x4x342xf32, #tpu.memory_space<vmem>>, vector<1x1x4x342xf32>
    %56 = vector.shape_cast %55 : vector<1x1x4x342xf32> to vector<4x342xf32>
    %57 = vector.extract_strided_slice %56 {offsets = [0, 0], sizes = [4, 288], strides = [1, 1]} : vector<4x342xf32> to vector<4x288xf32>
    %58 = vector.extract_strided_slice %56 {offsets = [0, 1], sizes = [4, 288], strides = [1, 1]} : vector<4x342xf32> to vector<4x288xf32>
    %59 = vector.extract_strided_slice %56 {offsets = [0, 2], sizes = [4, 288], strides = [1, 1]} : vector<4x342xf32> to vector<4x288xf32>
    %60 = tpu.concatenate %57, %58, %59 in 0 : vector<4x288xf32>, vector<4x288xf32>, vector<4x288xf32> -> vector<12x288xf32>
    %c2_43 = arith.constant 2 : index
    %c0_44 = arith.constant 0 : index
    %c0_45 = arith.constant 0 : index
    %c0_46 = arith.constant 0 : index
    %61 = vector.load %arg5[%c2_43, %c0_44, %c0_45, %c0_46] : memref<3x3x32x12xf32, #tpu.memory_space<vmem>>, vector<1x1x32x12xf32>
    %62 = vector.shape_cast %61 : vector<1x1x32x12xf32> to vector<32x12xf32>
    %cst_47 = arith.constant dense<0.000000e+00> : vector<32x288xf32>
    %63 = tpu.matmul %62, %60, %cst_47 {dimension_numbers = #tpu.dot_dimension_numbers<[1], [0], [0], [1], [0, 0, 1, 1], [], []>} : vector<32x12xf32>, vector<12x288xf32>, vector<32x288xf32> -> vector<32x288xf32>
    %64 = arith.addf %54, %63 : vector<32x288xf32>
    %65 = vector.extract_strided_slice %56 {offsets = [0, 18], sizes = [4, 288], strides = [1, 1]} : vector<4x342xf32> to vector<4x288xf32>
    %66 = vector.extract_strided_slice %56 {offsets = [0, 19], sizes = [4, 288], strides = [1, 1]} : vector<4x342xf32> to vector<4x288xf32>
    %67 = vector.extract_strided_slice %56 {offsets = [0, 20], sizes = [4, 288], strides = [1, 1]} : vector<4x342xf32> to vector<4x288xf32>
    %68 = tpu.concatenate %65, %66, %67 in 0 : vector<4x288xf32>, vector<4x288xf32>, vector<4x288xf32> -> vector<12x288xf32>
    %c2_48 = arith.constant 2 : index
    %c1_49 = arith.constant 1 : index
    %c0_50 = arith.constant 0 : index
    %c0_51 = arith.constant 0 : index
    %69 = vector.load %arg5[%c2_48, %c1_49, %c0_50, %c0_51] : memref<3x3x32x12xf32, #tpu.memory_space<vmem>>, vector<1x1x32x12xf32>
    %70 = vector.shape_cast %69 : vector<1x1x32x12xf32> to vector<32x12xf32>
    %cst_52 = arith.constant dense<0.000000e+00> : vector<32x288xf32>
    %71 = tpu.matmul %70, %68, %cst_52 {dimension_numbers = #tpu.dot_dimension_numbers<[1], [0], [0], [1], [0, 0, 1, 1], [], []>} : vector<32x12xf32>, vector<12x288xf32>, vector<32x288xf32> -> vector<32x288xf32>
    %72 = arith.addf %64, %71 : vector<32x288xf32>
    %73 = vector.extract_strided_slice %56 {offsets = [0, 36], sizes = [4, 288], strides = [1, 1]} : vector<4x342xf32> to vector<4x288xf32>
    %74 = vector.extract_strided_slice %56 {offsets = [0, 37], sizes = [4, 288], strides = [1, 1]} : vector<4x342xf32> to vector<4x288xf32>
    %75 = vector.extract_strided_slice %56 {offsets = [0, 38], sizes = [4, 288], strides = [1, 1]} : vector<4x342xf32> to vector<4x288xf32>
    %76 = tpu.concatenate %73, %74, %75 in 0 : vector<4x288xf32>, vector<4x288xf32>, vector<4x288xf32> -> vector<12x288xf32>
    %c2_53 = arith.constant 2 : index
    %c2_54 = arith.constant 2 : index
    %c0_55 = arith.constant 0 : index
    %c0_56 = arith.constant 0 : index
    %77 = vector.load %arg5[%c2_53, %c2_54, %c0_55, %c0_56] : memref<3x3x32x12xf32, #tpu.memory_space<vmem>>, vector<1x1x32x12xf32>
    %78 = vector.shape_cast %77 : vector<1x1x32x12xf32> to vector<32x12xf32>
    %cst_57 = arith.constant dense<0.000000e+00> : vector<32x288xf32>
    %79 = tpu.matmul %78, %76, %cst_57 {dimension_numbers = #tpu.dot_dimension_numbers<[1], [0], [0], [1], [0, 0, 1, 1], [], []>} : vector<32x12xf32>, vector<12x288xf32>, vector<32x288xf32> -> vector<32x288xf32>
    %80 = arith.addf %72, %79 : vector<32x288xf32>
    %81 = vector.broadcast %0 : vector<32x1xf32> to vector<32x288xf32>
    %82 = arith.mulf %80, %81 : vector<32x288xf32>
    %83 = vector.broadcast %1 : vector<32x1xf32> to vector<32x288xf32>
    %84 = arith.addf %82, %83 : vector<32x288xf32>
    %cst_58 = arith.constant 0.000000e+00 : f32
    %85 = vector.broadcast %cst_58 : f32 to vector<32x288xf32>
    %86 = arith.maximumf %84, %85 : vector<32x288xf32>
    %c0_59 = arith.constant 0 : index
    %c0_60 = arith.constant 0 : index
    %c0_61 = arith.constant 0 : index
    %c0_62 = arith.constant 0 : index
    %87 = vector.load %arg8[%c0_59, %c0_60, %c0_61, %c0_62] : memref<2x1x32x288xf32, #tpu.memory_space<vmem>>, vector<1x1x32x288xf32>
    %88 = vector.shape_cast %87 : vector<1x1x32x288xf32> to vector<32x288xf32>
    %89 = vector.shape_cast %86 : vector<32x288xf32> to vector<1x1x32x288xf32>
    tpu.vector_store %arg8[%c0_59, %c0_60, %c0_61, %c0_62], %89 {strides = array<i32>} : memref<2x1x32x288xf32, #tpu.memory_space<vmem>>, vector<1x1x32x288xf32>,
    %cst_63 = arith.constant 0.000000e+00 : f32
    %90 = vector.broadcast %cst_63 : f32 to vector<32x288xf32>
    %c1_64 = arith.constant 1 : index
    %c0_65 = arith.constant 0 : index
    %c0_66 = arith.constant 0 : index
    %c0_67 = arith.constant 0 : index
    %91 = vector.load %arg2[%c1_64, %c0_65, %c0_66, %c0_67] : memref<2x1x4x342xf32, #tpu.memory_space<vmem>>, vector<1x1x4x342xf32>
    %92 = vector.shape_cast %91 : vector<1x1x4x342xf32> to vector<4x342xf32>
    %93 = vector.extract_strided_slice %92 {offsets = [0, 0], sizes = [4, 288], strides = [1, 1]} : vector<4x342xf32> to vector<4x288xf32>
    %94 = vector.extract_strided_slice %92 {offsets = [0, 1], sizes = [4, 288], strides = [1, 1]} : vector<4x342xf32> to vector<4x288xf32>
    %95 = vector.extract_strided_slice %92 {offsets = [0, 2], sizes = [4, 288], strides = [1, 1]} : vector<4x342xf32> to vector<4x288xf32>
    %96 = tpu.concatenate %93, %94, %95 in 0 : vector<4x288xf32>, vector<4x288xf32>, vector<4x288xf32> -> vector<12x288xf32>
    %c0_68 = arith.constant 0 : index
    %c0_69 = arith.constant 0 : index
    %c0_70 = arith.constant 0 : index
    %c0_71 = arith.constant 0 : index
    %97 = vector.load %arg5[%c0_68, %c0_69, %c0_70, %c0_71] : memref<3x3x32x12xf32, #tpu.memory_space<vmem>>, vector<1x1x32x12xf32>
    %98 = vector.shape_cast %97 : vector<1x1x32x12xf32> to vector<32x12xf32>
    %cst_72 = arith.constant dense<0.000000e+00> : vector<32x288xf32>
    %99 = tpu.matmul %98, %96, %cst_72 {dimension_numbers = #tpu.dot_dimension_numbers<[1], [0], [0], [1], [0, 0, 1, 1], [], []>} : vector<32x12xf32>, vector<12x288xf32>, vector<32x288xf32> -> vector<32x288xf32>
    %100 = arith.addf %90, %99 : vector<32x288xf32>
    %101 = vector.extract_strided_slice %92 {offsets = [0, 18], sizes = [4, 288], strides = [1, 1]} : vector<4x342xf32> to vector<4x288xf32>
    %102 = vector.extract_strided_slice %92 {offsets = [0, 19], sizes = [4, 288], strides = [1, 1]} : vector<4x342xf32> to vector<4x288xf32>
    %103 = vector.extract_strided_slice %92 {offsets = [0, 20], sizes = [4, 288], strides = [1, 1]} : vector<4x342xf32> to vector<4x288xf32>
    %104 = tpu.concatenate %101, %102, %103 in 0 : vector<4x288xf32>, vector<4x288xf32>, vector<4x288xf32> -> vector<12x288xf32>
    %c0_73 = arith.constant 0 : index
    %c1_74 = arith.constant 1 : index
    %c0_75 = arith.constant 0 : index
    %c0_76 = arith.constant 0 : index
    %105 = vector.load %arg5[%c0_73, %c1_74, %c0_75, %c0_76] : memref<3x3x32x12xf32, #tpu.memory_space<vmem>>, vector<1x1x32x12xf32>
    %106 = vector.shape_cast %105 : vector<1x1x32x12xf32> to vector<32x12xf32>
    %cst_77 = arith.constant dense<0.000000e+00> : vector<32x288xf32>
    %107 = tpu.matmul %106, %104, %cst_77 {dimension_numbers = #tpu.dot_dimension_numbers<[1], [0], [0], [1], [0, 0, 1, 1], [], []>} : vector<32x12xf32>, vector<12x288xf32>, vector<32x288xf32> -> vector<32x288xf32>
    %108 = arith.addf %100, %107 : vector<32x288xf32>
    %109 = vector.extract_strided_slice %92 {offsets = [0, 36], sizes = [4, 288], strides = [1, 1]} : vector<4x342xf32> to vector<4x288xf32>
    %110 = vector.extract_strided_slice %92 {offsets = [0, 37], sizes = [4, 288], strides = [1, 1]} : vector<4x342xf32> to vector<4x288xf32>
    %111 = vector.extract_strided_slice %92 {offsets = [0, 38], sizes = [4, 288], strides = [1, 1]} : vector<4x342xf32> to vector<4x288xf32>
    %112 = tpu.concatenate %109, %110, %111 in 0 : vector<4x288xf32>, vector<4x288xf32>, vector<4x288xf32> -> vector<12x288xf32>
    %c0_78 = arith.constant 0 : index
    %c2_79 = arith.constant 2 : index
    %c0_80 = arith.constant 0 : index
    %c0_81 = arith.constant 0 : index
    %113 = vector.load %arg5[%c0_78, %c2_79, %c0_80, %c0_81] : memref<3x3x32x12xf32, #tpu.memory_space<vmem>>, vector<1x1x32x12xf32>
    %114 = vector.shape_cast %113 : vector<1x1x32x12xf32> to vector<32x12xf32>
    %cst_82 = arith.constant dense<0.000000e+00> : vector<32x288xf32>
    %115 = tpu.matmul %114, %112, %cst_82 {dimension_numbers = #tpu.dot_dimension_numbers<[1], [0], [0], [1], [0, 0, 1, 1], [], []>} : vector<32x12xf32>, vector<12x288xf32>, vector<32x288xf32> -> vector<32x288xf32>
    %116 = arith.addf %108, %115 : vector<32x288xf32>
    %c1_83 = arith.constant 1 : index
    %c0_84 = arith.constant 0 : index
    %c0_85 = arith.constant 0 : index
    %c0_86 = arith.constant 0 : index
    %117 = vector.load %arg3[%c1_83, %c0_84, %c0_85, %c0_86] : memref<2x1x4x342xf32, #tpu.memory_space<vmem>>, vector<1x1x4x342xf32>
    %118 = vector.shape_cast %117 : vector<1x1x4x342xf32> to vector<4x342xf32>
    %119 = vector.extract_strided_slice %118 {offsets = [0, 0], sizes = [4, 288], strides = [1, 1]} : vector<4x342xf32> to vector<4x288xf32>
    %120 = vector.extract_strided_slice %118 {offsets = [0, 1], sizes = [4, 288], strides = [1, 1]} : vector<4x342xf32> to vector<4x288xf32>
    %121 = vector.extract_strided_slice %118 {offsets = [0, 2], sizes = [4, 288], strides = [1, 1]} : vector<4x342xf32> to vector<4x288xf32>
    %122 = tpu.concatenate %119, %120, %121 in 0 : vector<4x288xf32>, vector<4x288xf32>, vector<4x288xf32> -> vector<12x288xf32>
    %c1_87 = arith.constant 1 : index
    %c0_88 = arith.constant 0 : index
    %c0_89 = arith.constant 0 : index
    %c0_90 = arith.constant 0 : index
    %123 = vector.load %arg5[%c1_87, %c0_88, %c0_89, %c0_90] : memref<3x3x32x12xf32, #tpu.memory_space<vmem>>, vector<1x1x32x12xf32>
    %124 = vector.shape_cast %123 : vector<1x1x32x12xf32> to vector<32x12xf32>
    %cst_91 = arith.constant dense<0.000000e+00> : vector<32x288xf32>
    %125 = tpu.matmul %124, %122, %cst_91 {dimension_numbers = #tpu.dot_dimension_numbers<[1], [0], [0], [1], [0, 0, 1, 1], [], []>} : vector<32x12xf32>, vector<12x288xf32>, vector<32x288xf32> -> vector<32x288xf32>
    %126 = arith.addf %116, %125 : vector<32x288xf32>
    %127 = vector.extract_strided_slice %118 {offsets = [0, 18], sizes = [4, 288], strides = [1, 1]} : vector<4x342xf32> to vector<4x288xf32>
    %128 = vector.extract_strided_slice %118 {offsets = [0, 19], sizes = [4, 288], strides = [1, 1]} : vector<4x342xf32> to vector<4x288xf32>
    %129 = vector.extract_strided_slice %118 {offsets = [0, 20], sizes = [4, 288], strides = [1, 1]} : vector<4x342xf32> to vector<4x288xf32>
    %130 = tpu.concatenate %127, %128, %129 in 0 : vector<4x288xf32>, vector<4x288xf32>, vector<4x288xf32> -> vector<12x288xf32>
    %c1_92 = arith.constant 1 : index
    %c1_93 = arith.constant 1 : index
    %c0_94 = arith.constant 0 : index
    %c0_95 = arith.constant 0 : index
    %131 = vector.load %arg5[%c1_92, %c1_93, %c0_94, %c0_95] : memref<3x3x32x12xf32, #tpu.memory_space<vmem>>, vector<1x1x32x12xf32>
    %132 = vector.shape_cast %131 : vector<1x1x32x12xf32> to vector<32x12xf32>
    %cst_96 = arith.constant dense<0.000000e+00> : vector<32x288xf32>
    %133 = tpu.matmul %132, %130, %cst_96 {dimension_numbers = #tpu.dot_dimension_numbers<[1], [0], [0], [1], [0, 0, 1, 1], [], []>} : vector<32x12xf32>, vector<12x288xf32>, vector<32x288xf32> -> vector<32x288xf32>
    %134 = arith.addf %126, %133 : vector<32x288xf32>
    %135 = vector.extract_strided_slice %118 {offsets = [0, 36], sizes = [4, 288], strides = [1, 1]} : vector<4x342xf32> to vector<4x288xf32>
    %136 = vector.extract_strided_slice %118 {offsets = [0, 37], sizes = [4, 288], strides = [1, 1]} : vector<4x342xf32> to vector<4x288xf32>
    %137 = vector.extract_strided_slice %118 {offsets = [0, 38], sizes = [4, 288], strides = [1, 1]} : vector<4x342xf32> to vector<4x288xf32>
    %138 = tpu.concatenate %135, %136, %137 in 0 : vector<4x288xf32>, vector<4x288xf32>, vector<4x288xf32> -> vector<12x288xf32>
    %c1_97 = arith.constant 1 : index
    %c2_98 = arith.constant 2 : index
    %c0_99 = arith.constant 0 : index
    %c0_100 = arith.constant 0 : index
    %139 = vector.load %arg5[%c1_97, %c2_98, %c0_99, %c0_100] : memref<3x3x32x12xf32, #tpu.memory_space<vmem>>, vector<1x1x32x12xf32>
    %140 = vector.shape_cast %139 : vector<1x1x32x12xf32> to vector<32x12xf32>
    %cst_101 = arith.constant dense<0.000000e+00> : vector<32x288xf32>
    %141 = tpu.matmul %140, %138, %cst_101 {dimension_numbers = #tpu.dot_dimension_numbers<[1], [0], [0], [1], [0, 0, 1, 1], [], []>} : vector<32x12xf32>, vector<12x288xf32>, vector<32x288xf32> -> vector<32x288xf32>
    %142 = arith.addf %134, %141 : vector<32x288xf32>
    %c1_102 = arith.constant 1 : index
    %c0_103 = arith.constant 0 : index
    %c0_104 = arith.constant 0 : index
    %c0_105 = arith.constant 0 : index
    %143 = vector.load %arg4[%c1_102, %c0_103, %c0_104, %c0_105] : memref<2x1x4x342xf32, #tpu.memory_space<vmem>>, vector<1x1x4x342xf32>
    %144 = vector.shape_cast %143 : vector<1x1x4x342xf32> to vector<4x342xf32>
    %145 = vector.extract_strided_slice %144 {offsets = [0, 0], sizes = [4, 288], strides = [1, 1]} : vector<4x342xf32> to vector<4x288xf32>
    %146 = vector.extract_strided_slice %144 {offsets = [0, 1], sizes = [4, 288], strides = [1, 1]} : vector<4x342xf32> to vector<4x288xf32>
    %147 = vector.extract_strided_slice %144 {offsets = [0, 2], sizes = [4, 288], strides = [1, 1]} : vector<4x342xf32> to vector<4x288xf32>
    %148 = tpu.concatenate %145, %146, %147 in 0 : vector<4x288xf32>, vector<4x288xf32>, vector<4x288xf32> -> vector<12x288xf32>
    %c2_106 = arith.constant 2 : index
    %c0_107 = arith.constant 0 : index
    %c0_108 = arith.constant 0 : index
    %c0_109 = arith.constant 0 : index
    %149 = vector.load %arg5[%c2_106, %c0_107, %c0_108, %c0_109] : memref<3x3x32x12xf32, #tpu.memory_space<vmem>>, vector<1x1x32x12xf32>
    %150 = vector.shape_cast %149 : vector<1x1x32x12xf32> to vector<32x12xf32>
    %cst_110 = arith.constant dense<0.000000e+00> : vector<32x288xf32>
    %151 = tpu.matmul %150, %148, %cst_110 {dimension_numbers = #tpu.dot_dimension_numbers<[1], [0], [0], [1], [0, 0, 1, 1], [], []>} : vector<32x12xf32>, vector<12x288xf32>, vector<32x288xf32> -> vector<32x288xf32>
    %152 = arith.addf %142, %151 : vector<32x288xf32>
    %153 = vector.extract_strided_slice %144 {offsets = [0, 18], sizes = [4, 288], strides = [1, 1]} : vector<4x342xf32> to vector<4x288xf32>
    %154 = vector.extract_strided_slice %144 {offsets = [0, 19], sizes = [4, 288], strides = [1, 1]} : vector<4x342xf32> to vector<4x288xf32>
    %155 = vector.extract_strided_slice %144 {offsets = [0, 20], sizes = [4, 288], strides = [1, 1]} : vector<4x342xf32> to vector<4x288xf32>
    %156 = tpu.concatenate %153, %154, %155 in 0 : vector<4x288xf32>, vector<4x288xf32>, vector<4x288xf32> -> vector<12x288xf32>
    %c2_111 = arith.constant 2 : index
    %c1_112 = arith.constant 1 : index
    %c0_113 = arith.constant 0 : index
    %c0_114 = arith.constant 0 : index
    %157 = vector.load %arg5[%c2_111, %c1_112, %c0_113, %c0_114] : memref<3x3x32x12xf32, #tpu.memory_space<vmem>>, vector<1x1x32x12xf32>
    %158 = vector.shape_cast %157 : vector<1x1x32x12xf32> to vector<32x12xf32>
    %cst_115 = arith.constant dense<0.000000e+00> : vector<32x288xf32>
    %159 = tpu.matmul %158, %156, %cst_115 {dimension_numbers = #tpu.dot_dimension_numbers<[1], [0], [0], [1], [0, 0, 1, 1], [], []>} : vector<32x12xf32>, vector<12x288xf32>, vector<32x288xf32> -> vector<32x288xf32>
    %160 = arith.addf %152, %159 : vector<32x288xf32>
    %161 = vector.extract_strided_slice %144 {offsets = [0, 36], sizes = [4, 288], strides = [1, 1]} : vector<4x342xf32> to vector<4x288xf32>
    %162 = vector.extract_strided_slice %144 {offsets = [0, 37], sizes = [4, 288], strides = [1, 1]} : vector<4x342xf32> to vector<4x288xf32>
    %163 = vector.extract_strided_slice %144 {offsets = [0, 38], sizes = [4, 288], strides = [1, 1]} : vector<4x342xf32> to vector<4x288xf32>
    %164 = tpu.concatenate %161, %162, %163 in 0 : vector<4x288xf32>, vector<4x288xf32>, vector<4x288xf32> -> vector<12x288xf32>
    %c2_116 = arith.constant 2 : index
    %c2_117 = arith.constant 2 : index
    %c0_118 = arith.constant 0 : index
    %c0_119 = arith.constant 0 : index
    %165 = vector.load %arg5[%c2_116, %c2_117, %c0_118, %c0_119] : memref<3x3x32x12xf32, #tpu.memory_space<vmem>>, vector<1x1x32x12xf32>
    %166 = vector.shape_cast %165 : vector<1x1x32x12xf32> to vector<32x12xf32>
    %cst_120 = arith.constant dense<0.000000e+00> : vector<32x288xf32>
    %167 = tpu.matmul %166, %164, %cst_120 {dimension_numbers = #tpu.dot_dimension_numbers<[1], [0], [0], [1], [0, 0, 1, 1], [], []>} : vector<32x12xf32>, vector<12x288xf32>, vector<32x288xf32> -> vector<32x288xf32>
    %168 = arith.addf %160, %167 : vector<32x288xf32>
    %169 = vector.broadcast %0 : vector<32x1xf32> to vector<32x288xf32>
    %170 = arith.mulf %168, %169 : vector<32x288xf32>
    %171 = vector.broadcast %1 : vector<32x1xf32> to vector<32x288xf32>
    %172 = arith.addf %170, %171 : vector<32x288xf32>
    %cst_121 = arith.constant 0.000000e+00 : f32
    %173 = vector.broadcast %cst_121 : f32 to vector<32x288xf32>
    %174 = arith.maximumf %172, %173 : vector<32x288xf32>
    %c1_122 = arith.constant 1 : index
    %c0_123 = arith.constant 0 : index
    %c0_124 = arith.constant 0 : index
    %c0_125 = arith.constant 0 : index
    %175 = vector.load %arg8[%c1_122, %c0_123, %c0_124, %c0_125] : memref<2x1x32x288xf32, #tpu.memory_space<vmem>>, vector<1x1x32x288xf32>
    %176 = vector.shape_cast %175 : vector<1x1x32x288xf32> to vector<32x288xf32>
    %177 = vector.shape_cast %174 : vector<32x288xf32> to vector<1x1x32x288xf32>
    tpu.vector_store %arg8[%c1_122, %c0_123, %c0_124, %c0_125], %177 {strides = array<i32>} : memref<2x1x32x288xf32, #tpu.memory_space<vmem>>, vector<1x1x32x288xf32>,
    return
  }
  func.func @transform_0(%arg0: i32, %arg1: i32) -> (i32, i32, i32, i32) {
    %c0_i32 = arith.constant 0 : i32
    %0 = arith.addi %arg1, %c0_i32 : i32
    %c0_i32_0 = arith.constant 0 : i32
    %c0_i32_1 = arith.constant 0 : i32
    %c0_i32_2 = arith.constant 0 : i32
    return %arg0, %0, %c0_i32_0, %c0_i32_1 : i32, i32, i32, i32
  }
  func.func @transform_1(%arg0: i32, %arg1: i32) -> (i32, i32, i32, i32) {
    %c1_i32 = arith.constant 1 : i32
    %0 = arith.addi %arg1, %c1_i32 : i32
    %c0_i32 = arith.constant 0 : i32
    %c0_i32_0 = arith.constant 0 : i32
    %c0_i32_1 = arith.constant 0 : i32
    return %arg0, %0, %c0_i32, %c0_i32_0 : i32, i32, i32, i32
  }
  func.func @transform_2(%arg0: i32, %arg1: i32) -> (i32, i32, i32, i32) {
    %c2_i32 = arith.constant 2 : i32
    %0 = arith.addi %arg1, %c2_i32 : i32
    %c0_i32 = arith.constant 0 : i32
    %c0_i32_0 = arith.constant 0 : i32
    %c0_i32_1 = arith.constant 0 : i32
    return %arg0, %0, %c0_i32, %c0_i32_0 : i32, i32, i32, i32
  }
  func.func @transform_3(%arg0: i32, %arg1: i32) -> (i32, i32, i32, i32) {
    %c0_i32 = arith.constant 0 : i32
    %c0_i32_0 = arith.constant 0 : i32
    %c0_i32_1 = arith.constant 0 : i32
    %c0_i32_2 = arith.constant 0 : i32
    %c0_i32_3 = arith.constant 0 : i32
    return %c0_i32, %c0_i32_0, %c0_i32_1, %c0_i32_2 : i32, i32, i32, i32
  }
  func.func @transform_4(%arg0: i32, %arg1: i32) -> (i32, i32) {
    %c0_i32 = arith.constant 0 : i32
    %c0_i32_0 = arith.constant 0 : i32
    %c0_i32_1 = arith.constant 0 : i32
    return %c0_i32, %c0_i32_0 : i32, i32
  }
  func.func @transform_5(%arg0: i32, %arg1: i32) -> (i32, i32) {
    %c0_i32 = arith.constant 0 : i32
    %c0_i32_0 = arith.constant 0 : i32
    %c0_i32_1 = arith.constant 0 : i32
    return %c0_i32, %c0_i32_0 : i32, i32
  }
  func.func @transform_6(%arg0: i32, %arg1: i32) -> (i32, i32, i32, i32) {
    %c0_i32 = arith.constant 0 : i32
    %c0_i32_0 = arith.constant 0 : i32
    %c0_i32_1 = arith.constant 0 : i32
    return %arg0, %arg1, %c0_i32, %c0_i32_0 : i32, i32, i32, i32
  }
}

</mosaic_0001>

<llo_original>
// kernel: tpu_custom_call.1
$region0: #{tpu_custom_call.1}
  #allocation0 [shape = 'u32[]', space=smem, size = 0x4, offset = 0x4, fixed_abs, tag = 'smem constant byte address 0x4 - core index']
  #allocation1 [shape = 'u32[72,128]{1,0:T(1,128)}', space=vmem, size = 0x9000, scoped, tag = 'internal scratch']
  #allocation8 [shape = 's32[]', space=sflag, size = 0x4, offset = 0, fixed_abs, tag = 'sflag constant byte address 0x0 - dummy sync flag']
  %s0 = inlined_call_operand.vmem [shape: f32[2,10,4,342], index: 0, kind: input, shape index: {}]
  %s1 = inlined_call_operand.vmem [shape: f32[2,10,4,342], index: 1, kind: input, shape index: {}]
  %s2 = inlined_call_operand.hbm [shape: f32[2,10,4,342], index: 2, kind: input, shape index: {}]
  %s3 = inlined_call_operand.vmem [shape: f32[3,3,32,12], index: 3, kind: input, shape index: {}]
  %s4 = inlined_call_operand.vmem [shape: f32[32,1], index: 4, kind: input, shape index: {}]
  %s5 = inlined_call_operand.vmem [shape: f32[32,1], index: 5, kind: input, shape index: {}]
  %s6 = inlined_call_operand.hbm [shape: f32[2,8,32,288], index: 6, kind: output, shape index: {}]
  %s7 = sld [smem:[#allocation0]]
  $region113: #{tpu_custom_call.1} parent=0
    _
  %s9 = ssub.s32 1, %s7
  %s10 = scalar_select 0, %s9, %s7
  $region1: #{tpu_custom_call.1} parent=0
    #allocation2 [shape = 'u8[24576]{0}', space=vmem, size = 0x6000, scoped, tag = 'input window, operand 0']
    #allocation3 [shape = 'u8[24576]{0}', space=vmem, size = 0x6000, scoped, tag = 'input window, operand 1']
    #allocation4 [shape = 'u8[24576]{0}', space=vmem, size = 0x6000, scoped, tag = 'input window, operand 2']
    #allocation5 [shape = 's32[2]{0}', space=sflag, size = 0x8, scoped, tag = 'scoped memory for tpu_custom_call.1']
    #allocation6 [shape = 's32[2]{0}', space=sflag, size = 0x8, scoped, tag = 'scoped memory for tpu_custom_call.1']
    #allocation7 [shape = 'u8[196608]{0}', space=vmem, size = 0x30000, scoped, tag = 'output window, operand 0']
    %11 = vsyncpa [#allocation5], 0
    %s12 = scalar_lea.sflag [#allocation5], 1
    %13 = vsyncpa %s12, 0
    %14 = vsyncpa [#allocation6], 0
    %s15 = scalar_lea.sflag [#allocation6], 1
    %16 = vsyncpa %s15, 0
    loop: start=0, step=1, limit=10
    $region2: #{tpu_custom_call.1} parent=1 // loop_pre_header
      _
    $region3: #{tpu_custom_call.1} parent=1 // loop_header
      %s18 = sphi 0, %s22
      %p19 = scmp.ge.s32.totalorder %s18, 10
      %s25 = sphi 0, %s37
      %s26 = sphi 0, %s33
      %s27 = sphi 0, %s25
      %s28 = sphi 0, %s26
      %s29 = sphi 0, %s27
      %s30 = sphi 0, %s28
      %s42 = sphi 0, %s44
      %s45 = sphi 0, %s42
      %s46 = sphi 0, %s45
      %s62 = sphi 0, %s46
      %s72 = sphi 0, %s74
      %s75 = sphi 0, %s72
      %s76 = sphi 0, %s75
      %s92 = sphi 0, %s76
      %s102 = sphi 0, %s104
      %s105 = sphi 0, %s102
      %s106 = sphi 0, %s105
      %s122 = sphi 0, %s106
      %s126 = sphi 0, %s126
      %s128 = sphi 0, %s126
      %s129 = sphi 0, %s128
      %s143 = sphi 0, %s129
      %s147 = sphi 0, %s147
      %s149 = sphi 0, %s147
      %s150 = sphi 0, %s149
      %s164 = sphi 0, %s150
      %s168 = sphi 0, %s168
      %s170 = sphi 0, %s168
      %s171 = sphi 0, %s170
      %s185 = sphi 0, %s171
      %s193 = sphi 0, %s195
      %s196 = sphi 0, %s193
      %s197 = sphi 0, %s196
      %s213 = sphi 0, %s197
    $region4: #{tpu_custom_call.1} parent=1 // loop_header_branch
      %21 = sbr.rel (%p19) target = $region8
    $region5: #{tpu_custom_call.1} parent=1 // loop_body
      %s23 = ssub.s32 %s18, 1
      %s24 = ssub.s32 %s18, 2
      %s31 = sadd.s32 1, %s26
      %p32 = scmp.ge.s32.totalorder %s31, 8
      %s33 = scalar_select %p32, 0, %s31
      %s34 = sadd.s32 1, %s25
      %s35 = scalar_select %p32, %s34, %s25
      %p36 = scmp.ge.s32.totalorder %s35, 1
      %s37 = scalar_select %p36, 0, %s35
      %s38 = ssub.s32 %s25, %s37
      %s39 = ssub.s32 %s26, %s33
      %s40 = sor.u32 %s38, %s39
      %p41 = scmp.eq.s32.totalorder %s40, 0
      %s43 = sadd.s32 %s42, 1
      %s44 = scalar_select %p41, %s42, %s43
      %p47 = pneg %p41
      %p48 = scmp.eq.s32.totalorder %s18, 7
      %p49 = por %p47, %p48
      %p50 = scmp.ne.s32.totalorder %s42, %s45
      %p51 = scmp.eq.s32.totalorder %s18, 0
      %p52 = por %p50, %p51
      %p53 = scmp.ne.s32.totalorder %s42, %s45
      %p54 = scmp.eq.s32.totalorder %s23, 7
      %p55 = por %p53, %p54
      %p56 = scmp.ne.s32.totalorder %s45, %s46
      %p57 = scmp.eq.s32.totalorder %s23, 0
      %p58 = por %p56, %p57
      %p59 = scmp.ne.s32.totalorder %s45, %s46
      %p60 = scmp.eq.s32.totalorder %s24, 7
      %p61 = por %p59, %p60
      %p63 = scmp.ne.s32.totalorder %s46, %s62
      %p64 = scmp.eq.s32.totalorder %s24, 0
      %p65 = por %p63, %p64
      %s66 = sadd.s32 %s26, 1
      %s67 = sadd.s32 %s33, 1
      %s68 = ssub.s32 %s25, %s37
      %s69 = ssub.s32 %s66, %s67
      %s70 = sor.u32 %s68, %s69
      %p71 = scmp.eq.s32.totalorder %s70, 0
      %s73 = sadd.s32 %s72, 1
      %s74 = scalar_select %p71, %s72, %s73
      %p77 = pneg %p71
      %p78 = scmp.eq.s32.totalorder %s18, 7
      %p79 = por %p77, %p78
      %p80 = scmp.ne.s32.totalorder %s72, %s75
      %p81 = scmp.eq.s32.totalorder %s18, 0
      %p82 = por %p80, %p81
      %p83 = scmp.ne.s32.totalorder %s72, %s75
      %p84 = scmp.eq.s32.totalorder %s23, 7
      %p85 = por %p83, %p84
      %p86 = scmp.ne.s32.totalorder %s75, %s76
      %p87 = scmp.eq.s32.totalorder %s23, 0
      %p88 = por %p86, %p87
      %p89 = scmp.ne.s32.totalorder %s75, %s76
      %p90 = scmp.eq.s32.totalorder %s24, 7
      %p91 = por %p89, %p90
      %p93 = scmp.ne.s32.totalorder %s76, %s92
      %p94 = scmp.eq.s32.totalorder %s24, 0
      %p95 = por %p93, %p94
      %s96 = sadd.s32 %s26, 2
      %s97 = sadd.s32 %s33, 2
      %s98 = ssub.s32 %s25, %s37
      %s99 = ssub.s32 %s96, %s97
      %s100 = sor.u32 %s98, %s99
      %p101 = scmp.eq.s32.totalorder %s100, 0
      %s103 = sadd.s32 %s102, 1
      %s104 = scalar_select %p101, %s102, %s103
      %p107 = pneg %p101
      %p108 = scmp.eq.s32.totalorder %s18, 7
      %p109 = por %p107, %p108
      %p110 = scmp.ne.s32.totalorder %s102, %s105
      %p111 = scmp.eq.s32.totalorder %s18, 0
      %p112 = por %p110, %p111
      %p113 = scmp.ne.s32.totalorder %s102, %s105
      %p114 = scmp.eq.s32.totalorder %s23, 7
      %p115 = por %p113, %p114
      %p116 = scmp.ne.s32.totalorder %s105, %s106
      %p117 = scmp.eq.s32.totalorder %s23, 0
      %p118 = por %p116, %p117
      %p119 = scmp.ne.s32.totalorder %s105, %s106
      %p120 = scmp.eq.s32.totalorder %s24, 7
      %p121 = por %p119, %p120
      %p123 = scmp.ne.s32.totalorder %s106, %s122
      %p124 = scmp.eq.s32.totalorder %s24, 0
      %p125 = por %p123, %p124
      %s127 = sadd.s32 %s126, 1
      %p130 = scmp.eq.s32.totalorder %s18, 7
      %p131 = scmp.ne.s32.totalorder %s126, %s128
      %p132 = scmp.eq.s32.totalorder %s18, 0
      %p133 = por %p131, %p132
      %p134 = scmp.ne.s32.totalorder %s126, %s128
      %p135 = scmp.eq.s32.totalorder %s23, 7
      %p136 = por %p134, %p135
      %p137 = scmp.ne.s32.totalorder %s128, %s129
      %p138 = scmp.eq.s32.totalorder %s23, 0
      %p139 = por %p137, %p138
      %p140 = scmp.ne.s32.totalorder %s128, %s129
      %p141 = scmp.eq.s32.totalorder %s24, 7
      %p142 = por %p140, %p141
      %p144 = scmp.ne.s32.totalorder %s129, %s143
      %p145 = scmp.eq.s32.totalorder %s24, 0
      %p146 = por %p144, %p145
      %s148 = sadd.s32 %s147, 1
      %p151 = scmp.eq.s32.totalorder %s18, 7
      %p152 = scmp.ne.s32.totalorder %s147, %s149
      %p153 = scmp.eq.s32.totalorder %s18, 0
      %p154 = por %p152, %p153
      %p155 = scmp.ne.s32.totalorder %s147, %s149
      %p156 = scmp.eq.s32.totalorder %s23, 7
      %p157 = por %p155, %p156
      %p158 = scmp.ne.s32.totalorder %s149, %s150
      %p159 = scmp.eq.s32.totalorder %s23, 0
      %p160 = por %p158, %p159
      %p161 = scmp.ne.s32.totalorder %s149, %s150
      %p162 = scmp.eq.s32.totalorder %s24, 7
      %p163 = por %p161, %p162
      %p165 = scmp.ne.s32.totalorder %s150, %s164
      %p166 = scmp.eq.s32.totalorder %s24, 0
      %p167 = por %p165, %p166
      %s169 = sadd.s32 %s168, 1
      %p172 = scmp.eq.s32.totalorder %s18, 7
      %p173 = scmp.ne.s32.totalorder %s168, %s170
      %p174 = scmp.eq.s32.totalorder %s18, 0
      %p175 = por %p173, %p174
      %p176 = scmp.ne.s32.totalorder %s168, %s170
      %p177 = scmp.eq.s32.totalorder %s23, 7
      %p178 = por %p176, %p177
      %p179 = scmp.ne.s32.totalorder %s170, %s171
      %p180 = scmp.eq.s32.totalorder %s23, 0
      %p181 = por %p179, %p180
      %p182 = scmp.ne.s32.totalorder %s170, %s171
      %p183 = scmp.eq.s32.totalorder %s24, 7
      %p184 = por %p182, %p183
      %p186 = scmp.ne.s32.totalorder %s171, %s185
      %p187 = scmp.eq.s32.totalorder %s24, 0
      %p188 = por %p186, %p187
      %s189 = ssub.s32 %s25, %s37
      %s190 = ssub.s32 %s26, %s33
      %s191 = sor.u32 %s189, %s190
      %p192 = scmp.eq.s32.totalorder %s191, 0
      %s194 = sadd.s32 %s193, 1
      %s195 = scalar_select %p192, %s193, %s194
      %p198 = pneg %p192
      %p199 = scmp.eq.s32.totalorder %s18, 7
      %p200 = por %p198, %p199
      %p201 = scmp.ne.s32.totalorder %s193, %s196
      %p202 = scmp.eq.s32.totalorder %s18, 0
      %p203 = por %p201, %p202
      %p204 = scmp.ne.s32.totalorder %s193, %s196
      %p205 = scmp.eq.s32.totalorder %s23, 7
      %p206 = por %p204, %p205
      %p207 = scmp.ne.s32.totalorder %s196, %s197
      %p208 = scmp.eq.s32.totalorder %s23, 0
      %p209 = por %p207, %p208
      %p210 = scmp.ne.s32.totalorder %s196, %s197
      %p211 = scmp.eq.s32.totalorder %s24, 7
      %p212 = por %p210, %p211
      %p214 = scmp.ne.s32.totalorder %s197, %s213
      %p215 = scmp.eq.s32.totalorder %s24, 0
      %p216 = por %p214, %p215
      %p217 = scmp.le.s32.totalorder 1, %s18
      %p218 = scmp.lt.s32.totalorder %s18, 9
      %p219 = pnand %p217, %p218
      %p220 = pneg %p219
      // Predicated region
      $region9: #{tpu_custom_call.1} parent=5 // pred_check
        _
      $region10: #{tpu_custom_call.1} parent=5 // pred_check_branch
        %222 = sbr.rel (%p219) target = $region12
      $region11: #{tpu_custom_call.1} parent=5 // pred_region
        %s223 = ssub.s32 %s18, 1
        // Predicated region
        $region13: #{tpu_custom_call.1} parent=11 // pred_check
          %p224 = pneg %p139
        $region14: #{tpu_custom_call.1} parent=11 // pred_check_branch
          %226 = sbr.rel (%p224) target = $region16
        $region15: #{tpu_custom_call.1} parent=11 // pred_region
          _
        $region16: #{tpu_custom_call.1} parent=11 // pred_fallthru
          _
        // Predicated region
        $region17: #{tpu_custom_call.1} parent=11 // pred_check
          %p227 = pneg %p160
        $region18: #{tpu_custom_call.1} parent=11 // pred_check_branch
          %229 = sbr.rel (%p227) target = $region20
        $region19: #{tpu_custom_call.1} parent=11 // pred_region
          _
        $region20: #{tpu_custom_call.1} parent=11 // pred_fallthru
          _
        // Predicated region
        $region21: #{tpu_custom_call.1} parent=11 // pred_check
          %p230 = pneg %p181
        $region22: #{tpu_custom_call.1} parent=11 // pred_check_branch
          %232 = sbr.rel (%p230) target = $region24
        $region23: #{tpu_custom_call.1} parent=11 // pred_region
          _
        $region24: #{tpu_custom_call.1} parent=11 // pred_fallthru
          _
      $region12: #{tpu_custom_call.1} parent=5 // pred_fallthru
        _
      %p233 = scmp.lt.s32.totalorder %s18, 8
      // Predicated region
      $region25: #{tpu_custom_call.1} parent=5 // pred_check
        %p234 = pneg %p233
      $region26: #{tpu_custom_call.1} parent=5 // pred_check_branch
        %236 = sbr.rel (%p234) target = $region28
      $region27: #{tpu_custom_call.1} parent=5 // pred_region
        // Predicated region
        $region29: #{tpu_custom_call.1} parent=27 // pred_check
          %p237 = pneg %p52
        $region30: #{tpu_custom_call.1} parent=27 // pred_check_branch
          %239 = sbr.rel (%p237) target = $region32
        $region31: #{tpu_custom_call.1} parent=27 // pred_region
          %s240 = sand.u32 %s42, 1
          %s241 = sand.u32 %s42, 1
          %s242 = smul.addr %s241, 24
          %s243 = scalar_lea.vmem [#allocation2], %s242
          %s244 = smul.u32 2, %s25
          %s245 = smul.addr %s26, 3
          %s246 = smul.addr %s244, 30
          %s247 = sadd.s32 %s245, %s246
          %s248 = smul.addr %s247, 4
          %s249 = scalar_lea.vmem %s0, %s248
          // Predicated region
          $region33: #{tpu_custom_call.1} parent=31 // pred_check
            _
          $region34: #{tpu_custom_call.1} parent=31 // pred_check_branch
            %251 = sbr.rel (0) target = $region36
          $region35: #{tpu_custom_call.1} parent=31 // pred_region
            // Predicated region
            $region37: #{tpu_custom_call.1} parent=35 // pred_check
              _
            $region38: #{tpu_custom_call.1} parent=35 // pred_check_branch
              %253 = sbr.rel (0) target = $region40
            $region39: #{tpu_custom_call.1} parent=35 // pred_region
              %s254 = scalar_lea.vmem %s249, 8
              %s255 = scalar_lea.vmem %s243, 8 [#allocation2]
              loop: start=0, step=1, limit=1
              $region41: #{tpu_custom_call.1} parent=39 // loop_pre_header
                _
              $region42: #{tpu_custom_call.1} parent=39 // loop_header
                %s257 = sphi 0, %s261
                %p258 = scmp.ge.s32.totalorder %s257, 1
                %s262 = sphi %s249, %s249
                %s263 = sphi %s243, %s243
              $region43: #{tpu_custom_call.1} parent=39 // loop_header_branch
                %260 = sbr.rel (%p258) target = $region47
              $region44: #{tpu_custom_call.1} parent=39 // loop_body
                %v264 = vld [vmem:[%s262] sm:$0xff]
                %265 = vst [vmem:[%s263] sm:$0xff] %v264
                %v266 = vld [vmem:[%s262 + $0x78] sm:$0xff]
                %267 = vst [vmem:[%s263 + $0xc] sm:$0xff] %v266
              $region45: #{tpu_custom_call.1} parent=39 // loop_footer
                %s261 = sadd.s32 1, %s257
              $region46: #{tpu_custom_call.1} parent=39 // loop_footer_branch
                %256 = sbr.rel target = $region42
              $region47: #{tpu_custom_call.1} parent=39 // loop_exit
                _
              %s269 = ssub.s32 16, 1
              loop: start=0, step=1, limit=1
              $region48: #{tpu_custom_call.1} parent=39 // loop_pre_header
                _
              $region49: #{tpu_custom_call.1} parent=39 // loop_header
                %s271 = sphi 0, %s275
                %p272 = scmp.ge.s32.totalorder %s271, 1
                %s276 = sphi %s254, %s254
                %s277 = sphi %s255, %s255
              $region50: #{tpu_custom_call.1} parent=39 // loop_header_branch
                %274 = sbr.rel (%p272) target = $region54
              $region51: #{tpu_custom_call.1} parent=39 // loop_body
                %v278 = vld [vmem:[%s276] sm:%s269]
                %279 = vst [vmem:[%s277] sm:%s269] %v278
                %v280 = vld [vmem:[%s276 + $0x78] sm:%s269]
                %281 = vst [vmem:[%s277 + $0xc] sm:%s269] %v280
              $region52: #{tpu_custom_call.1} parent=39 // loop_footer
                %s275 = sadd.s32 1, %s271
              $region53: #{tpu_custom_call.1} parent=39 // loop_footer_branch
                %270 = sbr.rel target = $region49
              $region54: #{tpu_custom_call.1} parent=39 // loop_exit
                _
            $region40: #{tpu_custom_call.1} parent=35 // pred_fallthru
              _
          $region36: #{tpu_custom_call.1} parent=31 // pred_fallthru
            _
          %282 = vnop
        $region32: #{tpu_custom_call.1} parent=27 // pred_fallthru
          _
        // Predicated region
        $region55: #{tpu_custom_call.1} parent=27 // pred_check
          %p283 = pneg %p82
        $region56: #{tpu_custom_call.1} parent=27 // pred_check_branch
          %285 = sbr.rel (%p283) target = $region58
        $region57: #{tpu_custom_call.1} parent=27 // pred_region
          %s286 = sand.u32 %s72, 1
          %s287 = sand.u32 %s72, 1
          %s288 = smul.addr %s287, 24
          %s289 = scalar_lea.vmem [#allocation3], %s288
          %s290 = sadd.s32 %s26, 1
          %s291 = smul.u32 2, %s25
          %s292 = smul.addr %s290, 3
          %s293 = smul.addr %s291, 30
          %s294 = sadd.s32 %s292, %s293
          %s295 = smul.addr %s294, 4
          %s296 = scalar_lea.vmem %s1, %s295
          // Predicated region
          $region59: #{tpu_custom_call.1} parent=57 // pred_check
            _
          $region60: #{tpu_custom_call.1} parent=57 // pred_check_branch
            %298 = sbr.rel (0) target = $region62
          $region61: #{tpu_custom_call.1} parent=57 // pred_region
            // Predicated region
            $region63: #{tpu_custom_call.1} parent=61 // pred_check
              _
            $region64: #{tpu_custom_call.1} parent=61 // pred_check_branch
              %300 = sbr.rel (0) target = $region66
            $region65: #{tpu_custom_call.1} parent=61 // pred_region
              %s301 = scalar_lea.vmem %s296, 8
              %s302 = scalar_lea.vmem %s289, 8 [#allocation3]
              loop: start=0, step=1, limit=1
              $region67: #{tpu_custom_call.1} parent=65 // loop_pre_header
                _
              $region68: #{tpu_custom_call.1} parent=65 // loop_header
                %s304 = sphi 0, %s308
                %p305 = scmp.ge.s32.totalorder %s304, 1
                %s309 = sphi %s296, %s296
                %s310 = sphi %s289, %s289
              $region69: #{tpu_custom_call.1} parent=65 // loop_header_branch
                %307 = sbr.rel (%p305) target = $region73
              $region70: #{tpu_custom_call.1} parent=65 // loop_body
                %v311 = vld [vmem:[%s309] sm:$0xff]
                %312 = vst [vmem:[%s310] sm:$0xff] %v311
                %v313 = vld [vmem:[%s309 + $0x78] sm:$0xff]
                %314 = vst [vmem:[%s310 + $0xc] sm:$0xff] %v313
              $region71: #{tpu_custom_call.1} parent=65 // loop_footer
                %s308 = sadd.s32 1, %s304
              $region72: #{tpu_custom_call.1} parent=65 // loop_footer_branch
                %303 = sbr.rel target = $region68
              $region73: #{tpu_custom_call.1} parent=65 // loop_exit
                _
              %s316 = ssub.s32 16, 1
              loop: start=0, step=1, limit=1
              $region74: #{tpu_custom_call.1} parent=65 // loop_pre_header
                _
              $region75: #{tpu_custom_call.1} parent=65 // loop_header
                %s318 = sphi 0, %s322
                %p319 = scmp.ge.s32.totalorder %s318, 1
                %s323 = sphi %s301, %s301
                %s324 = sphi %s302, %s302
              $region76: #{tpu_custom_call.1} parent=65 // loop_header_branch
                %321 = sbr.rel (%p319) target = $region80
              $region77: #{tpu_custom_call.1} parent=65 // loop_body
                %v325 = vld [vmem:[%s323] sm:%s316]
                %326 = vst [vmem:[%s324] sm:%s316] %v325
                %v327 = vld [vmem:[%s323 + $0x78] sm:%s316]
                %328 = vst [vmem:[%s324 + $0xc] sm:%s316] %v327
              $region78: #{tpu_custom_call.1} parent=65 // loop_footer
                %s322 = sadd.s32 1, %s318
              $region79: #{tpu_custom_call.1} parent=65 // loop_footer_branch
                %317 = sbr.rel target = $region75
              $region80: #{tpu_custom_call.1} parent=65 // loop_exit
                _
            $region66: #{tpu_custom_call.1} parent=61 // pred_fallthru
              _
          $region62: #{tpu_custom_call.1} parent=57 // pred_fallthru
            _
          %329 = vnop
        $region58: #{tpu_custom_call.1} parent=27 // pred_fallthru
          _
        // Predicated region
        $region81: #{tpu_custom_call.1} parent=27 // pred_check
          %p330 = pneg %p112
        $region82: #{tpu_custom_call.1} parent=27 // pred_check_branch
          %332 = sbr.rel (%p330) target = $region84
        $region83: #{tpu_custom_call.1} parent=27 // pred_region
          %s333 = sand.u32 %s102, 1
          %s334 = scalar_lea.sflag [#allocation5], %s333
          %s335 = sand.u32 %s102, 1
          %s336 = smul.addr %s335, 24
          %s337 = scalar_lea.vmem [#allocation4], %s336
          %s338 = sadd.s32 %s26, 2
          %s339 = smul.u32 2, %s25
          %341 = vsyncadd %s334, 0
          %s342 = smul.addr %s338, 3
          %s343 = smul.addr %s339, 30
          %s344 = sadd.s32 %s342, %s343
          %s345 = smul.addr %s344, 4
          %s346 = scalar_lea.hbm %s2, %s345
          %s347 = sshll.u32 %s346, 4
          %s348 = int_to_ptr.hbm [resolvable:$true] %s347
          %s349 = sshll.u32 %s337, 4
          %s350 = int_to_ptr.vmem [resolvable:$true] %s349
          %355 = dma.hbm_to_vmem [thread:$0]  %s348, 384, %s350, %s334, 1920, 192, 12
        $region84: #{tpu_custom_call.1} parent=27 // pred_fallthru
          _
      $region28: #{tpu_custom_call.1} parent=5 // pred_fallthru
        _
      %p356 = scmp.le.s32.totalorder 1, %s18
      %p357 = scmp.lt.s32.totalorder %s18, 9
      %p358 = pnand %p356, %p357
      %p359 = pneg %p358
      // Predicated region
      $region85: #{tpu_custom_call.1} parent=5 // pred_check
        _
      $region86: #{tpu_custom_call.1} parent=5 // pred_check_branch
        %361 = sbr.rel (%p358) target = $region88
      $region87: #{tpu_custom_call.1} parent=5 // pred_region
        %s362 = ssub.s32 %s18, 1
        %s363 = sand.u32 %s45, 1
        %s364 = sand.u32 %s45, 1
        %s365 = smul.addr %s364, 24
        %s366 = scalar_lea.vmem [#allocation2], %s365
        // Predicated region
        $region89: #{tpu_custom_call.1} parent=87 // pred_check
          %p367 = pneg %p58
        $region90: #{tpu_custom_call.1} parent=87 // pred_check_branch
          %369 = sbr.rel (%p367) target = $region92
        $region91: #{tpu_custom_call.1} parent=87 // pred_region
          _
        $region92: #{tpu_custom_call.1} parent=87 // pred_fallthru
          _
        %s370 = sand.u32 %s75, 1
        %s371 = sand.u32 %s75, 1
        %s372 = smul.addr %s371, 24
        %s373 = scalar_lea.vmem [#allocation3], %s372
        // Predicated region
        $region93: #{tpu_custom_call.1} parent=87 // pred_check
          %p374 = pneg %p88
        $region94: #{tpu_custom_call.1} parent=87 // pred_check_branch
          %376 = sbr.rel (%p374) target = $region96
        $region95: #{tpu_custom_call.1} parent=87 // pred_region
          _
        $region96: #{tpu_custom_call.1} parent=87 // pred_fallthru
          _
        %s377 = sand.u32 %s105, 1
        %s378 = scalar_lea.sflag [#allocation5], %s377
        %s379 = sand.u32 %s105, 1
        %s380 = smul.addr %s379, 24
        %s381 = scalar_lea.vmem [#allocation4], %s380
        // Predicated region
        $region97: #{tpu_custom_call.1} parent=87 // pred_check
          %p382 = pneg %p118
        $region98: #{tpu_custom_call.1} parent=87 // pred_check_branch
          %384 = sbr.rel (%p382) target = $region100
        $region99: #{tpu_custom_call.1} parent=87 // pred_region
          %386 = dma.done %s378, 384
        $region100: #{tpu_custom_call.1} parent=87 // pred_fallthru
          _
        %s387 = sand.u32 %s45, 1
        %s388 = sand.u32 %s45, 1
        %s389 = smul.addr %s388, 24
        %s390 = scalar_lea.vmem [#allocation2], %s389
        %p391 = pneg %p58
        %p392 = pneg %p55
        %s393 = sand.u32 %s75, 1
        %s394 = sand.u32 %s75, 1
        %s395 = smul.addr %s394, 24
        %s396 = scalar_lea.vmem [#allocation3], %s395
        %p397 = pneg %p88
        %p398 = pneg %p85
        %s399 = sand.u32 %s105, 1
        %s400 = scalar_lea.sflag [#allocation5], %s399
        %s401 = sand.u32 %s105, 1
        %s402 = smul.addr %s401, 24
        %s403 = scalar_lea.vmem [#allocation4], %s402
        %p404 = pneg %p118
        %p405 = pneg %p115
        %p406 = pneg %p139
        %p407 = pneg %p136
        %p408 = pneg %p160
        %p409 = pneg %p157
        %p410 = pneg %p181
        %p411 = pneg %p178
        %p412 = pneg %p209
        %p413 = pneg %p206
        %s414 = sand.u32 %s196, 1
        %s415 = scalar_lea.sflag [#allocation6], %s414
        %s416 = sand.u32 %s196, 1
        %s417 = smul.addr %s416, 192
        %s418 = scalar_lea.vmem [#allocation7], %s417
        %s419 = smul.u32 2, %s27
        %s420 = sadd.s32 %s28, 1
        %s421 = smul.u32 2, %s27
        %s422 = sadd.s32 %s28, 2
        %s423 = smul.u32 2, %s27
        %s424 = smul.u32 2, %s27
        %v425 = vld [vmem:[%s4] sm:$0xff]
        %v426 = vld [vmem:[%s4 + $0x8] sm:$0xff]
        %v427 = vld [vmem:[%s4 + $0x10] sm:$0xff]
        %v428 = vld [vmem:[%s4 + $0x18] sm:$0xff]
        %v429 = vld [vmem:[%s5] sm:$0xff]
        %v430 = vld [vmem:[%s5 + $0x8] sm:$0xff]
        %v431 = vld [vmem:[%s5 + $0x10] sm:$0xff]
        %v432 = vld [vmem:[%s5 + $0x18] sm:$0xff]
        %v433 = vld [vmem:[%s366] sm:$0xff]
        %v434 = vld [vmem:[%s366 + $0x8] sm:$0xf]
        %437 = vst [vmem:[#allocation1] ss:$2 sm:$0xff] %v433
        %s438 = scalar_lea.vmem [#allocation1], 16
        %439 = vst [vmem:[%s438] ss:$2 sm:$0xff] %v434
        %v440 = vld.sshfl [vmem:[#allocation1] sm:$0xff pattern:$0x75316420]
        %v441 = vld.sshfl [vmem:[#allocation1 + $0x8] sm:$0xff pattern:$0x75316420]
        %v442 = vld.sshfl [vmem:[#allocation1 + $0x10] sm:$0xff pattern:$0x75316420]
        %s446 = scalar_lea.vmem [#allocation1], 1
        %447 = vst [vmem:[%s446] ss:$2 sm:$0xff] %v433
        %s448 = scalar_lea.vmem [#allocation1], 17
        %449 = vst [vmem:[%s448] ss:$2 sm:$0xff] %v434
        %v450 = vld.sshfl [vmem:[#allocation1] sm:$0xff pattern:$0x75316420]
        %v451 = vld.sshfl [vmem:[#allocation1 + $0x8] sm:$0xff pattern:$0x75316420]
        %v452 = vld.sshfl [vmem:[#allocation1 + $0x10] sm:$0xff pattern:$0x75316420]
        %453 = vrot.lane.b32.xlu0 %v450, 127
        %v454 = vpop.permute.xlu0 %453
        %455 = vrot.lane.b32.xlu0 %v451, 127
        %v456 = vpop.permute.xlu0 %455
        %457 = vrot.lane.b32.xlu0 %v452, 127
        %v458 = vpop.permute.xlu0 %457
        %vm459 = vcmask 1039360
        %v460 = vsel %vm459, %v454, %v456
        %v461 = vsel %vm459, %v456, %v458
        %465 = vst [vmem:[#allocation1] ss:$2 sm:$0xff] %v433
        %s466 = scalar_lea.vmem [#allocation1], 16
        %467 = vst [vmem:[%s466] ss:$2 sm:$0xff] %v434
        %v468 = vld.sshfl [vmem:[#allocation1] sm:$0xff pattern:$0x75316420]
        %v469 = vld.sshfl [vmem:[#allocation1 + $0x8] sm:$0xff pattern:$0x75316420]
        %v470 = vld.sshfl [vmem:[#allocation1 + $0x10] sm:$0xff pattern:$0x75316420]
        %471 = vrot.lane.b32.xlu0 %v468, 126
        %v472 = vpop.permute.xlu0 %471
        %473 = vrot.lane.b32.xlu0 %v469, 126
        %v474 = vpop.permute.xlu0 %473
        %475 = vrot.lane.b32.xlu0 %v470, 126
        %v476 = vpop.permute.xlu0 %475
        %vm477 = vcmask 1031168
        %v478 = vsel %vm477, %v472, %v474
        %v479 = vsel %vm477, %v474, %v476
        %vm480 = vcmask 1043456
        %v481 = vsel %vm480, %v440, %v460
        %v482 = vsel %vm480, %v441, %v461
        %v483 = vsel %vm480, %v442, %v458
        %v484 = vld [vmem:[%s3] sm:$0xff]
        %v485 = vld [vmem:[%s3 + $0x8] sm:$0xff]
        %v486 = vld [vmem:[%s3 + $0x10] sm:$0xff]
        %v487 = vld [vmem:[%s3 + $0x18] sm:$0xff]
        %488 = vst [vmem:[#allocation1] ss:$2 sm:$0xff] %v433
        %s489 = scalar_lea.vmem [#allocation1], 16
        %490 = vst [vmem:[%s489] ss:$2 sm:$0xff] %v434
        %v491 = vld.sshfl [vmem:[#allocation1] sm:$0xff pattern:$0x75316420]
        %v492 = vld.sshfl [vmem:[#allocation1 + $0x8] sm:$0xff pattern:$0x75316420]
        %v493 = vld.sshfl [vmem:[#allocation1 + $0x10] sm:$0xff pattern:$0x75316420]
        %s497 = scalar_lea.vmem [#allocation1], 1
        %498 = vst [vmem:[%s497] ss:$2 sm:$0xff] %v433
        %s499 = scalar_lea.vmem [#allocation1], 17
        %500 = vst [vmem:[%s499] ss:$2 sm:$0xff] %v434
        %v501 = vld.sshfl [vmem:[#allocation1] sm:$0xff pattern:$0x75316420]
        %v502 = vld.sshfl [vmem:[#allocation1 + $0x8] sm:$0xff pattern:$0x75316420]
        %v503 = vld.sshfl [vmem:[#allocation1 + $0x10] sm:$0xff pattern:$0x75316420]
        %504 = vrot.lane.b32.xlu0 %v501, 127
        %v505 = vpop.permute.xlu0 %504
        %506 = vrot.lane.b32.xlu0 %v502, 127
        %v507 = vpop.permute.xlu0 %506
        %508 = vrot.lane.b32.xlu0 %v503, 127
        %v509 = vpop.permute.xlu0 %508
        %v510 = vsel %vm459, %v505, %v507
        %v511 = vsel %vm459, %v507, %v509
        %515 = vst [vmem:[#allocation1] ss:$2 sm:$0xff] %v433
        %s516 = scalar_lea.vmem [#allocation1], 16
        %517 = vst [vmem:[%s516] ss:$2 sm:$0xff] %v434
        %v518 = vld.sshfl [vmem:[#allocation1] sm:$0xff pattern:$0x75316420]
        %v519 = vld.sshfl [vmem:[#allocation1 + $0x8] sm:$0xff pattern:$0x75316420]
        %v520 = vld.sshfl [vmem:[#allocation1 + $0x10] sm:$0xff pattern:$0x75316420]
        %521 = vrot.lane.b32.xlu0 %v518, 126
        %v522 = vpop.permute.xlu0 %521
        %523 = vrot.lane.b32.xlu0 %v519, 126
        %v524 = vpop.permute.xlu0 %523
        %525 = vrot.lane.b32.xlu0 %v520, 126
        %v526 = vpop.permute.xlu0 %525
        %v527 = vsel %vm477, %v522, %v524
        %v528 = vsel %vm477, %v524, %v526
        %v529 = vsel %vm480, %v491, %v510
        %v530 = vsel %vm480, %v492, %v511
        %v531 = vsel %vm480, %v493, %v509
        %s532 = scalar_lea.vmem %s3, 32
        %v533 = vld [vmem:[%s532] sm:$0xff]
        %v534 = vld [vmem:[%s532 + $0x8] sm:$0xff]
        %v535 = vld [vmem:[%s532 + $0x10] sm:$0xff]
        %v536 = vld [vmem:[%s532 + $0x18] sm:$0xff]
        %540 = vrot.lane.b32.xlu0 %v529, 110
        %v541 = vpop.permute.xlu0 %540
        %542 = vrot.lane.b32.xlu0 %v530, 110
        %v543 = vpop.permute.xlu0 %542
        %544 = vrot.lane.b32.xlu0 %v531, 110
        %v545 = vpop.permute.xlu0 %544
        %546 = vrot.lane.b32.xlu0 %v527, 110
        %v547 = vpop.permute.xlu0 %546
        %548 = vrot.lane.b32.xlu0 %v528, 110
        %v549 = vpop.permute.xlu0 %548
        %550 = vrot.lane.b32.xlu0 %v526, 110
        %v551 = vpop.permute.xlu0 %550
        %vm552 = vcmask 900096
        %v553 = vsel %vm552, %v541, %v543
        %v554 = vsel %vm552, %v543, %v545
        %v555 = vsel %vm552, %v547, %v549
        %v556 = vsel %vm552, %v549, %v551
        %vm560 = vcmask 97280
        %v562 = vsel %vm560, %v533, 0
        %v565 = vsel %vm560, %v534, 0
        %v568 = vsel %vm560, %v535, 0
        %v571 = vsel %vm560, %v536, 0
        %v573 = vsel %vm480, %v555, 0
        %v575 = vsel %vm480, %v556, 0
        %v577 = vsel %vm480, %v551, 0
        %579 = vmatpush.msra.mxu0 0.0
        %580 = vmatpush.msra.mxu0 0.0
        %581 = vmatpush.msra.mxu0 0.0
        %582 = vmatpush.msra.mxu0 0.0
        %583 = vmatpush.msra.mxu0 0.0
        %584 = vmatpush.msra.mxu0 0.0
        %585 = vmatpush.msra.mxu0 0.0
        %586 = vmatpush.msra.mxu0 0.0
        %587 = vmatpush.msra.mxu0 0.0
        %588 = vmatpush.msra.mxu0 0.0
        %589 = vmatpush.msra.mxu0 0.0
        %590 = vmatpush.msra.mxu0 0.0
        %591 = vmatpush.msra.mxu0 0.0
        %592 = vmatpush.msra.mxu0 0.0
        %593 = vmatpush.msra.mxu0 %v573
        %594 = vmatpush.msra.mxu0 %v553
        %595 = vmatmul.f32.gmra.mxu0 %v562
        %v596 = vpop.f32.mrf.mxu0
        %v597 = vadd.f32 0.0, %v596
        %598 = vmatmul.f32.gmra.mxu0 %v565
        %v599 = vpop.f32.mrf.mxu0
        %v600 = vadd.f32 0.0, %v599
        %601 = vmatmul.f32.gmra.mxu0 %v568
        %v602 = vpop.f32.mrf.mxu0
        %v603 = vadd.f32 0.0, %v602
        %604 = vmatmul.f32.gmra.mxu0 %v571
        %v605 = vpop.f32.mrf.mxu0
        %v606 = vadd.f32 0.0, %v605
        %607 = vdwg.mxu0
        %608 = vmatpush.msra.mxu0 0.0
        %609 = vmatpush.msra.mxu0 0.0
        %610 = vmatpush.msra.mxu0 0.0
        %611 = vmatpush.msra.mxu0 0.0
        %612 = vmatpush.msra.mxu0 0.0
        %613 = vmatpush.msra.mxu0 0.0
        %614 = vmatpush.msra.mxu0 0.0
        %615 = vmatpush.msra.mxu0 0.0
        %616 = vmatpush.msra.mxu0 0.0
        %617 = vmatpush.msra.mxu0 0.0
        %618 = vmatpush.msra.mxu0 0.0
        %619 = vmatpush.msra.mxu0 0.0
        %620 = vmatpush.msra.mxu0 0.0
        %621 = vmatpush.msra.mxu0 0.0
        %622 = vmatpush.msra.mxu0 %v575
        %623 = vmatpush.msra.mxu0 %v554
        %624 = vmatmul.f32.gmra.mxu0 %v562
        %v625 = vpop.f32.mrf.mxu0
        %v626 = vadd.f32 0.0, %v625
        %627 = vmatmul.f32.gmra.mxu0 %v565
        %v628 = vpop.f32.mrf.mxu0
        %v629 = vadd.f32 0.0, %v628
        %630 = vmatmul.f32.gmra.mxu0 %v568
        %v631 = vpop.f32.mrf.mxu0
        %v632 = vadd.f32 0.0, %v631
        %633 = vmatmul.f32.gmra.mxu0 %v571
        %v634 = vpop.f32.mrf.mxu0
        %v635 = vadd.f32 0.0, %v634
        %636 = vdwg.mxu0
        %637 = vmatpush.msra.mxu0 0.0
        %638 = vmatpush.msra.mxu0 0.0
        %639 = vmatpush.msra.mxu0 0.0
        %640 = vmatpush.msra.mxu0 0.0
        %641 = vmatpush.msra.mxu0 0.0
        %642 = vmatpush.msra.mxu0 0.0
        %643 = vmatpush.msra.mxu0 0.0
        %644 = vmatpush.msra.mxu0 0.0
        %645 = vmatpush.msra.mxu0 0.0
        %646 = vmatpush.msra.mxu0 0.0
        %647 = vmatpush.msra.mxu0 0.0
        %648 = vmatpush.msra.mxu0 0.0
        %649 = vmatpush.msra.mxu0 0.0
        %650 = vmatpush.msra.mxu0 0.0
        %651 = vmatpush.msra.mxu0 %v577
        %652 = vmatpush.msra.mxu0 %v545
        %653 = vmatmul.f32.gmra.mxu0 %v562
        %v654 = vpop.f32.mrf.mxu0
        %v655 = vadd.f32 0.0, %v654
        %656 = vmatmul.f32.gmra.mxu0 %v565
        %v657 = vpop.f32.mrf.mxu0
        %v658 = vadd.f32 0.0, %v657
        %659 = vmatmul.f32.gmra.mxu0 %v568
        %v660 = vpop.f32.mrf.mxu0
        %v661 = vadd.f32 0.0, %v660
        %662 = vmatmul.f32.gmra.mxu0 %v571
        %v663 = vpop.f32.mrf.mxu0
        %v664 = vadd.f32 0.0, %v663
        %665 = vdwg.mxu0
        %v667 = vsel %vm560, %v484, 0
        %v670 = vsel %vm560, %v485, 0
        %v673 = vsel %vm560, %v486, 0
        %v676 = vsel %vm560, %v487, 0
        %v678 = vsel %vm480, %v478, 0
        %v680 = vsel %vm480, %v479, 0
        %v682 = vsel %vm480, %v476, 0
        %684 = vmatpush.msra.mxu0 0.0
        %685 = vmatpush.msra.mxu0 0.0
        %686 = vmatpush.msra.mxu0 0.0
        %687 = vmatpush.msra.mxu0 0.0
        %688 = vmatpush.msra.mxu0 0.0
        %689 = vmatpush.msra.mxu0 0.0
        %690 = vmatpush.msra.mxu0 0.0
        %691 = vmatpush.msra.mxu0 0.0
        %692 = vmatpush.msra.mxu0 0.0
        %693 = vmatpush.msra.mxu0 0.0
        %694 = vmatpush.msra.mxu0 0.0
        %695 = vmatpush.msra.mxu0 0.0
        %696 = vmatpush.msra.mxu0 0.0
        %697 = vmatpush.msra.mxu0 0.0
        %698 = vmatpush.msra.mxu0 %v678
        %699 = vmatpush.msra.mxu0 %v481
        %700 = vmatmul.f32.gmra.mxu0 %v667
        %v701 = vpop.f32.mrf.mxu0
        %v702 = vadd.f32 %v597, %v701
        %703 = vmatmul.f32.gmra.mxu0 %v670
        %v704 = vpop.f32.mrf.mxu0
        %v705 = vadd.f32 %v600, %v704
        %706 = vmatmul.f32.gmra.mxu0 %v673
        %v707 = vpop.f32.mrf.mxu0
        %v708 = vadd.f32 %v603, %v707
        %709 = vmatmul.f32.gmra.mxu0 %v676
        %v710 = vpop.f32.mrf.mxu0
        %v711 = vadd.f32 %v606, %v710
        %712 = vdwg.mxu0
        %713 = vmatpush.msra.mxu0 0.0
        %714 = vmatpush.msra.mxu0 0.0
        %715 = vmatpush.msra.mxu0 0.0
        %716 = vmatpush.msra.mxu0 0.0
        %717 = vmatpush.msra.mxu0 0.0
        %718 = vmatpush.msra.mxu0 0.0
        %719 = vmatpush.msra.mxu0 0.0
        %720 = vmatpush.msra.mxu0 0.0
        %721 = vmatpush.msra.mxu0 0.0
        %722 = vmatpush.msra.mxu0 0.0
        %723 = vmatpush.msra.mxu0 0.0
        %724 = vmatpush.msra.mxu0 0.0
        %725 = vmatpush.msra.mxu0 0.0
        %726 = vmatpush.msra.mxu0 0.0
        %727 = vmatpush.msra.mxu0 %v680
        %728 = vmatpush.msra.mxu0 %v482
        %729 = vmatmul.f32.gmra.mxu0 %v667
        %v730 = vpop.f32.mrf.mxu0
        %v731 = vadd.f32 %v626, %v730
        %732 = vmatmul.f32.gmra.mxu0 %v670
        %v733 = vpop.f32.mrf.mxu0
        %v734 = vadd.f32 %v629, %v733
        %735 = vmatmul.f32.gmra.mxu0 %v673
        %v736 = vpop.f32.mrf.mxu0
        %v737 = vadd.f32 %v632, %v736
        %738 = vmatmul.f32.gmra.mxu0 %v676
        %v739 = vpop.f32.mrf.mxu0
        %v740 = vadd.f32 %v635, %v739
        %741 = vdwg.mxu0
        %742 = vmatpush.msra.mxu0 0.0
        %743 = vmatpush.msra.mxu0 0.0
        %744 = vmatpush.msra.mxu0 0.0
        %745 = vmatpush.msra.mxu0 0.0
        %746 = vmatpush.msra.mxu0 0.0
        %747 = vmatpush.msra.mxu0 0.0
        %748 = vmatpush.msra.mxu0 0.0
        %749 = vmatpush.msra.mxu0 0.0
        %750 = vmatpush.msra.mxu0 0.0
        %751 = vmatpush.msra.mxu0 0.0
        %752 = vmatpush.msra.mxu0 0.0
        %753 = vmatpush.msra.mxu0 0.0
        %754 = vmatpush.msra.mxu0 0.0
        %755 = vmatpush.msra.mxu0 0.0
        %756 = vmatpush.msra.mxu0 %v682
        %757 = vmatpush.msra.mxu0 %v483
        %758 = vmatmul.f32.gmra.mxu0 %v667
        %v759 = vpop.f32.mrf.mxu0
        %v760 = vadd.f32 %v655, %v759
        %761 = vmatmul.f32.gmra.mxu0 %v670
        %v762 = vpop.f32.mrf.mxu0
        %v763 = vadd.f32 %v658, %v762
        %764 = vmatmul.f32.gmra.mxu0 %v673
        %v765 = vpop.f32.mrf.mxu0
        %v766 = vadd.f32 %v661, %v765
        %767 = vmatmul.f32.gmra.mxu0 %v676
        %v768 = vpop.f32.mrf.mxu0
        %v769 = vadd.f32 %v664, %v768
        %770 = vdwg.mxu0
        %771 = vst [vmem:[#allocation1] ss:$2 sm:$0xff] %v433
        %s772 = scalar_lea.vmem [#allocation1], 16
        %773 = vst [vmem:[%s772] ss:$2 sm:$0xff] %v434
        %v774 = vld.sshfl [vmem:[#allocation1] sm:$0xff pattern:$0x75316420]
        %v775 = vld.sshfl [vmem:[#allocation1 + $0x8] sm:$0xff pattern:$0x75316420]
        %v776 = vld.sshfl [vmem:[#allocation1 + $0x10] sm:$0xff pattern:$0x75316420]
        %s780 = scalar_lea.vmem [#allocation1], 1
        %781 = vst [vmem:[%s780] ss:$2 sm:$0xff] %v433
        %s782 = scalar_lea.vmem [#allocation1], 17
        %783 = vst [vmem:[%s782] ss:$2 sm:$0xff] %v434
        %v784 = vld.sshfl [vmem:[#allocation1] sm:$0xff pattern:$0x75316420]
        %v785 = vld.sshfl [vmem:[#allocation1 + $0x8] sm:$0xff pattern:$0x75316420]
        %v786 = vld.sshfl [vmem:[#allocation1 + $0x10] sm:$0xff pattern:$0x75316420]
        %787 = vrot.lane.b32.xlu0 %v784, 127
        %v788 = vpop.permute.xlu0 %787
        %789 = vrot.lane.b32.xlu0 %v785, 127
        %v790 = vpop.permute.xlu0 %789
        %791 = vrot.lane.b32.xlu0 %v786, 127
        %v792 = vpop.permute.xlu0 %791
        %v793 = vsel %vm459, %v788, %v790
        %v794 = vsel %vm459, %v790, %v792
        %798 = vst [vmem:[#allocation1] ss:$2 sm:$0xff] %v433
        %s799 = scalar_lea.vmem [#allocation1], 16
        %800 = vst [vmem:[%s799] ss:$2 sm:$0xff] %v434
        %v801 = vld.sshfl [vmem:[#allocation1] sm:$0xff pattern:$0x75316420]
        %v802 = vld.sshfl [vmem:[#allocation1 + $0x8] sm:$0xff pattern:$0x75316420]
        %v803 = vld.sshfl [vmem:[#allocation1 + $0x10] sm:$0xff pattern:$0x75316420]
        %804 = vrot.lane.b32.xlu0 %v801, 126
        %v805 = vpop.permute.xlu0 %804
        %806 = vrot.lane.b32.xlu0 %v802, 126
        %v807 = vpop.permute.xlu0 %806
        %808 = vrot.lane.b32.xlu0 %v803, 126
        %v809 = vpop.permute.xlu0 %808
        %v810 = vsel %vm477, %v805, %v807
        %v811 = vsel %vm477, %v807, %v809
        %v812 = vsel %vm480, %v774, %v793
        %v813 = vsel %vm480, %v775, %v794
        %v814 = vsel %vm480, %v776, %v792
        %s815 = scalar_lea.vmem %s3, 64
        %v816 = vld [vmem:[%s815] sm:$0xff]
        %v817 = vld [vmem:[%s815 + $0x8] sm:$0xff]
        %v818 = vld [vmem:[%s815 + $0x10] sm:$0xff]
        %v819 = vld [vmem:[%s815 + $0x18] sm:$0xff]
        %823 = vrot.lane.b32.xlu0 %v812, 92
        %v824 = vpop.permute.xlu0 %823
        %825 = vrot.lane.b32.xlu0 %v813, 92
        %v826 = vpop.permute.xlu0 %825
        %827 = vrot.lane.b32.xlu0 %v814, 92
        %v828 = vpop.permute.xlu0 %827
        %829 = vrot.lane.b32.xlu0 %v810, 92
        %v830 = vpop.permute.xlu0 %829
        %831 = vrot.lane.b32.xlu0 %v811, 92
        %v832 = vpop.permute.xlu0 %831
        %833 = vrot.lane.b32.xlu0 %v809, 92
        %v834 = vpop.permute.xlu0 %833
        %vm835 = vcmask 752640
        %v836 = vsel %vm835, %v824, %v826
        %v837 = vsel %vm835, %v826, %v828
        %v838 = vsel %vm835, %v830, %v832
        %v839 = vsel %vm835, %v832, %v834
        %v844 = vsel %vm560, %v816, 0
        %v847 = vsel %vm560, %v817, 0
        %v850 = vsel %vm560, %v818, 0
        %v853 = vsel %vm560, %v819, 0
        %v855 = vsel %vm480, %v838, 0
        %v857 = vsel %vm480, %v839, 0
        %v859 = vsel %vm480, %v834, 0
        %861 = vmatpush.msra.mxu0 0.0
        %862 = vmatpush.msra.mxu0 0.0
        %863 = vmatpush.msra.mxu0 0.0
        %864 = vmatpush.msra.mxu0 0.0
        %865 = vmatpush.msra.mxu0 0.0
        %866 = vmatpush.msra.mxu0 0.0
        %867 = vmatpush.msra.mxu0 0.0
        %868 = vmatpush.msra.mxu0 0.0
        %869 = vmatpush.msra.mxu0 0.0
        %870 = vmatpush.msra.mxu0 0.0
        %871 = vmatpush.msra.mxu0 0.0
        %872 = vmatpush.msra.mxu0 0.0
        %873 = vmatpush.msra.mxu0 0.0
        %874 = vmatpush.msra.mxu0 0.0
        %875 = vmatpush.msra.mxu0 %v855
        %876 = vmatpush.msra.mxu0 %v836
        %877 = vmatmul.f32.gmra.mxu0 %v844
        %v878 = vpop.f32.mrf.mxu0
        %v879 = vadd.f32 0.0, %v878
        %880 = vmatmul.f32.gmra.mxu0 %v847
        %v881 = vpop.f32.mrf.mxu0
        %v882 = vadd.f32 0.0, %v881
        %883 = vmatmul.f32.gmra.mxu0 %v850
        %v884 = vpop.f32.mrf.mxu0
        %v885 = vadd.f32 0.0, %v884
        %886 = vmatmul.f32.gmra.mxu0 %v853
        %v887 = vpop.f32.mrf.mxu0
        %v888 = vadd.f32 0.0, %v887
        %889 = vdwg.mxu0
        %890 = vmatpush.msra.mxu0 0.0
        %891 = vmatpush.msra.mxu0 0.0
        %892 = vmatpush.msra.mxu0 0.0
        %893 = vmatpush.msra.mxu0 0.0
        %894 = vmatpush.msra.mxu0 0.0
        %895 = vmatpush.msra.mxu0 0.0
        %896 = vmatpush.msra.mxu0 0.0
        %897 = vmatpush.msra.mxu0 0.0
        %898 = vmatpush.msra.mxu0 0.0
        %899 = vmatpush.msra.mxu0 0.0
        %900 = vmatpush.msra.mxu0 0.0
        %901 = vmatpush.msra.mxu0 0.0
        %902 = vmatpush.msra.mxu0 0.0
        %903 = vmatpush.msra.mxu0 0.0
        %904 = vmatpush.msra.mxu0 %v857
        %905 = vmatpush.msra.mxu0 %v837
        %906 = vmatmul.f32.gmra.mxu0 %v844
        %v907 = vpop.f32.mrf.mxu0
        %v908 = vadd.f32 0.0, %v907
        %909 = vmatmul.f32.gmra.mxu0 %v847
        %v910 = vpop.f32.mrf.mxu0
        %v911 = vadd.f32 0.0, %v910
        %912 = vmatmul.f32.gmra.mxu0 %v850
        %v913 = vpop.f32.mrf.mxu0
        %v914 = vadd.f32 0.0, %v913
        %915 = vmatmul.f32.gmra.mxu0 %v853
        %v916 = vpop.f32.mrf.mxu0
        %v917 = vadd.f32 0.0, %v916
        %918 = vdwg.mxu0
        %919 = vmatpush.msra.mxu0 0.0
        %920 = vmatpush.msra.mxu0 0.0
        %921 = vmatpush.msra.mxu0 0.0
        %922 = vmatpush.msra.mxu0 0.0
        %923 = vmatpush.msra.mxu0 0.0
        %924 = vmatpush.msra.mxu0 0.0
        %925 = vmatpush.msra.mxu0 0.0
        %926 = vmatpush.msra.mxu0 0.0
        %927 = vmatpush.msra.mxu0 0.0
        %928 = vmatpush.msra.mxu0 0.0
        %929 = vmatpush.msra.mxu0 0.0
        %930 = vmatpush.msra.mxu0 0.0
        %931 = vmatpush.msra.mxu0 0.0
        %932 = vmatpush.msra.mxu0 0.0
        %933 = vmatpush.msra.mxu0 %v859
        %934 = vmatpush.msra.mxu0 %v828
        %935 = vmatmul.f32.gmra.mxu0 %v844
        %v936 = vpop.f32.mrf.mxu0
        %v937 = vadd.f32 0.0, %v936
        %938 = vmatmul.f32.gmra.mxu0 %v847
        %v939 = vpop.f32.mrf.mxu0
        %v940 = vadd.f32 0.0, %v939
        %941 = vmatmul.f32.gmra.mxu0 %v850
        %v942 = vpop.f32.mrf.mxu0
        %v943 = vadd.f32 0.0, %v942
        %944 = vmatmul.f32.gmra.mxu0 %v853
        %v945 = vpop.f32.mrf.mxu0
        %v946 = vadd.f32 0.0, %v945
        %947 = vdwg.mxu0
        %v948 = vadd.f32 %v702, %v879
        %v949 = vadd.f32 %v731, %v908
        %v950 = vadd.f32 %v760, %v937
        %v951 = vadd.f32 %v705, %v882
        %v952 = vadd.f32 %v734, %v911
        %v953 = vadd.f32 %v763, %v940
        %v954 = vadd.f32 %v708, %v885
        %v955 = vadd.f32 %v737, %v914
        %v956 = vadd.f32 %v766, %v943
        %v957 = vadd.f32 %v711, %v888
        %v958 = vadd.f32 %v740, %v917
        %v959 = vadd.f32 %v769, %v946
        %v960 = vld [vmem:[%s373] sm:$0xff]
        %v961 = vld [vmem:[%s373 + $0x8] sm:$0xf]
        %964 = vst [vmem:[#allocation1] ss:$2 sm:$0xff] %v960
        %s965 = scalar_lea.vmem [#allocation1], 16
        %966 = vst [vmem:[%s965] ss:$2 sm:$0xff] %v961
        %v967 = vld.sshfl [vmem:[#allocation1] sm:$0xff pattern:$0x75316420]
        %v968 = vld.sshfl [vmem:[#allocation1 + $0x8] sm:$0xff pattern:$0x75316420]
        %v969 = vld.sshfl [vmem:[#allocation1 + $0x10] sm:$0xff pattern:$0x75316420]
        %s973 = scalar_lea.vmem [#allocation1], 1
        %974 = vst [vmem:[%s973] ss:$2 sm:$0xff] %v960
        %s975 = scalar_lea.vmem [#allocation1], 17
        %976 = vst [vmem:[%s975] ss:$2 sm:$0xff] %v961
        %v977 = vld.sshfl [vmem:[#allocation1] sm:$0xff pattern:$0x75316420]
        %v978 = vld.sshfl [vmem:[#allocation1 + $0x8] sm:$0xff pattern:$0x75316420]
        %v979 = vld.sshfl [vmem:[#allocation1 + $0x10] sm:$0xff pattern:$0x75316420]
        %980 = vrot.lane.b32.xlu0 %v977, 127
        %v981 = vpop.permute.xlu0 %980
        %982 = vrot.lane.b32.xlu0 %v978, 127
        %v983 = vpop.permute.xlu0 %982
        %984 = vrot.lane.b32.xlu0 %v979, 127
        %v985 = vpop.permute.xlu0 %984
        %v986 = vsel %vm459, %v981, %v983
        %v987 = vsel %vm459, %v983, %v985
        %991 = vst [vmem:[#allocation1] ss:$2 sm:$0xff] %v960
        %s992 = scalar_lea.vmem [#allocation1], 16
        %993 = vst [vmem:[%s992] ss:$2 sm:$0xff] %v961
        %v994 = vld.sshfl [vmem:[#allocation1] sm:$0xff pattern:$0x75316420]
        %v995 = vld.sshfl [vmem:[#allocation1 + $0x8] sm:$0xff pattern:$0x75316420]
        %v996 = vld.sshfl [vmem:[#allocation1 + $0x10] sm:$0xff pattern:$0x75316420]
        %997 = vrot.lane.b32.xlu0 %v994, 126
        %v998 = vpop.permute.xlu0 %997
        %999 = vrot.lane.b32.xlu0 %v995, 126
        %v1000 = vpop.permute.xlu0 %999
        %1001 = vrot.lane.b32.xlu0 %v996, 126
        %v1002 = vpop.permute.xlu0 %1001
        %v1003 = vsel %vm477, %v998, %v1000
        %v1004 = vsel %vm477, %v1000, %v1002
        %v1005 = vsel %vm480, %v967, %v986
        %v1006 = vsel %vm480, %v968, %v987
        %v1007 = vsel %vm480, %v969, %v985
        %s1008 = scalar_lea.vmem %s3, 96
        %v1009 = vld [vmem:[%s1008] sm:$0xff]
        %v1010 = vld [vmem:[%s1008 + $0x8] sm:$0xff]
        %v1011 = vld [vmem:[%s1008 + $0x10] sm:$0xff]
        %v1012 = vld [vmem:[%s1008 + $0x18] sm:$0xff]
        %v1014 = vsel %vm560, %v1009, 0
        %v1017 = vsel %vm560, %v1010, 0
        %v1020 = vsel %vm560, %v1011, 0
        %v1023 = vsel %vm560, %v1012, 0
        %v1025 = vsel %vm480, %v1003, 0
        %v1027 = vsel %vm480, %v1004, 0
        %v1029 = vsel %vm480, %v1002, 0
        %1031 = vmatpush.msra.mxu0 0.0
        %1032 = vmatpush.msra.mxu0 0.0
        %1033 = vmatpush.msra.mxu0 0.0
        %1034 = vmatpush.msra.mxu0 0.0
        %1035 = vmatpush.msra.mxu0 0.0
        %1036 = vmatpush.msra.mxu0 0.0
        %1037 = vmatpush.msra.mxu0 0.0
        %1038 = vmatpush.msra.mxu0 0.0
        %1039 = vmatpush.msra.mxu0 0.0
        %1040 = vmatpush.msra.mxu0 0.0
        %1041 = vmatpush.msra.mxu0 0.0
        %1042 = vmatpush.msra.mxu0 0.0
        %1043 = vmatpush.msra.mxu0 0.0
        %1044 = vmatpush.msra.mxu0 0.0
        %1045 = vmatpush.msra.mxu0 %v1025
        %1046 = vmatpush.msra.mxu0 %v1005
        %1047 = vmatmul.f32.gmra.mxu0 %v1014
        %v1048 = vpop.f32.mrf.mxu0
        %v1049 = vadd.f32 0.0, %v1048
        %1050 = vmatmul.f32.gmra.mxu0 %v1017
        %v1051 = vpop.f32.mrf.mxu0
        %v1052 = vadd.f32 0.0, %v1051
        %1053 = vmatmul.f32.gmra.mxu0 %v1020
        %v1054 = vpop.f32.mrf.mxu0
        %v1055 = vadd.f32 0.0, %v1054
        %1056 = vmatmul.f32.gmra.mxu0 %v1023
        %v1057 = vpop.f32.mrf.mxu0
        %v1058 = vadd.f32 0.0, %v1057
        %1059 = vdwg.mxu0
        %1060 = vmatpush.msra.mxu0 0.0
        %1061 = vmatpush.msra.mxu0 0.0
        %1062 = vmatpush.msra.mxu0 0.0
        %1063 = vmatpush.msra.mxu0 0.0
        %1064 = vmatpush.msra.mxu0 0.0
        %1065 = vmatpush.msra.mxu0 0.0
        %1066 = vmatpush.msra.mxu0 0.0
        %1067 = vmatpush.msra.mxu0 0.0
        %1068 = vmatpush.msra.mxu0 0.0
        %1069 = vmatpush.msra.mxu0 0.0
        %1070 = vmatpush.msra.mxu0 0.0
        %1071 = vmatpush.msra.mxu0 0.0
        %1072 = vmatpush.msra.mxu0 0.0
        %1073 = vmatpush.msra.mxu0 0.0
        %1074 = vmatpush.msra.mxu0 %v1027
        %1075 = vmatpush.msra.mxu0 %v1006
        %1076 = vmatmul.f32.gmra.mxu0 %v1014
        %v1077 = vpop.f32.mrf.mxu0
        %v1078 = vadd.f32 0.0, %v1077
        %1079 = vmatmul.f32.gmra.mxu0 %v1017
        %v1080 = vpop.f32.mrf.mxu0
        %v1081 = vadd.f32 0.0, %v1080
        %1082 = vmatmul.f32.gmra.mxu0 %v1020
        %v1083 = vpop.f32.mrf.mxu0
        %v1084 = vadd.f32 0.0, %v1083
        %1085 = vmatmul.f32.gmra.mxu0 %v1023
        %v1086 = vpop.f32.mrf.mxu0
        %v1087 = vadd.f32 0.0, %v1086
        %1088 = vdwg.mxu0
        %1089 = vmatpush.msra.mxu0 0.0
        %1090 = vmatpush.msra.mxu0 0.0
        %1091 = vmatpush.msra.mxu0 0.0
        %1092 = vmatpush.msra.mxu0 0.0
        %1093 = vmatpush.msra.mxu0 0.0
        %1094 = vmatpush.msra.mxu0 0.0
        %1095 = vmatpush.msra.mxu0 0.0
        %1096 = vmatpush.msra.mxu0 0.0
        %1097 = vmatpush.msra.mxu0 0.0
        %1098 = vmatpush.msra.mxu0 0.0
        %1099 = vmatpush.msra.mxu0 0.0
        %1100 = vmatpush.msra.mxu0 0.0
        %1101 = vmatpush.msra.mxu0 0.0
        %1102 = vmatpush.msra.mxu0 0.0
        %1103 = vmatpush.msra.mxu0 %v1029
        %1104 = vmatpush.msra.mxu0 %v1007
        %1105 = vmatmul.f32.gmra.mxu0 %v1014
        %v1106 = vpop.f32.mrf.mxu0
        %v1107 = vadd.f32 0.0, %v1106
        %1108 = vmatmul.f32.gmra.mxu0 %v1017
        %v1109 = vpop.f32.mrf.mxu0
        %v1110 = vadd.f32 0.0, %v1109
        %1111 = vmatmul.f32.gmra.mxu0 %v1020
        %v1112 = vpop.f32.mrf.mxu0
        %v1113 = vadd.f32 0.0, %v1112
        %1114 = vmatmul.f32.gmra.mxu0 %v1023
        %v1115 = vpop.f32.mrf.mxu0
        %v1116 = vadd.f32 0.0, %v1115
        %1117 = vdwg.mxu0
        %v1118 = vadd.f32 %v948, %v1049
        %v1119 = vadd.f32 %v949, %v1078
        %v1120 = vadd.f32 %v950, %v1107
        %v1121 = vadd.f32 %v951, %v1052
        %v1122 = vadd.f32 %v952, %v1081
        %v1123 = vadd.f32 %v953, %v1110
        %v1124 = vadd.f32 %v954, %v1055
        %v1125 = vadd.f32 %v955, %v1084
        %v1126 = vadd.f32 %v956, %v1113
        %v1127 = vadd.f32 %v957, %v1058
        %v1128 = vadd.f32 %v958, %v1087
        %v1129 = vadd.f32 %v959, %v1116
        %1130 = vst [vmem:[#allocation1] ss:$2 sm:$0xff] %v960
        %s1131 = scalar_lea.vmem [#allocation1], 16
        %1132 = vst [vmem:[%s1131] ss:$2 sm:$0xff] %v961
        %v1133 = vld.sshfl [vmem:[#allocation1] sm:$0xff pattern:$0x75316420]
        %v1134 = vld.sshfl [vmem:[#allocation1 + $0x8] sm:$0xff pattern:$0x75316420]
        %v1135 = vld.sshfl [vmem:[#allocation1 + $0x10] sm:$0xff pattern:$0x75316420]
        %s1139 = scalar_lea.vmem [#allocation1], 1
        %1140 = vst [vmem:[%s1139] ss:$2 sm:$0xff] %v960
        %s1141 = scalar_lea.vmem [#allocation1], 17
        %1142 = vst [vmem:[%s1141] ss:$2 sm:$0xff] %v961
        %v1143 = vld.sshfl [vmem:[#allocation1] sm:$0xff pattern:$0x75316420]
        %v1144 = vld.sshfl [vmem:[#allocation1 + $0x8] sm:$0xff pattern:$0x75316420]
        %v1145 = vld.sshfl [vmem:[#allocation1 + $0x10] sm:$0xff pattern:$0x75316420]
        %1146 = vrot.lane.b32.xlu0 %v1143, 127
        %v1147 = vpop.permute.xlu0 %1146
        %1148 = vrot.lane.b32.xlu0 %v1144, 127
        %v1149 = vpop.permute.xlu0 %1148
        %1150 = vrot.lane.b32.xlu0 %v1145, 127
        %v1151 = vpop.permute.xlu0 %1150
        %v1152 = vsel %vm459, %v1147, %v1149
        %v1153 = vsel %vm459, %v1149, %v1151
        %1157 = vst [vmem:[#allocation1] ss:$2 sm:$0xff] %v960
        %s1158 = scalar_lea.vmem [#allocation1], 16
        %1159 = vst [vmem:[%s1158] ss:$2 sm:$0xff] %v961
        %v1160 = vld.sshfl [vmem:[#allocation1] sm:$0xff pattern:$0x75316420]
        %v1161 = vld.sshfl [vmem:[#allocation1 + $0x8] sm:$0xff pattern:$0x75316420]
        %v1162 = vld.sshfl [vmem:[#allocation1 + $0x10] sm:$0xff pattern:$0x75316420]
        %1163 = vrot.lane.b32.xlu0 %v1160, 126
        %v1164 = vpop.permute.xlu0 %1163
        %1165 = vrot.lane.b32.xlu0 %v1161, 126
        %v1166 = vpop.permute.xlu0 %1165
        %1167 = vrot.lane.b32.xlu0 %v1162, 126
        %v1168 = vpop.permute.xlu0 %1167
        %v1169 = vsel %vm477, %v1164, %v1166
        %v1170 = vsel %vm477, %v1166, %v1168
        %v1171 = vsel %vm480, %v1133, %v1152
        %v1172 = vsel %vm480, %v1134, %v1153
        %v1173 = vsel %vm480, %v1135, %v1151
        %s1174 = scalar_lea.vmem %s3, 128
        %v1175 = vld [vmem:[%s1174] sm:$0xff]
        %v1176 = vld [vmem:[%s1174 + $0x8] sm:$0xff]
        %v1177 = vld [vmem:[%s1174 + $0x10] sm:$0xff]
        %v1178 = vld [vmem:[%s1174 + $0x18] sm:$0xff]
        %1182 = vrot.lane.b32.xlu0 %v1171, 110
        %v1183 = vpop.permute.xlu0 %1182
        %1184 = vrot.lane.b32.xlu0 %v1172, 110
        %v1185 = vpop.permute.xlu0 %1184
        %1186 = vrot.lane.b32.xlu0 %v1173, 110
        %v1187 = vpop.permute.xlu0 %1186
        %1188 = vrot.lane.b32.xlu0 %v1169, 110
        %v1189 = vpop.permute.xlu0 %1188
        %1190 = vrot.lane.b32.xlu0 %v1170, 110
        %v1191 = vpop.permute.xlu0 %1190
        %1192 = vrot.lane.b32.xlu0 %v1168, 110
        %v1193 = vpop.permute.xlu0 %1192
        %v1194 = vsel %vm552, %v1183, %v1185
        %v1195 = vsel %vm552, %v1185, %v1187
        %v1196 = vsel %vm552, %v1189, %v1191
        %v1197 = vsel %vm552, %v1191, %v1193
        %v1202 = vsel %vm560, %v1175, 0
        %v1205 = vsel %vm560, %v1176, 0
        %v1208 = vsel %vm560, %v1177, 0
        %v1211 = vsel %vm560, %v1178, 0
        %v1213 = vsel %vm480, %v1196, 0
        %v1215 = vsel %vm480, %v1197, 0
        %v1217 = vsel %vm480, %v1193, 0
        %1219 = vmatpush.msra.mxu0 0.0
        %1220 = vmatpush.msra.mxu0 0.0
        %1221 = vmatpush.msra.mxu0 0.0
        %1222 = vmatpush.msra.mxu0 0.0
        %1223 = vmatpush.msra.mxu0 0.0
        %1224 = vmatpush.msra.mxu0 0.0
        %1225 = vmatpush.msra.mxu0 0.0
        %1226 = vmatpush.msra.mxu0 0.0
        %1227 = vmatpush.msra.mxu0 0.0
        %1228 = vmatpush.msra.mxu0 0.0
        %1229 = vmatpush.msra.mxu0 0.0
        %1230 = vmatpush.msra.mxu0 0.0
        %1231 = vmatpush.msra.mxu0 0.0
        %1232 = vmatpush.msra.mxu0 0.0
        %1233 = vmatpush.msra.mxu0 %v1213
        %1234 = vmatpush.msra.mxu0 %v1194
        %1235 = vmatmul.f32.gmra.mxu0 %v1202
        %v1236 = vpop.f32.mrf.mxu0
        %v1237 = vadd.f32 0.0, %v1236
        %1238 = vmatmul.f32.gmra.mxu0 %v1205
        %v1239 = vpop.f32.mrf.mxu0
        %v1240 = vadd.f32 0.0, %v1239
        %1241 = vmatmul.f32.gmra.mxu0 %v1208
        %v1242 = vpop.f32.mrf.mxu0
        %v1243 = vadd.f32 0.0, %v1242
        %1244 = vmatmul.f32.gmra.mxu0 %v1211
        %v1245 = vpop.f32.mrf.mxu0
        %v1246 = vadd.f32 0.0, %v1245
        %1247 = vdwg.mxu0
        %1248 = vmatpush.msra.mxu0 0.0
        %1249 = vmatpush.msra.mxu0 0.0
        %1250 = vmatpush.msra.mxu0 0.0
        %1251 = vmatpush.msra.mxu0 0.0
        %1252 = vmatpush.msra.mxu0 0.0
        %1253 = vmatpush.msra.mxu0 0.0
        %1254 = vmatpush.msra.mxu0 0.0
        %1255 = vmatpush.msra.mxu0 0.0
        %1256 = vmatpush.msra.mxu0 0.0
        %1257 = vmatpush.msra.mxu0 0.0
        %1258 = vmatpush.msra.mxu0 0.0
        %1259 = vmatpush.msra.mxu0 0.0
        %1260 = vmatpush.msra.mxu0 0.0
        %1261 = vmatpush.msra.mxu0 0.0
        %1262 = vmatpush.msra.mxu0 %v1215
        %1263 = vmatpush.msra.mxu0 %v1195
        %1264 = vmatmul.f32.gmra.mxu0 %v1202
        %v1265 = vpop.f32.mrf.mxu0
        %v1266 = vadd.f32 0.0, %v1265
        %1267 = vmatmul.f32.gmra.mxu0 %v1205
        %v1268 = vpop.f32.mrf.mxu0
        %v1269 = vadd.f32 0.0, %v1268
        %1270 = vmatmul.f32.gmra.mxu0 %v1208
        %v1271 = vpop.f32.mrf.mxu0
        %v1272 = vadd.f32 0.0, %v1271
        %1273 = vmatmul.f32.gmra.mxu0 %v1211
        %v1274 = vpop.f32.mrf.mxu0
        %v1275 = vadd.f32 0.0, %v1274
        %1276 = vdwg.mxu0
        %1277 = vmatpush.msra.mxu0 0.0
        %1278 = vmatpush.msra.mxu0 0.0
        %1279 = vmatpush.msra.mxu0 0.0
        %1280 = vmatpush.msra.mxu0 0.0
        %1281 = vmatpush.msra.mxu0 0.0
        %1282 = vmatpush.msra.mxu0 0.0
        %1283 = vmatpush.msra.mxu0 0.0
        %1284 = vmatpush.msra.mxu0 0.0
        %1285 = vmatpush.msra.mxu0 0.0
        %1286 = vmatpush.msra.mxu0 0.0
        %1287 = vmatpush.msra.mxu0 0.0
        %1288 = vmatpush.msra.mxu0 0.0
        %1289 = vmatpush.msra.mxu0 0.0
        %1290 = vmatpush.msra.mxu0 0.0
        %1291 = vmatpush.msra.mxu0 %v1217
        %1292 = vmatpush.msra.mxu0 %v1187
        %1293 = vmatmul.f32.gmra.mxu0 %v1202
        %v1294 = vpop.f32.mrf.mxu0
        %v1295 = vadd.f32 0.0, %v1294
        %1296 = vmatmul.f32.gmra.mxu0 %v1205
        %v1297 = vpop.f32.mrf.mxu0
        %v1298 = vadd.f32 0.0, %v1297
        %1299 = vmatmul.f32.gmra.mxu0 %v1208
        %v1300 = vpop.f32.mrf.mxu0
        %v1301 = vadd.f32 0.0, %v1300
        %1302 = vmatmul.f32.gmra.mxu0 %v1211
        %v1303 = vpop.f32.mrf.mxu0
        %v1304 = vadd.f32 0.0, %v1303
        %1305 = vdwg.mxu0
        %v1306 = vadd.f32 %v1118, %v1237
        %v1307 = vadd.f32 %v1119, %v1266
        %v1308 = vadd.f32 %v1120, %v1295
        %v1309 = vadd.f32 %v1121, %v1240
        %v1310 = vadd.f32 %v1122, %v1269
        %v1311 = vadd.f32 %v1123, %v1298
        %v1312 = vadd.f32 %v1124, %v1243
        %v1313 = vadd.f32 %v1125, %v1272
        %v1314 = vadd.f32 %v1126, %v1301
        %v1315 = vadd.f32 %v1127, %v1246
        %v1316 = vadd.f32 %v1128, %v1275
        %v1317 = vadd.f32 %v1129, %v1304
        %1318 = vst [vmem:[#allocation1] ss:$2 sm:$0xff] %v960
        %s1319 = scalar_lea.vmem [#allocation1], 16
        %1320 = vst [vmem:[%s1319] ss:$2 sm:$0xff] %v961
        %v1321 = vld.sshfl [vmem:[#allocation1] sm:$0xff pattern:$0x75316420]
        %v1322 = vld.sshfl [vmem:[#allocation1 + $0x8] sm:$0xff pattern:$0x75316420]
        %v1323 = vld.sshfl [vmem:[#allocation1 + $0x10] sm:$0xff pattern:$0x75316420]
        %s1327 = scalar_lea.vmem [#allocation1], 1
        %1328 = vst [vmem:[%s1327] ss:$2 sm:$0xff] %v960
        %s1329 = scalar_lea.vmem [#allocation1], 17
        %1330 = vst [vmem:[%s1329] ss:$2 sm:$0xff] %v961
        %v1331 = vld.sshfl [vmem:[#allocation1] sm:$0xff pattern:$0x75316420]
        %v1332 = vld.sshfl [vmem:[#allocation1 + $0x8] sm:$0xff pattern:$0x75316420]
        %v1333 = vld.sshfl [vmem:[#allocation1 + $0x10] sm:$0xff pattern:$0x75316420]
        %1334 = vrot.lane.b32.xlu0 %v1331, 127
        %v1335 = vpop.permute.xlu0 %1334
        %1336 = vrot.lane.b32.xlu0 %v1332, 127
        %v1337 = vpop.permute.xlu0 %1336
        %1338 = vrot.lane.b32.xlu0 %v1333, 127
        %v1339 = vpop.permute.xlu0 %1338
        %v1340 = vsel %vm459, %v1335, %v1337
        %v1341 = vsel %vm459, %v1337, %v1339
        %1345 = vst [vmem:[#allocation1] ss:$2 sm:$0xff] %v960
        %s1346 = scalar_lea.vmem [#allocation1], 16
        %1347 = vst [vmem:[%s1346] ss:$2 sm:$0xff] %v961
        %v1348 = vld.sshfl [vmem:[#allocation1] sm:$0xff pattern:$0x75316420]
        %v1349 = vld.sshfl [vmem:[#allocation1 + $0x8] sm:$0xff pattern:$0x75316420]
        %v1350 = vld.sshfl [vmem:[#allocation1 + $0x10] sm:$0xff pattern:$0x75316420]
        %1351 = vrot.lane.b32.xlu0 %v1348, 126
        %v1352 = vpop.permute.xlu0 %1351
        %1353 = vrot.lane.b32.xlu0 %v1349, 126
        %v1354 = vpop.permute.xlu0 %1353
        %1355 = vrot.lane.b32.xlu0 %v1350, 126
        %v1356 = vpop.permute.xlu0 %1355
        %v1357 = vsel %vm477, %v1352, %v1354
        %v1358 = vsel %vm477, %v1354, %v1356
        %v1359 = vsel %vm480, %v1321, %v1340
        %v1360 = vsel %vm480, %v1322, %v1341
        %v1361 = vsel %vm480, %v1323, %v1339
        %s1362 = scalar_lea.vmem %s3, 160
        %v1363 = vld [vmem:[%s1362] sm:$0xff]
        %v1364 = vld [vmem:[%s1362 + $0x8] sm:$0xff]
        %v1365 = vld [vmem:[%s1362 + $0x10] sm:$0xff]
        %v1366 = vld [vmem:[%s1362 + $0x18] sm:$0xff]
        %1370 = vrot.lane.b32.xlu0 %v1359, 92
        %v1371 = vpop.permute.xlu0 %1370
        %1372 = vrot.lane.b32.xlu0 %v1360, 92
        %v1373 = vpop.permute.xlu0 %1372
        %1374 = vrot.lane.b32.xlu0 %v1361, 92
        %v1375 = vpop.permute.xlu0 %1374
        %1376 = vrot.lane.b32.xlu0 %v1357, 92
        %v1377 = vpop.permute.xlu0 %1376
        %1378 = vrot.lane.b32.xlu0 %v1358, 92
        %v1379 = vpop.permute.xlu0 %1378
        %1380 = vrot.lane.b32.xlu0 %v1356, 92
        %v1381 = vpop.permute.xlu0 %1380
        %v1382 = vsel %vm835, %v1371, %v1373
        %v1383 = vsel %vm835, %v1373, %v1375
        %v1384 = vsel %vm835, %v1377, %v1379
        %v1385 = vsel %vm835, %v1379, %v1381
        %v1390 = vsel %vm560, %v1363, 0
        %v1393 = vsel %vm560, %v1364, 0
        %v1396 = vsel %vm560, %v1365, 0
        %v1399 = vsel %vm560, %v1366, 0
        %v1401 = vsel %vm480, %v1384, 0
        %v1403 = vsel %vm480, %v1385, 0
        %v1405 = vsel %vm480, %v1381, 0
        %1407 = vmatpush.msra.mxu0 0.0
        %1408 = vmatpush.msra.mxu0 0.0
        %1409 = vmatpush.msra.mxu0 0.0
        %1410 = vmatpush.msra.mxu0 0.0
        %1411 = vmatpush.msra.mxu0 0.0
        %1412 = vmatpush.msra.mxu0 0.0
        %1413 = vmatpush.msra.mxu0 0.0
        %1414 = vmatpush.msra.mxu0 0.0
        %1415 = vmatpush.msra.mxu0 0.0
        %1416 = vmatpush.msra.mxu0 0.0
        %1417 = vmatpush.msra.mxu0 0.0
        %1418 = vmatpush.msra.mxu0 0.0
        %1419 = vmatpush.msra.mxu0 0.0
        %1420 = vmatpush.msra.mxu0 0.0
        %1421 = vmatpush.msra.mxu0 %v1401
        %1422 = vmatpush.msra.mxu0 %v1382
        %1423 = vmatmul.f32.gmra.mxu0 %v1390
        %v1424 = vpop.f32.mrf.mxu0
        %v1425 = vadd.f32 0.0, %v1424
        %1426 = vmatmul.f32.gmra.mxu0 %v1393
        %v1427 = vpop.f32.mrf.mxu0
        %v1428 = vadd.f32 0.0, %v1427
        %1429 = vmatmul.f32.gmra.mxu0 %v1396
        %v1430 = vpop.f32.mrf.mxu0
        %v1431 = vadd.f32 0.0, %v1430
        %1432 = vmatmul.f32.gmra.mxu0 %v1399
        %v1433 = vpop.f32.mrf.mxu0
        %v1434 = vadd.f32 0.0, %v1433
        %1435 = vdwg.mxu0
        %1436 = vmatpush.msra.mxu0 0.0
        %1437 = vmatpush.msra.mxu0 0.0
        %1438 = vmatpush.msra.mxu0 0.0
        %1439 = vmatpush.msra.mxu0 0.0
        %1440 = vmatpush.msra.mxu0 0.0
        %1441 = vmatpush.msra.mxu0 0.0
        %1442 = vmatpush.msra.mxu0 0.0
        %1443 = vmatpush.msra.mxu0 0.0
        %1444 = vmatpush.msra.mxu0 0.0
        %1445 = vmatpush.msra.mxu0 0.0
        %1446 = vmatpush.msra.mxu0 0.0
        %1447 = vmatpush.msra.mxu0 0.0
        %1448 = vmatpush.msra.mxu0 0.0
        %1449 = vmatpush.msra.mxu0 0.0
        %1450 = vmatpush.msra.mxu0 %v1403
        %1451 = vmatpush.msra.mxu0 %v1383
        %1452 = vmatmul.f32.gmra.mxu0 %v1390
        %v1453 = vpop.f32.mrf.mxu0
        %v1454 = vadd.f32 0.0, %v1453
        %1455 = vmatmul.f32.gmra.mxu0 %v1393
        %v1456 = vpop.f32.mrf.mxu0
        %v1457 = vadd.f32 0.0, %v1456
        %1458 = vmatmul.f32.gmra.mxu0 %v1396
        %v1459 = vpop.f32.mrf.mxu0
        %v1460 = vadd.f32 0.0, %v1459
        %1461 = vmatmul.f32.gmra.mxu0 %v1399
        %v1462 = vpop.f32.mrf.mxu0
        %v1463 = vadd.f32 0.0, %v1462
        %1464 = vdwg.mxu0
        %1465 = vmatpush.msra.mxu0 0.0
        %1466 = vmatpush.msra.mxu0 0.0
        %1467 = vmatpush.msra.mxu0 0.0
        %1468 = vmatpush.msra.mxu0 0.0
        %1469 = vmatpush.msra.mxu0 0.0
        %1470 = vmatpush.msra.mxu0 0.0
        %1471 = vmatpush.msra.mxu0 0.0
        %1472 = vmatpush.msra.mxu0 0.0
        %1473 = vmatpush.msra.mxu0 0.0
        %1474 = vmatpush.msra.mxu0 0.0
        %1475 = vmatpush.msra.mxu0 0.0
        %1476 = vmatpush.msra.mxu0 0.0
        %1477 = vmatpush.msra.mxu0 0.0
        %1478 = vmatpush.msra.mxu0 0.0
        %1479 = vmatpush.msra.mxu0 %v1405
        %1480 = vmatpush.msra.mxu0 %v1375
        %1481 = vmatmul.f32.gmra.mxu0 %v1390
        %v1482 = vpop.f32.mrf.mxu0
        %v1483 = vadd.f32 0.0, %v1482
        %1484 = vmatmul.f32.gmra.mxu0 %v1393
        %v1485 = vpop.f32.mrf.mxu0
        %v1486 = vadd.f32 0.0, %v1485
        %1487 = vmatmul.f32.gmra.mxu0 %v1396
        %v1488 = vpop.f32.mrf.mxu0
        %v1489 = vadd.f32 0.0, %v1488
        %1490 = vmatmul.f32.gmra.mxu0 %v1399
        %v1491 = vpop.f32.mrf.mxu0
        %v1492 = vadd.f32 0.0, %v1491
        %1493 = vdwg.mxu0
        %v1494 = vadd.f32 %v1306, %v1425
        %v1495 = vadd.f32 %v1307, %v1454
        %v1496 = vadd.f32 %v1308, %v1483
        %v1497 = vadd.f32 %v1309, %v1428
        %v1498 = vadd.f32 %v1310, %v1457
        %v1499 = vadd.f32 %v1311, %v1486
        %v1500 = vadd.f32 %v1312, %v1431
        %v1501 = vadd.f32 %v1313, %v1460
        %v1502 = vadd.f32 %v1314, %v1489
        %v1503 = vadd.f32 %v1315, %v1434
        %v1504 = vadd.f32 %v1316, %v1463
        %v1505 = vadd.f32 %v1317, %v1492
        %v1506 = vld [vmem:[%s381] sm:$0xff]
        %v1507 = vld [vmem:[%s381 + $0x8] sm:$0xf]
        %1510 = vst [vmem:[#allocation1] ss:$2 sm:$0xff] %v1506
        %s1511 = scalar_lea.vmem [#allocation1], 16
        %1512 = vst [vmem:[%s1511] ss:$2 sm:$0xff] %v1507
        %v1513 = vld.sshfl [vmem:[#allocation1] sm:$0xff pattern:$0x75316420]
        %v1514 = vld.sshfl [vmem:[#allocation1 + $0x8] sm:$0xff pattern:$0x75316420]
        %v1515 = vld.sshfl [vmem:[#allocation1 + $0x10] sm:$0xff pattern:$0x75316420]
        %s1519 = scalar_lea.vmem [#allocation1], 1
        %1520 = vst [vmem:[%s1519] ss:$2 sm:$0xff] %v1506
        %s1521 = scalar_lea.vmem [#allocation1], 17
        %1522 = vst [vmem:[%s1521] ss:$2 sm:$0xff] %v1507
        %v1523 = vld.sshfl [vmem:[#allocation1] sm:$0xff pattern:$0x75316420]
        %v1524 = vld.sshfl [vmem:[#allocation1 + $0x8] sm:$0xff pattern:$0x75316420]
        %v1525 = vld.sshfl [vmem:[#allocation1 + $0x10] sm:$0xff pattern:$0x75316420]
        %1526 = vrot.lane.b32.xlu0 %v1523, 127
        %v1527 = vpop.permute.xlu0 %1526
        %1528 = vrot.lane.b32.xlu0 %v1524, 127
        %v1529 = vpop.permute.xlu0 %1528
        %1530 = vrot.lane.b32.xlu0 %v1525, 127
        %v1531 = vpop.permute.xlu0 %1530
        %v1532 = vsel %vm459, %v1527, %v1529
        %v1533 = vsel %vm459, %v1529, %v1531
        %1537 = vst [vmem:[#allocation1] ss:$2 sm:$0xff] %v1506
        %s1538 = scalar_lea.vmem [#allocation1], 16
        %1539 = vst [vmem:[%s1538] ss:$2 sm:$0xff] %v1507
        %v1540 = vld.sshfl [vmem:[#allocation1] sm:$0xff pattern:$0x75316420]
        %v1541 = vld.sshfl [vmem:[#allocation1 + $0x8] sm:$0xff pattern:$0x75316420]
        %v1542 = vld.sshfl [vmem:[#allocation1 + $0x10] sm:$0xff pattern:$0x75316420]
        %1543 = vrot.lane.b32.xlu0 %v1540, 126
        %v1544 = vpop.permute.xlu0 %1543
        %1545 = vrot.lane.b32.xlu0 %v1541, 126
        %v1546 = vpop.permute.xlu0 %1545
        %1547 = vrot.lane.b32.xlu0 %v1542, 126
        %v1548 = vpop.permute.xlu0 %1547
        %v1549 = vsel %vm477, %v1544, %v1546
        %v1550 = vsel %vm477, %v1546, %v1548
        %v1551 = vsel %vm480, %v1513, %v1532
        %v1552 = vsel %vm480, %v1514, %v1533
        %v1553 = vsel %vm480, %v1515, %v1531
        %s1554 = scalar_lea.vmem %s3, 192
        %v1555 = vld [vmem:[%s1554] sm:$0xff]
        %v1556 = vld [vmem:[%s1554 + $0x8] sm:$0xff]
        %v1557 = vld [vmem:[%s1554 + $0x10] sm:$0xff]
        %v1558 = vld [vmem:[%s1554 + $0x18] sm:$0xff]
        %v1560 = vsel %vm560, %v1555, 0
        %v1563 = vsel %vm560, %v1556, 0
        %v1566 = vsel %vm560, %v1557, 0
        %v1569 = vsel %vm560, %v1558, 0
        %v1571 = vsel %vm480, %v1549, 0
        %v1573 = vsel %vm480, %v1550, 0
        %v1575 = vsel %vm480, %v1548, 0
        %1577 = vmatpush.msra.mxu0 0.0
        %1578 = vmatpush.msra.mxu0 0.0
        %1579 = vmatpush.msra.mxu0 0.0
        %1580 = vmatpush.msra.mxu0 0.0
        %1581 = vmatpush.msra.mxu0 0.0
        %1582 = vmatpush.msra.mxu0 0.0
        %1583 = vmatpush.msra.mxu0 0.0
        %1584 = vmatpush.msra.mxu0 0.0
        %1585 = vmatpush.msra.mxu0 0.0
        %1586 = vmatpush.msra.mxu0 0.0
        %1587 = vmatpush.msra.mxu0 0.0
        %1588 = vmatpush.msra.mxu0 0.0
        %1589 = vmatpush.msra.mxu0 0.0
        %1590 = vmatpush.msra.mxu0 0.0
        %1591 = vmatpush.msra.mxu0 %v1571
        %1592 = vmatpush.msra.mxu0 %v1551
        %1593 = vmatmul.f32.gmra.mxu0 %v1560
        %v1594 = vpop.f32.mrf.mxu0
        %v1595 = vadd.f32 0.0, %v1594
        %1596 = vmatmul.f32.gmra.mxu0 %v1563
        %v1597 = vpop.f32.mrf.mxu0
        %v1598 = vadd.f32 0.0, %v1597
        %1599 = vmatmul.f32.gmra.mxu0 %v1566
        %v1600 = vpop.f32.mrf.mxu0
        %v1601 = vadd.f32 0.0, %v1600
        %1602 = vmatmul.f32.gmra.mxu0 %v1569
        %v1603 = vpop.f32.mrf.mxu0
        %v1604 = vadd.f32 0.0, %v1603
        %1605 = vdwg.mxu0
        %1606 = vmatpush.msra.mxu0 0.0
        %1607 = vmatpush.msra.mxu0 0.0
        %1608 = vmatpush.msra.mxu0 0.0
        %1609 = vmatpush.msra.mxu0 0.0
        %1610 = vmatpush.msra.mxu0 0.0
        %1611 = vmatpush.msra.mxu0 0.0
        %1612 = vmatpush.msra.mxu0 0.0
        %1613 = vmatpush.msra.mxu0 0.0
        %1614 = vmatpush.msra.mxu0 0.0
        %1615 = vmatpush.msra.mxu0 0.0
        %1616 = vmatpush.msra.mxu0 0.0
        %1617 = vmatpush.msra.mxu0 0.0
        %1618 = vmatpush.msra.mxu0 0.0
        %1619 = vmatpush.msra.mxu0 0.0
        %1620 = vmatpush.msra.mxu0 %v1573
        %1621 = vmatpush.msra.mxu0 %v1552
        %1622 = vmatmul.f32.gmra.mxu0 %v1560
        %v1623 = vpop.f32.mrf.mxu0
        %v1624 = vadd.f32 0.0, %v1623
        %1625 = vmatmul.f32.gmra.mxu0 %v1563
        %v1626 = vpop.f32.mrf.mxu0
        %v1627 = vadd.f32 0.0, %v1626
        %1628 = vmatmul.f32.gmra.mxu0 %v1566
        %v1629 = vpop.f32.mrf.mxu0
        %v1630 = vadd.f32 0.0, %v1629
        %1631 = vmatmul.f32.gmra.mxu0 %v1569
        %v1632 = vpop.f32.mrf.mxu0
        %v1633 = vadd.f32 0.0, %v1632
        %1634 = vdwg.mxu0
        %1635 = vmatpush.msra.mxu0 0.0
        %1636 = vmatpush.msra.mxu0 0.0
        %1637 = vmatpush.msra.mxu0 0.0
        %1638 = vmatpush.msra.mxu0 0.0
        %1639 = vmatpush.msra.mxu0 0.0
        %1640 = vmatpush.msra.mxu0 0.0
        %1641 = vmatpush.msra.mxu0 0.0
        %1642 = vmatpush.msra.mxu0 0.0
        %1643 = vmatpush.msra.mxu0 0.0
        %1644 = vmatpush.msra.mxu0 0.0
        %1645 = vmatpush.msra.mxu0 0.0
        %1646 = vmatpush.msra.mxu0 0.0
        %1647 = vmatpush.msra.mxu0 0.0
        %1648 = vmatpush.msra.mxu0 0.0
        %1649 = vmatpush.msra.mxu0 %v1575
        %1650 = vmatpush.msra.mxu0 %v1553
        %1651 = vmatmul.f32.gmra.mxu0 %v1560
        %v1652 = vpop.f32.mrf.mxu0
        %v1653 = vadd.f32 0.0, %v1652
        %1654 = vmatmul.f32.gmra.mxu0 %v1563
        %v1655 = vpop.f32.mrf.mxu0
        %v1656 = vadd.f32 0.0, %v1655
        %1657 = vmatmul.f32.gmra.mxu0 %v1566
        %v1658 = vpop.f32.mrf.mxu0
        %v1659 = vadd.f32 0.0, %v1658
        %1660 = vmatmul.f32.gmra.mxu0 %v1569
        %v1661 = vpop.f32.mrf.mxu0
        %v1662 = vadd.f32 0.0, %v1661
        %1663 = vdwg.mxu0
        %v1664 = vadd.f32 %v1494, %v1595
        %v1665 = vadd.f32 %v1495, %v1624
        %v1666 = vadd.f32 %v1496, %v1653
        %v1667 = vadd.f32 %v1497, %v1598
        %v1668 = vadd.f32 %v1498, %v1627
        %v1669 = vadd.f32 %v1499, %v1656
        %v1670 = vadd.f32 %v1500, %v1601
        %v1671 = vadd.f32 %v1501, %v1630
        %v1672 = vadd.f32 %v1502, %v1659
        %v1673 = vadd.f32 %v1503, %v1604
        %v1674 = vadd.f32 %v1504, %v1633
        %v1675 = vadd.f32 %v1505, %v1662
        %1676 = vst [vmem:[#allocation1] ss:$2 sm:$0xff] %v1506
        %s1677 = scalar_lea.vmem [#allocation1], 16
        %1678 = vst [vmem:[%s1677] ss:$2 sm:$0xff] %v1507
        %v1679 = vld.sshfl [vmem:[#allocation1] sm:$0xff pattern:$0x75316420]
        %v1680 = vld.sshfl [vmem:[#allocation1 + $0x8] sm:$0xff pattern:$0x75316420]
        %v1681 = vld.sshfl [vmem:[#allocation1 + $0x10] sm:$0xff pattern:$0x75316420]
        %s1685 = scalar_lea.vmem [#allocation1], 1
        %1686 = vst [vmem:[%s1685] ss:$2 sm:$0xff] %v1506
        %s1687 = scalar_lea.vmem [#allocation1], 17
        %1688 = vst [vmem:[%s1687] ss:$2 sm:$0xff] %v1507
        %v1689 = vld.sshfl [vmem:[#allocation1] sm:$0xff pattern:$0x75316420]
        %v1690 = vld.sshfl [vmem:[#allocation1 + $0x8] sm:$0xff pattern:$0x75316420]
        %v1691 = vld.sshfl [vmem:[#allocation1 + $0x10] sm:$0xff pattern:$0x75316420]
        %1692 = vrot.lane.b32.xlu0 %v1689, 127
        %v1693 = vpop.permute.xlu0 %1692
        %1694 = vrot.lane.b32.xlu0 %v1690, 127
        %v1695 = vpop.permute.xlu0 %1694
        %1696 = vrot.lane.b32.xlu0 %v1691, 127
        %v1697 = vpop.permute.xlu0 %1696
        %v1698 = vsel %vm459, %v1693, %v1695
        %v1699 = vsel %vm459, %v1695, %v1697
        %1703 = vst [vmem:[#allocation1] ss:$2 sm:$0xff] %v1506
        %s1704 = scalar_lea.vmem [#allocation1], 16
        %1705 = vst [vmem:[%s1704] ss:$2 sm:$0xff] %v1507
        %v1706 = vld.sshfl [vmem:[#allocation1] sm:$0xff pattern:$0x75316420]
        %v1707 = vld.sshfl [vmem:[#allocation1 + $0x8] sm:$0xff pattern:$0x75316420]
        %v1708 = vld.sshfl [vmem:[#allocation1 + $0x10] sm:$0xff pattern:$0x75316420]
        %1709 = vrot.lane.b32.xlu0 %v1706, 126
        %v1710 = vpop.permute.xlu0 %1709
        %1711 = vrot.lane.b32.xlu0 %v1707, 126
        %v1712 = vpop.permute.xlu0 %1711
        %1713 = vrot.lane.b32.xlu0 %v1708, 126
        %v1714 = vpop.permute.xlu0 %1713
        %v1715 = vsel %vm477, %v1710, %v1712
        %v1716 = vsel %vm477, %v1712, %v1714
        %v1717 = vsel %vm480, %v1679, %v1698
        %v1718 = vsel %vm480, %v1680, %v1699
        %v1719 = vsel %vm480, %v1681, %v1697
        %s1720 = scalar_lea.vmem %s3, 224
        %v1721 = vld [vmem:[%s1720] sm:$0xff]
        %v1722 = vld [vmem:[%s1720 + $0x8] sm:$0xff]
        %v1723 = vld [vmem:[%s1720 + $0x10] sm:$0xff]
        %v1724 = vld [vmem:[%s1720 + $0x18] sm:$0xff]
        %1728 = vrot.lane.b32.xlu0 %v1717, 110
        %v1729 = vpop.permute.xlu0 %1728
        %1730 = vrot.lane.b32.xlu0 %v1718, 110
        %v1731 = vpop.permute.xlu0 %1730
        %1732 = vrot.lane.b32.xlu0 %v1719, 110
        %v1733 = vpop.permute.xlu0 %1732
        %1734 = vrot.lane.b32.xlu0 %v1715, 110
        %v1735 = vpop.permute.xlu0 %1734
        %1736 = vrot.lane.b32.xlu0 %v1716, 110
        %v1737 = vpop.permute.xlu0 %1736
        %1738 = vrot.lane.b32.xlu0 %v1714, 110
        %v1739 = vpop.permute.xlu0 %1738
        %v1740 = vsel %vm552, %v1729, %v1731
        %v1741 = vsel %vm552, %v1731, %v1733
        %v1742 = vsel %vm552, %v1735, %v1737
        %v1743 = vsel %vm552, %v1737, %v1739
        %v1748 = vsel %vm560, %v1721, 0
        %v1751 = vsel %vm560, %v1722, 0
        %v1754 = vsel %vm560, %v1723, 0
        %v1757 = vsel %vm560, %v1724, 0
        %v1759 = vsel %vm480, %v1742, 0
        %v1761 = vsel %vm480, %v1743, 0
        %v1763 = vsel %vm480, %v1739, 0
        %1765 = vmatpush.msra.mxu0 0.0
        %1766 = vmatpush.msra.mxu0 0.0
        %1767 = vmatpush.msra.mxu0 0.0
        %1768 = vmatpush.msra.mxu0 0.0
        %1769 = vmatpush.msra.mxu0 0.0
        %1770 = vmatpush.msra.mxu0 0.0
        %1771 = vmatpush.msra.mxu0 0.0
        %1772 = vmatpush.msra.mxu0 0.0
        %1773 = vmatpush.msra.mxu0 0.0
        %1774 = vmatpush.msra.mxu0 0.0
        %1775 = vmatpush.msra.mxu0 0.0
        %1776 = vmatpush.msra.mxu0 0.0
        %1777 = vmatpush.msra.mxu0 0.0
        %1778 = vmatpush.msra.mxu0 0.0
        %1779 = vmatpush.msra.mxu0 %v1759
        %1780 = vmatpush.msra.mxu0 %v1740
        %1781 = vmatmul.f32.gmra.mxu0 %v1748
        %v1782 = vpop.f32.mrf.mxu0
        %v1783 = vadd.f32 0.0, %v1782
        %1784 = vmatmul.f32.gmra.mxu0 %v1751
        %v1785 = vpop.f32.mrf.mxu0
        %v1786 = vadd.f32 0.0, %v1785
        %1787 = vmatmul.f32.gmra.mxu0 %v1754
        %v1788 = vpop.f32.mrf.mxu0
        %v1789 = vadd.f32 0.0, %v1788
        %1790 = vmatmul.f32.gmra.mxu0 %v1757
        %v1791 = vpop.f32.mrf.mxu0
        %v1792 = vadd.f32 0.0, %v1791
        %1793 = vdwg.mxu0
        %1794 = vmatpush.msra.mxu0 0.0
        %1795 = vmatpush.msra.mxu0 0.0
        %1796 = vmatpush.msra.mxu0 0.0
        %1797 = vmatpush.msra.mxu0 0.0
        %1798 = vmatpush.msra.mxu0 0.0
        %1799 = vmatpush.msra.mxu0 0.0
        %1800 = vmatpush.msra.mxu0 0.0
        %1801 = vmatpush.msra.mxu0 0.0
        %1802 = vmatpush.msra.mxu0 0.0
        %1803 = vmatpush.msra.mxu0 0.0
        %1804 = vmatpush.msra.mxu0 0.0
        %1805 = vmatpush.msra.mxu0 0.0
        %1806 = vmatpush.msra.mxu0 0.0
        %1807 = vmatpush.msra.mxu0 0.0
        %1808 = vmatpush.msra.mxu0 %v1761
        %1809 = vmatpush.msra.mxu0 %v1741
        %1810 = vmatmul.f32.gmra.mxu0 %v1748
        %v1811 = vpop.f32.mrf.mxu0
        %v1812 = vadd.f32 0.0, %v1811
        %1813 = vmatmul.f32.gmra.mxu0 %v1751
        %v1814 = vpop.f32.mrf.mxu0
        %v1815 = vadd.f32 0.0, %v1814
        %1816 = vmatmul.f32.gmra.mxu0 %v1754
        %v1817 = vpop.f32.mrf.mxu0
        %v1818 = vadd.f32 0.0, %v1817
        %1819 = vmatmul.f32.gmra.mxu0 %v1757
        %v1820 = vpop.f32.mrf.mxu0
        %v1821 = vadd.f32 0.0, %v1820
        %1822 = vdwg.mxu0
        %1823 = vmatpush.msra.mxu0 0.0
        %1824 = vmatpush.msra.mxu0 0.0
        %1825 = vmatpush.msra.mxu0 0.0
        %1826 = vmatpush.msra.mxu0 0.0
        %1827 = vmatpush.msra.mxu0 0.0
        %1828 = vmatpush.msra.mxu0 0.0
        %1829 = vmatpush.msra.mxu0 0.0
        %1830 = vmatpush.msra.mxu0 0.0
        %1831 = vmatpush.msra.mxu0 0.0
        %1832 = vmatpush.msra.mxu0 0.0
        %1833 = vmatpush.msra.mxu0 0.0
        %1834 = vmatpush.msra.mxu0 0.0
        %1835 = vmatpush.msra.mxu0 0.0
        %1836 = vmatpush.msra.mxu0 0.0
        %1837 = vmatpush.msra.mxu0 %v1763
        %1838 = vmatpush.msra.mxu0 %v1733
        %1839 = vmatmul.f32.gmra.mxu0 %v1748
        %v1840 = vpop.f32.mrf.mxu0
        %v1841 = vadd.f32 0.0, %v1840
        %1842 = vmatmul.f32.gmra.mxu0 %v1751
        %v1843 = vpop.f32.mrf.mxu0
        %v1844 = vadd.f32 0.0, %v1843
        %1845 = vmatmul.f32.gmra.mxu0 %v1754
        %v1846 = vpop.f32.mrf.mxu0
        %v1847 = vadd.f32 0.0, %v1846
        %1848 = vmatmul.f32.gmra.mxu0 %v1757
        %v1849 = vpop.f32.mrf.mxu0
        %v1850 = vadd.f32 0.0, %v1849
        %1851 = vdwg.mxu0
        %v1852 = vadd.f32 %v1664, %v1783
        %v1853 = vadd.f32 %v1665, %v1812
        %v1854 = vadd.f32 %v1666, %v1841
        %v1855 = vadd.f32 %v1667, %v1786
        %v1856 = vadd.f32 %v1668, %v1815
        %v1857 = vadd.f32 %v1669, %v1844
        %v1858 = vadd.f32 %v1670, %v1789
        %v1859 = vadd.f32 %v1671, %v1818
        %v1860 = vadd.f32 %v1672, %v1847
        %v1861 = vadd.f32 %v1673, %v1792
        %v1862 = vadd.f32 %v1674, %v1821
        %v1863 = vadd.f32 %v1675, %v1850
        %1864 = vst [vmem:[#allocation1] ss:$2 sm:$0xff] %v1506
        %s1865 = scalar_lea.vmem [#allocation1], 16
        %1866 = vst [vmem:[%s1865] ss:$2 sm:$0xff] %v1507
        %v1867 = vld.sshfl [vmem:[#allocation1] sm:$0xff pattern:$0x75316420]
        %v1868 = vld.sshfl [vmem:[#allocation1 + $0x8] sm:$0xff pattern:$0x75316420]
        %v1869 = vld.sshfl [vmem:[#allocation1 + $0x10] sm:$0xff pattern:$0x75316420]
        %s1873 = scalar_lea.vmem [#allocation1], 1
        %1874 = vst [vmem:[%s1873] ss:$2 sm:$0xff] %v1506
        %s1875 = scalar_lea.vmem [#allocation1], 17
        %1876 = vst [vmem:[%s1875] ss:$2 sm:$0xff] %v1507
        %v1877 = vld.sshfl [vmem:[#allocation1] sm:$0xff pattern:$0x75316420]
        %v1878 = vld.sshfl [vmem:[#allocation1 + $0x8] sm:$0xff pattern:$0x75316420]
        %v1879 = vld.sshfl [vmem:[#allocation1 + $0x10] sm:$0xff pattern:$0x75316420]
        %1880 = vrot.lane.b32.xlu0 %v1877, 127
        %v1881 = vpop.permute.xlu0 %1880
        %1882 = vrot.lane.b32.xlu0 %v1878, 127
        %v1883 = vpop.permute.xlu0 %1882
        %1884 = vrot.lane.b32.xlu0 %v1879, 127
        %v1885 = vpop.permute.xlu0 %1884
        %v1886 = vsel %vm459, %v1881, %v1883
        %v1887 = vsel %vm459, %v1883, %v1885
        %1891 = vst [vmem:[#allocation1] ss:$2 sm:$0xff] %v1506
        %s1892 = scalar_lea.vmem [#allocation1], 16
        %1893 = vst [vmem:[%s1892] ss:$2 sm:$0xff] %v1507
        %v1894 = vld.sshfl [vmem:[#allocation1] sm:$0xff pattern:$0x75316420]
        %v1895 = vld.sshfl [vmem:[#allocation1 + $0x8] sm:$0xff pattern:$0x75316420]
        %v1896 = vld.sshfl [vmem:[#allocation1 + $0x10] sm:$0xff pattern:$0x75316420]
        %1897 = vrot.lane.b32.xlu0 %v1894, 126
        %v1898 = vpop.permute.xlu0 %1897
        %1899 = vrot.lane.b32.xlu0 %v1895, 126
        %v1900 = vpop.permute.xlu0 %1899
        %1901 = vrot.lane.b32.xlu0 %v1896, 126
        %v1902 = vpop.permute.xlu0 %1901
        %v1903 = vsel %vm477, %v1898, %v1900
        %v1904 = vsel %vm477, %v1900, %v1902
        %v1905 = vsel %vm480, %v1867, %v1886
        %v1906 = vsel %vm480, %v1868, %v1887
        %v1907 = vsel %vm480, %v1869, %v1885
        %s1908 = scalar_lea.vmem %s3, 256
        %v1909 = vld [vmem:[%s1908] sm:$0xff]
        %v1910 = vld [vmem:[%s1908 + $0x8] sm:$0xff]
        %v1911 = vld [vmem:[%s1908 + $0x10] sm:$0xff]
        %v1912 = vld [vmem:[%s1908 + $0x18] sm:$0xff]
        %1916 = vrot.lane.b32.xlu0 %v1905, 92
        %v1917 = vpop.permute.xlu0 %1916
        %1918 = vrot.lane.b32.xlu0 %v1906, 92
        %v1919 = vpop.permute.xlu0 %1918
        %1920 = vrot.lane.b32.xlu0 %v1907, 92
        %v1921 = vpop.permute.xlu0 %1920
        %1922 = vrot.lane.b32.xlu0 %v1903, 92
        %v1923 = vpop.permute.xlu0 %1922
        %1924 = vrot.lane.b32.xlu0 %v1904, 92
        %v1925 = vpop.permute.xlu0 %1924
        %1926 = vrot.lane.b32.xlu0 %v1902, 92
        %v1927 = vpop.permute.xlu0 %1926
        %v1928 = vsel %vm835, %v1917, %v1919
        %v1929 = vsel %vm835, %v1919, %v1921
        %v1930 = vsel %vm835, %v1923, %v1925
        %v1931 = vsel %vm835, %v1925, %v1927
        %v1936 = vsel %vm560, %v1909, 0
        %v1939 = vsel %vm560, %v1910, 0
        %v1942 = vsel %vm560, %v1911, 0
        %v1945 = vsel %vm560, %v1912, 0
        %v1947 = vsel %vm480, %v1930, 0
        %v1949 = vsel %vm480, %v1931, 0
        %v1951 = vsel %vm480, %v1927, 0
        %1953 = vmatpush.msra.mxu0 0.0
        %1954 = vmatpush.msra.mxu0 0.0
        %1955 = vmatpush.msra.mxu0 0.0
        %1956 = vmatpush.msra.mxu0 0.0
        %1957 = vmatpush.msra.mxu0 0.0
        %1958 = vmatpush.msra.mxu0 0.0
        %1959 = vmatpush.msra.mxu0 0.0
        %1960 = vmatpush.msra.mxu0 0.0
        %1961 = vmatpush.msra.mxu0 0.0
        %1962 = vmatpush.msra.mxu0 0.0
        %1963 = vmatpush.msra.mxu0 0.0
        %1964 = vmatpush.msra.mxu0 0.0
        %1965 = vmatpush.msra.mxu0 0.0
        %1966 = vmatpush.msra.mxu0 0.0
        %1967 = vmatpush.msra.mxu0 %v1947
        %1968 = vmatpush.msra.mxu0 %v1928
        %1969 = vmatmul.f32.gmra.mxu0 %v1936
        %v1970 = vpop.f32.mrf.mxu0
        %v1971 = vadd.f32 0.0, %v1970
        %1972 = vmatmul.f32.gmra.mxu0 %v1939
        %v1973 = vpop.f32.mrf.mxu0
        %v1974 = vadd.f32 0.0, %v1973
        %1975 = vmatmul.f32.gmra.mxu0 %v1942
        %v1976 = vpop.f32.mrf.mxu0
        %v1977 = vadd.f32 0.0, %v1976
        %1978 = vmatmul.f32.gmra.mxu0 %v1945
        %v1979 = vpop.f32.mrf.mxu0
        %v1980 = vadd.f32 0.0, %v1979
        %1981 = vdwg.mxu0
        %1982 = vmatpush.msra.mxu0 0.0
        %1983 = vmatpush.msra.mxu0 0.0
        %1984 = vmatpush.msra.mxu0 0.0
        %1985 = vmatpush.msra.mxu0 0.0
        %1986 = vmatpush.msra.mxu0 0.0
        %1987 = vmatpush.msra.mxu0 0.0
        %1988 = vmatpush.msra.mxu0 0.0
        %1989 = vmatpush.msra.mxu0 0.0
        %1990 = vmatpush.msra.mxu0 0.0
        %1991 = vmatpush.msra.mxu0 0.0
        %1992 = vmatpush.msra.mxu0 0.0
        %1993 = vmatpush.msra.mxu0 0.0
        %1994 = vmatpush.msra.mxu0 0.0
        %1995 = vmatpush.msra.mxu0 0.0
        %1996 = vmatpush.msra.mxu0 %v1949
        %1997 = vmatpush.msra.mxu0 %v1929
        %1998 = vmatmul.f32.gmra.mxu0 %v1936
        %v1999 = vpop.f32.mrf.mxu0
        %v2000 = vadd.f32 0.0, %v1999
        %2001 = vmatmul.f32.gmra.mxu0 %v1939
        %v2002 = vpop.f32.mrf.mxu0
        %v2003 = vadd.f32 0.0, %v2002
        %2004 = vmatmul.f32.gmra.mxu0 %v1942
        %v2005 = vpop.f32.mrf.mxu0
        %v2006 = vadd.f32 0.0, %v2005
        %2007 = vmatmul.f32.gmra.mxu0 %v1945
        %v2008 = vpop.f32.mrf.mxu0
        %v2009 = vadd.f32 0.0, %v2008
        %2010 = vdwg.mxu0
        %2011 = vmatpush.msra.mxu0 0.0
        %2012 = vmatpush.msra.mxu0 0.0
        %2013 = vmatpush.msra.mxu0 0.0
        %2014 = vmatpush.msra.mxu0 0.0
        %2015 = vmatpush.msra.mxu0 0.0
        %2016 = vmatpush.msra.mxu0 0.0
        %2017 = vmatpush.msra.mxu0 0.0
        %2018 = vmatpush.msra.mxu0 0.0
        %2019 = vmatpush.msra.mxu0 0.0
        %2020 = vmatpush.msra.mxu0 0.0
        %2021 = vmatpush.msra.mxu0 0.0
        %2022 = vmatpush.msra.mxu0 0.0
        %2023 = vmatpush.msra.mxu0 0.0
        %2024 = vmatpush.msra.mxu0 0.0
        %2025 = vmatpush.msra.mxu0 %v1951
        %2026 = vmatpush.msra.mxu0 %v1921
        %2027 = vmatmul.f32.gmra.mxu0 %v1936
        %v2028 = vpop.f32.mrf.mxu0
        %v2029 = vadd.f32 0.0, %v2028
        %2030 = vmatmul.f32.gmra.mxu0 %v1939
        %v2031 = vpop.f32.mrf.mxu0
        %v2032 = vadd.f32 0.0, %v2031
        %2033 = vmatmul.f32.gmra.mxu0 %v1942
        %v2034 = vpop.f32.mrf.mxu0
        %v2035 = vadd.f32 0.0, %v2034
        %2036 = vmatmul.f32.gmra.mxu0 %v1945
        %v2037 = vpop.f32.mrf.mxu0
        %v2038 = vadd.f32 0.0, %v2037
        %2039 = vdwg.mxu0
        %v2040 = vadd.f32 %v1852, %v1971
        %v2041 = vadd.f32 %v1853, %v2000
        %v2042 = vadd.f32 %v1854, %v2029
        %v2043 = vadd.f32 %v1855, %v1974
        %v2044 = vadd.f32 %v1856, %v2003
        %v2045 = vadd.f32 %v1857, %v2032
        %v2046 = vadd.f32 %v1858, %v1977
        %v2047 = vadd.f32 %v1859, %v2006
        %v2048 = vadd.f32 %v1860, %v2035
        %v2049 = vadd.f32 %v1861, %v1980
        %v2050 = vadd.f32 %v1862, %v2009
        %v2051 = vadd.f32 %v1863, %v2038
        %2053 = vset.pattern.permute.xlu0 0
        %2054 = vperm.xlu0 %2053, %v425
        %v2055 = vpop.permute.xlu0 %2054
        %2058 = vset.pattern.permute.xlu0 0
        %2059 = vperm.xlu0 %2058, %v426
        %v2060 = vpop.permute.xlu0 %2059
        %2063 = vset.pattern.permute.xlu0 0
        %2064 = vperm.xlu0 %2063, %v427
        %v2065 = vpop.permute.xlu0 %2064
        %2068 = vset.pattern.permute.xlu0 0
        %2069 = vperm.xlu0 %2068, %v428
        %v2070 = vpop.permute.xlu0 %2069
        %v2072 = vmul.f32 %v2040, %v2055
        %v2073 = vmul.f32 %v2041, %v2055
        %v2074 = vmul.f32 %v2042, %v2055
        %v2075 = vmul.f32 %v2043, %v2060
        %v2076 = vmul.f32 %v2044, %v2060
        %v2077 = vmul.f32 %v2045, %v2060
        %v2078 = vmul.f32 %v2046, %v2065
        %v2079 = vmul.f32 %v2047, %v2065
        %v2080 = vmul.f32 %v2048, %v2065
        %v2081 = vmul.f32 %v2049, %v2070
        %v2082 = vmul.f32 %v2050, %v2070
        %v2083 = vmul.f32 %v2051, %v2070
        %2085 = vset.pattern.permute.xlu0 0
        %2086 = vperm.xlu0 %2085, %v429
        %v2087 = vpop.permute.xlu0 %2086
        %2090 = vset.pattern.permute.xlu0 0
        %2091 = vperm.xlu0 %2090, %v430
        %v2092 = vpop.permute.xlu0 %2091
        %2095 = vset.pattern.permute.xlu0 0
        %2096 = vperm.xlu0 %2095, %v431
        %v2097 = vpop.permute.xlu0 %2096
        %2100 = vset.pattern.permute.xlu0 0
        %2101 = vperm.xlu0 %2100, %v432
        %v2102 = vpop.permute.xlu0 %2101
        %v2104 = vadd.f32 %v2072, %v2087
        %v2105 = vadd.f32 %v2073, %v2087
        %v2106 = vadd.f32 %v2074, %v2087
        %v2107 = vadd.f32 %v2075, %v2092
        %v2108 = vadd.f32 %v2076, %v2092
        %v2109 = vadd.f32 %v2077, %v2092
        %v2110 = vadd.f32 %v2078, %v2097
        %v2111 = vadd.f32 %v2079, %v2097
        %v2112 = vadd.f32 %v2080, %v2097
        %v2113 = vadd.f32 %v2081, %v2102
        %v2114 = vadd.f32 %v2082, %v2102
        %v2115 = vadd.f32 %v2083, %v2102
        %v2116 = vmax.f32 %v2104, 0.0
        %v2117 = vmax.f32 %v2105, 0.0
        %v2118 = vmax.f32 %v2106, 0.0
        %v2119 = vmax.f32 %v2107, 0.0
        %v2120 = vmax.f32 %v2108, 0.0
        %v2121 = vmax.f32 %v2109, 0.0
        %v2122 = vmax.f32 %v2110, 0.0
        %v2123 = vmax.f32 %v2111, 0.0
        %v2124 = vmax.f32 %v2112, 0.0
        %v2125 = vmax.f32 %v2113, 0.0
        %v2126 = vmax.f32 %v2114, 0.0
        %v2127 = vmax.f32 %v2115, 0.0
        %2128 = vst [vmem:[%s418] sm:$0xff] %v2116
        %2129 = vst [vmem:[%s418 + $0x8] sm:$0xff] %v2117
        %vm2130 = vcmask 261120
        %2131 = vst.msk [vmem:[%s418 + $0x10] sm:$0xff] %vm2130, %v2118
        %2132 = vst [vmem:[%s418 + $0x18] sm:$0xff] %v2119
        %2133 = vst [vmem:[%s418 + $0x20] sm:$0xff] %v2120
        %2134 = vst.msk [vmem:[%s418 + $0x28] sm:$0xff] %vm2130, %v2121
        %2135 = vst [vmem:[%s418 + $0x30] sm:$0xff] %v2122
        %2136 = vst [vmem:[%s418 + $0x38] sm:$0xff] %v2123
        %2137 = vst.msk [vmem:[%s418 + $0x40] sm:$0xff] %vm2130, %v2124
        %2138 = vst [vmem:[%s418 + $0x48] sm:$0xff] %v2125
        %2139 = vst [vmem:[%s418 + $0x50] sm:$0xff] %v2126
        %2140 = vst.msk [vmem:[%s418 + $0x58] sm:$0xff] %vm2130, %v2127
        %s2141 = scalar_lea.vmem %s366, 12 [#allocation2]
        %v2142 = vld [vmem:[%s2141] sm:$0xff]
        %v2143 = vld [vmem:[%s2141 + $0x8] sm:$0xf]
        %2146 = vst [vmem:[#allocation1] ss:$2 sm:$0xff] %v2142
        %s2147 = scalar_lea.vmem [#allocation1], 16
        %2148 = vst [vmem:[%s2147] ss:$2 sm:$0xff] %v2143
        %v2149 = vld.sshfl [vmem:[#allocation1] sm:$0xff pattern:$0x75316420]
        %v2150 = vld.sshfl [vmem:[#allocation1 + $0x8] sm:$0xff pattern:$0x75316420]
        %v2151 = vld.sshfl [vmem:[#allocation1 + $0x10] sm:$0xff pattern:$0x75316420]
        %s2155 = scalar_lea.vmem [#allocation1], 1
        %2156 = vst [vmem:[%s2155] ss:$2 sm:$0xff] %v2142
        %s2157 = scalar_lea.vmem [#allocation1], 17
        %2158 = vst [vmem:[%s2157] ss:$2 sm:$0xff] %v2143
        %v2159 = vld.sshfl [vmem:[#allocation1] sm:$0xff pattern:$0x75316420]
        %v2160 = vld.sshfl [vmem:[#allocation1 + $0x8] sm:$0xff pattern:$0x75316420]
        %v2161 = vld.sshfl [vmem:[#allocation1 + $0x10] sm:$0xff pattern:$0x75316420]
        %2162 = vrot.lane.b32.xlu0 %v2159, 127
        %v2163 = vpop.permute.xlu0 %2162
        %2164 = vrot.lane.b32.xlu0 %v2160, 127
        %v2165 = vpop.permute.xlu0 %2164
        %2166 = vrot.lane.b32.xlu0 %v2161, 127
        %v2167 = vpop.permute.xlu0 %2166
        %v2168 = vsel %vm459, %v2163, %v2165
        %v2169 = vsel %vm459, %v2165, %v2167
        %2173 = vst [vmem:[#allocation1] ss:$2 sm:$0xff] %v2142
        %s2174 = scalar_lea.vmem [#allocation1], 16
        %2175 = vst [vmem:[%s2174] ss:$2 sm:$0xff] %v2143
        %v2176 = vld.sshfl [vmem:[#allocation1] sm:$0xff pattern:$0x75316420]
        %v2177 = vld.sshfl [vmem:[#allocation1 + $0x8] sm:$0xff pattern:$0x75316420]
        %v2178 = vld.sshfl [vmem:[#allocation1 + $0x10] sm:$0xff pattern:$0x75316420]
        %2179 = vrot.lane.b32.xlu0 %v2176, 126
        %v2180 = vpop.permute.xlu0 %2179
        %2181 = vrot.lane.b32.xlu0 %v2177, 126
        %v2182 = vpop.permute.xlu0 %2181
        %2183 = vrot.lane.b32.xlu0 %v2178, 126
        %v2184 = vpop.permute.xlu0 %2183
        %v2185 = vsel %vm477, %v2180, %v2182
        %v2186 = vsel %vm477, %v2182, %v2184
        %v2187 = vsel %vm480, %v2149, %v2168
        %v2188 = vsel %vm480, %v2150, %v2169
        %v2189 = vsel %vm480, %v2151, %v2167
        %v2190 = vld [vmem:[%s3] sm:$0xff]
        %v2191 = vld [vmem:[%s3 + $0x8] sm:$0xff]
        %v2192 = vld [vmem:[%s3 + $0x10] sm:$0xff]
        %v2193 = vld [vmem:[%s3 + $0x18] sm:$0xff]
        %2194 = vst [vmem:[#allocation1] ss:$2 sm:$0xff] %v2142
        %s2195 = scalar_lea.vmem [#allocation1], 16
        %2196 = vst [vmem:[%s2195] ss:$2 sm:$0xff] %v2143
        %v2197 = vld.sshfl [vmem:[#allocation1] sm:$0xff pattern:$0x75316420]
        %v2198 = vld.sshfl [vmem:[#allocation1 + $0x8] sm:$0xff pattern:$0x75316420]
        %v2199 = vld.sshfl [vmem:[#allocation1 + $0x10] sm:$0xff pattern:$0x75316420]
        %s2203 = scalar_lea.vmem [#allocation1], 1
        %2204 = vst [vmem:[%s2203] ss:$2 sm:$0xff] %v2142
        %s2205 = scalar_lea.vmem [#allocation1], 17
        %2206 = vst [vmem:[%s2205] ss:$2 sm:$0xff] %v2143
        %v2207 = vld.sshfl [vmem:[#allocation1] sm:$0xff pattern:$0x75316420]
        %v2208 = vld.sshfl [vmem:[#allocation1 + $0x8] sm:$0xff pattern:$0x75316420]
        %v2209 = vld.sshfl [vmem:[#allocation1 + $0x10] sm:$0xff pattern:$0x75316420]
        %2210 = vrot.lane.b32.xlu0 %v2207, 127
        %v2211 = vpop.permute.xlu0 %2210
        %2212 = vrot.lane.b32.xlu0 %v2208, 127
        %v2213 = vpop.permute.xlu0 %2212
        %2214 = vrot.lane.b32.xlu0 %v2209, 127
        %v2215 = vpop.permute.xlu0 %2214
        %v2216 = vsel %vm459, %v2211, %v2213
        %v2217 = vsel %vm459, %v2213, %v2215
        %2221 = vst [vmem:[#allocation1] ss:$2 sm:$0xff] %v2142
        %s2222 = scalar_lea.vmem [#allocation1], 16
        %2223 = vst [vmem:[%s2222] ss:$2 sm:$0xff] %v2143
        %v2224 = vld.sshfl [vmem:[#allocation1] sm:$0xff pattern:$0x75316420]
        %v2225 = vld.sshfl [vmem:[#allocation1 + $0x8] sm:$0xff pattern:$0x75316420]
        %v2226 = vld.sshfl [vmem:[#allocation1 + $0x10] sm:$0xff pattern:$0x75316420]
        %2227 = vrot.lane.b32.xlu0 %v2224, 126
        %v2228 = vpop.permute.xlu0 %2227
        %2229 = vrot.lane.b32.xlu0 %v2225, 126
        %v2230 = vpop.permute.xlu0 %2229
        %2231 = vrot.lane.b32.xlu0 %v2226, 126
        %v2232 = vpop.permute.xlu0 %2231
        %v2233 = vsel %vm477, %v2228, %v2230
        %v2234 = vsel %vm477, %v2230, %v2232
        %v2235 = vsel %vm480, %v2197, %v2216
        %v2236 = vsel %vm480, %v2198, %v2217
        %v2237 = vsel %vm480, %v2199, %v2215
        %v2238 = vld [vmem:[%s532] sm:$0xff]
        %v2239 = vld [vmem:[%s532 + $0x8] sm:$0xff]
        %v2240 = vld [vmem:[%s532 + $0x10] sm:$0xff]
        %v2241 = vld [vmem:[%s532 + $0x18] sm:$0xff]
        %2245 = vrot.lane.b32.xlu0 %v2235, 110
        %v2246 = vpop.permute.xlu0 %2245
        %2247 = vrot.lane.b32.xlu0 %v2236, 110
        %v2248 = vpop.permute.xlu0 %2247
        %2249 = vrot.lane.b32.xlu0 %v2237, 110
        %v2250 = vpop.permute.xlu0 %2249
        %2251 = vrot.lane.b32.xlu0 %v2233, 110
        %v2252 = vpop.permute.xlu0 %2251
        %2253 = vrot.lane.b32.xlu0 %v2234, 110
        %v2254 = vpop.permute.xlu0 %2253
        %2255 = vrot.lane.b32.xlu0 %v2232, 110
        %v2256 = vpop.permute.xlu0 %2255
        %v2257 = vsel %vm552, %v2246, %v2248
        %v2258 = vsel %vm552, %v2248, %v2250
        %v2259 = vsel %vm552, %v2252, %v2254
        %v2260 = vsel %vm552, %v2254, %v2256
        %v2265 = vsel %vm560, %v2238, 0
        %v2268 = vsel %vm560, %v2239, 0
        %v2271 = vsel %vm560, %v2240, 0
        %v2274 = vsel %vm560, %v2241, 0
        %v2276 = vsel %vm480, %v2259, 0
        %v2278 = vsel %vm480, %v2260, 0
        %v2280 = vsel %vm480, %v2256, 0
        %2282 = vmatpush.msra.mxu0 0.0
        %2283 = vmatpush.msra.mxu0 0.0
        %2284 = vmatpush.msra.mxu0 0.0
        %2285 = vmatpush.msra.mxu0 0.0
        %2286 = vmatpush.msra.mxu0 0.0
        %2287 = vmatpush.msra.mxu0 0.0
        %2288 = vmatpush.msra.mxu0 0.0
        %2289 = vmatpush.msra.mxu0 0.0
        %2290 = vmatpush.msra.mxu0 0.0
        %2291 = vmatpush.msra.mxu0 0.0
        %2292 = vmatpush.msra.mxu0 0.0
        %2293 = vmatpush.msra.mxu0 0.0
        %2294 = vmatpush.msra.mxu0 0.0
        %2295 = vmatpush.msra.mxu0 0.0
        %2296 = vmatpush.msra.mxu0 %v2276
        %2297 = vmatpush.msra.mxu0 %v2257
        %2298 = vmatmul.f32.gmra.mxu0 %v2265
        %v2299 = vpop.f32.mrf.mxu0
        %v2300 = vadd.f32 0.0, %v2299
        %2301 = vmatmul.f32.gmra.mxu0 %v2268
        %v2302 = vpop.f32.mrf.mxu0
        %v2303 = vadd.f32 0.0, %v2302
        %2304 = vmatmul.f32.gmra.mxu0 %v2271
        %v2305 = vpop.f32.mrf.mxu0
        %v2306 = vadd.f32 0.0, %v2305
        %2307 = vmatmul.f32.gmra.mxu0 %v2274
        %v2308 = vpop.f32.mrf.mxu0
        %v2309 = vadd.f32 0.0, %v2308
        %2310 = vdwg.mxu0
        %2311 = vmatpush.msra.mxu0 0.0
        %2312 = vmatpush.msra.mxu0 0.0
        %2313 = vmatpush.msra.mxu0 0.0
        %2314 = vmatpush.msra.mxu0 0.0
        %2315 = vmatpush.msra.mxu0 0.0
        %2316 = vmatpush.msra.mxu0 0.0
        %2317 = vmatpush.msra.mxu0 0.0
        %2318 = vmatpush.msra.mxu0 0.0
        %2319 = vmatpush.msra.mxu0 0.0
        %2320 = vmatpush.msra.mxu0 0.0
        %2321 = vmatpush.msra.mxu0 0.0
        %2322 = vmatpush.msra.mxu0 0.0
        %2323 = vmatpush.msra.mxu0 0.0
        %2324 = vmatpush.msra.mxu0 0.0
        %2325 = vmatpush.msra.mxu0 %v2278
        %2326 = vmatpush.msra.mxu0 %v2258
        %2327 = vmatmul.f32.gmra.mxu0 %v2265
        %v2328 = vpop.f32.mrf.mxu0
        %v2329 = vadd.f32 0.0, %v2328
        %2330 = vmatmul.f32.gmra.mxu0 %v2268
        %v2331 = vpop.f32.mrf.mxu0
        %v2332 = vadd.f32 0.0, %v2331
        %2333 = vmatmul.f32.gmra.mxu0 %v2271
        %v2334 = vpop.f32.mrf.mxu0
        %v2335 = vadd.f32 0.0, %v2334
        %2336 = vmatmul.f32.gmra.mxu0 %v2274
        %v2337 = vpop.f32.mrf.mxu0
        %v2338 = vadd.f32 0.0, %v2337
        %2339 = vdwg.mxu0
        %2340 = vmatpush.msra.mxu0 0.0
        %2341 = vmatpush.msra.mxu0 0.0
        %2342 = vmatpush.msra.mxu0 0.0
        %2343 = vmatpush.msra.mxu0 0.0
        %2344 = vmatpush.msra.mxu0 0.0
        %2345 = vmatpush.msra.mxu0 0.0
        %2346 = vmatpush.msra.mxu0 0.0
        %2347 = vmatpush.msra.mxu0 0.0
        %2348 = vmatpush.msra.mxu0 0.0
        %2349 = vmatpush.msra.mxu0 0.0
        %2350 = vmatpush.msra.mxu0 0.0
        %2351 = vmatpush.msra.mxu0 0.0
        %2352 = vmatpush.msra.mxu0 0.0
        %2353 = vmatpush.msra.mxu0 0.0
        %2354 = vmatpush.msra.mxu0 %v2280
        %2355 = vmatpush.msra.mxu0 %v2250
        %2356 = vmatmul.f32.gmra.mxu0 %v2265
        %v2357 = vpop.f32.mrf.mxu0
        %v2358 = vadd.f32 0.0, %v2357
        %2359 = vmatmul.f32.gmra.mxu0 %v2268
        %v2360 = vpop.f32.mrf.mxu0
        %v2361 = vadd.f32 0.0, %v2360
        %2362 = vmatmul.f32.gmra.mxu0 %v2271
        %v2363 = vpop.f32.mrf.mxu0
        %v2364 = vadd.f32 0.0, %v2363
        %2365 = vmatmul.f32.gmra.mxu0 %v2274
        %v2366 = vpop.f32.mrf.mxu0
        %v2367 = vadd.f32 0.0, %v2366
        %2368 = vdwg.mxu0
        %v2370 = vsel %vm560, %v2190, 0
        %v2373 = vsel %vm560, %v2191, 0
        %v2376 = vsel %vm560, %v2192, 0
        %v2379 = vsel %vm560, %v2193, 0
        %v2381 = vsel %vm480, %v2185, 0
        %v2383 = vsel %vm480, %v2186, 0
        %v2385 = vsel %vm480, %v2184, 0
        %2387 = vmatpush.msra.mxu0 0.0
        %2388 = vmatpush.msra.mxu0 0.0
        %2389 = vmatpush.msra.mxu0 0.0
        %2390 = vmatpush.msra.mxu0 0.0
        %2391 = vmatpush.msra.mxu0 0.0
        %2392 = vmatpush.msra.mxu0 0.0
        %2393 = vmatpush.msra.mxu0 0.0
        %2394 = vmatpush.msra.mxu0 0.0
        %2395 = vmatpush.msra.mxu0 0.0
        %2396 = vmatpush.msra.mxu0 0.0
        %2397 = vmatpush.msra.mxu0 0.0
        %2398 = vmatpush.msra.mxu0 0.0
        %2399 = vmatpush.msra.mxu0 0.0
        %2400 = vmatpush.msra.mxu0 0.0
        %2401 = vmatpush.msra.mxu0 %v2381
        %2402 = vmatpush.msra.mxu0 %v2187
        %2403 = vmatmul.f32.gmra.mxu0 %v2370
        %v2404 = vpop.f32.mrf.mxu0
        %v2405 = vadd.f32 %v2300, %v2404
        %2406 = vmatmul.f32.gmra.mxu0 %v2373
        %v2407 = vpop.f32.mrf.mxu0
        %v2408 = vadd.f32 %v2303, %v2407
        %2409 = vmatmul.f32.gmra.mxu0 %v2376
        %v2410 = vpop.f32.mrf.mxu0
        %v2411 = vadd.f32 %v2306, %v2410
        %2412 = vmatmul.f32.gmra.mxu0 %v2379
        %v2413 = vpop.f32.mrf.mxu0
        %v2414 = vadd.f32 %v2309, %v2413
        %2415 = vdwg.mxu0
        %2416 = vmatpush.msra.mxu0 0.0
        %2417 = vmatpush.msra.mxu0 0.0
        %2418 = vmatpush.msra.mxu0 0.0
        %2419 = vmatpush.msra.mxu0 0.0
        %2420 = vmatpush.msra.mxu0 0.0
        %2421 = vmatpush.msra.mxu0 0.0
        %2422 = vmatpush.msra.mxu0 0.0
        %2423 = vmatpush.msra.mxu0 0.0
        %2424 = vmatpush.msra.mxu0 0.0
        %2425 = vmatpush.msra.mxu0 0.0
        %2426 = vmatpush.msra.mxu0 0.0
        %2427 = vmatpush.msra.mxu0 0.0
        %2428 = vmatpush.msra.mxu0 0.0
        %2429 = vmatpush.msra.mxu0 0.0
        %2430 = vmatpush.msra.mxu0 %v2383
        %2431 = vmatpush.msra.mxu0 %v2188
        %2432 = vmatmul.f32.gmra.mxu0 %v2370
        %v2433 = vpop.f32.mrf.mxu0
        %v2434 = vadd.f32 %v2329, %v2433
        %2435 = vmatmul.f32.gmra.mxu0 %v2373
        %v2436 = vpop.f32.mrf.mxu0
        %v2437 = vadd.f32 %v2332, %v2436
        %2438 = vmatmul.f32.gmra.mxu0 %v2376
        %v2439 = vpop.f32.mrf.mxu0
        %v2440 = vadd.f32 %v2335, %v2439
        %2441 = vmatmul.f32.gmra.mxu0 %v2379
        %v2442 = vpop.f32.mrf.mxu0
        %v2443 = vadd.f32 %v2338, %v2442
        %2444 = vdwg.mxu0
        %2445 = vmatpush.msra.mxu0 0.0
        %2446 = vmatpush.msra.mxu0 0.0
        %2447 = vmatpush.msra.mxu0 0.0
        %2448 = vmatpush.msra.mxu0 0.0
        %2449 = vmatpush.msra.mxu0 0.0
        %2450 = vmatpush.msra.mxu0 0.0
        %2451 = vmatpush.msra.mxu0 0.0
        %2452 = vmatpush.msra.mxu0 0.0
        %2453 = vmatpush.msra.mxu0 0.0
        %2454 = vmatpush.msra.mxu0 0.0
        %2455 = vmatpush.msra.mxu0 0.0
        %2456 = vmatpush.msra.mxu0 0.0
        %2457 = vmatpush.msra.mxu0 0.0
        %2458 = vmatpush.msra.mxu0 0.0
        %2459 = vmatpush.msra.mxu0 %v2385
        %2460 = vmatpush.msra.mxu0 %v2189
        %2461 = vmatmul.f32.gmra.mxu0 %v2370
        %v2462 = vpop.f32.mrf.mxu0
        %v2463 = vadd.f32 %v2358, %v2462
        %2464 = vmatmul.f32.gmra.mxu0 %v2373
        %v2465 = vpop.f32.mrf.mxu0
        %v2466 = vadd.f32 %v2361, %v2465
        %2467 = vmatmul.f32.gmra.mxu0 %v2376
        %v2468 = vpop.f32.mrf.mxu0
        %v2469 = vadd.f32 %v2364, %v2468
        %2470 = vmatmul.f32.gmra.mxu0 %v2379
        %v2471 = vpop.f32.mrf.mxu0
        %v2472 = vadd.f32 %v2367, %v2471
        %2473 = vdwg.mxu0
        %2474 = vst [vmem:[#allocation1] ss:$2 sm:$0xff] %v2142
        %s2475 = scalar_lea.vmem [#allocation1], 16
        %2476 = vst [vmem:[%s2475] ss:$2 sm:$0xff] %v2143
        %v2477 = vld.sshfl [vmem:[#allocation1] sm:$0xff pattern:$0x75316420]
        %v2478 = vld.sshfl [vmem:[#allocation1 + $0x8] sm:$0xff pattern:$0x75316420]
        %v2479 = vld.sshfl [vmem:[#allocation1 + $0x10] sm:$0xff pattern:$0x75316420]
        %s2483 = scalar_lea.vmem [#allocation1], 1
        %2484 = vst [vmem:[%s2483] ss:$2 sm:$0xff] %v2142
        %s2485 = scalar_lea.vmem [#allocation1], 17
        %2486 = vst [vmem:[%s2485] ss:$2 sm:$0xff] %v2143
        %v2487 = vld.sshfl [vmem:[#allocation1] sm:$0xff pattern:$0x75316420]
        %v2488 = vld.sshfl [vmem:[#allocation1 + $0x8] sm:$0xff pattern:$0x75316420]
        %v2489 = vld.sshfl [vmem:[#allocation1 + $0x10] sm:$0xff pattern:$0x75316420]
        %2490 = vrot.lane.b32.xlu0 %v2487, 127
        %v2491 = vpop.permute.xlu0 %2490
        %2492 = vrot.lane.b32.xlu0 %v2488, 127
        %v2493 = vpop.permute.xlu0 %2492
        %2494 = vrot.lane.b32.xlu0 %v2489, 127
        %v2495 = vpop.permute.xlu0 %2494
        %v2496 = vsel %vm459, %v2491, %v2493
        %v2497 = vsel %vm459, %v2493, %v2495
        %2501 = vst [vmem:[#allocation1] ss:$2 sm:$0xff] %v2142
        %s2502 = scalar_lea.vmem [#allocation1], 16
        %2503 = vst [vmem:[%s2502] ss:$2 sm:$0xff] %v2143
        %v2504 = vld.sshfl [vmem:[#allocation1] sm:$0xff pattern:$0x75316420]
        %v2505 = vld.sshfl [vmem:[#allocation1 + $0x8] sm:$0xff pattern:$0x75316420]
        %v2506 = vld.sshfl [vmem:[#allocation1 + $0x10] sm:$0xff pattern:$0x75316420]
        %2507 = vrot.lane.b32.xlu0 %v2504, 126
        %v2508 = vpop.permute.xlu0 %2507
        %2509 = vrot.lane.b32.xlu0 %v2505, 126
        %v2510 = vpop.permute.xlu0 %2509
        %2511 = vrot.lane.b32.xlu0 %v2506, 126
        %v2512 = vpop.permute.xlu0 %2511
        %v2513 = vsel %vm477, %v2508, %v2510
        %v2514 = vsel %vm477, %v2510, %v2512
        %v2515 = vsel %vm480, %v2477, %v2496
        %v2516 = vsel %vm480, %v2478, %v2497
        %v2517 = vsel %vm480, %v2479, %v2495
        %v2518 = vld [vmem:[%s815] sm:$0xff]
        %v2519 = vld [vmem:[%s815 + $0x8] sm:$0xff]
        %v2520 = vld [vmem:[%s815 + $0x10] sm:$0xff]
        %v2521 = vld [vmem:[%s815 + $0x18] sm:$0xff]
        %2525 = vrot.lane.b32.xlu0 %v2515, 92
        %v2526 = vpop.permute.xlu0 %2525
        %2527 = vrot.lane.b32.xlu0 %v2516, 92
        %v2528 = vpop.permute.xlu0 %2527
        %2529 = vrot.lane.b32.xlu0 %v2517, 92
        %v2530 = vpop.permute.xlu0 %2529
        %2531 = vrot.lane.b32.xlu0 %v2513, 92
        %v2532 = vpop.permute.xlu0 %2531
        %2533 = vrot.lane.b32.xlu0 %v2514, 92
        %v2534 = vpop.permute.xlu0 %2533
        %2535 = vrot.lane.b32.xlu0 %v2512, 92
        %v2536 = vpop.permute.xlu0 %2535
        %v2537 = vsel %vm835, %v2526, %v2528
        %v2538 = vsel %vm835, %v2528, %v2530
        %v2539 = vsel %vm835, %v2532, %v2534
        %v2540 = vsel %vm835, %v2534, %v2536
        %v2545 = vsel %vm560, %v2518, 0
        %v2548 = vsel %vm560, %v2519, 0
        %v2551 = vsel %vm560, %v2520, 0
        %v2554 = vsel %vm560, %v2521, 0
        %v2556 = vsel %vm480, %v2539, 0
        %v2558 = vsel %vm480, %v2540, 0
        %v2560 = vsel %vm480, %v2536, 0
        %2562 = vmatpush.msra.mxu0 0.0
        %2563 = vmatpush.msra.mxu0 0.0
        %2564 = vmatpush.msra.mxu0 0.0
        %2565 = vmatpush.msra.mxu0 0.0
        %2566 = vmatpush.msra.mxu0 0.0
        %2567 = vmatpush.msra.mxu0 0.0
        %2568 = vmatpush.msra.mxu0 0.0
        %2569 = vmatpush.msra.mxu0 0.0
        %2570 = vmatpush.msra.mxu0 0.0
        %2571 = vmatpush.msra.mxu0 0.0
        %2572 = vmatpush.msra.mxu0 0.0
        %2573 = vmatpush.msra.mxu0 0.0
        %2574 = vmatpush.msra.mxu0 0.0
        %2575 = vmatpush.msra.mxu0 0.0
        %2576 = vmatpush.msra.mxu0 %v2556
        %2577 = vmatpush.msra.mxu0 %v2537
        %2578 = vmatmul.f32.gmra.mxu0 %v2545
        %v2579 = vpop.f32.mrf.mxu0
        %v2580 = vadd.f32 0.0, %v2579
        %2581 = vmatmul.f32.gmra.mxu0 %v2548
        %v2582 = vpop.f32.mrf.mxu0
        %v2583 = vadd.f32 0.0, %v2582
        %2584 = vmatmul.f32.gmra.mxu0 %v2551
        %v2585 = vpop.f32.mrf.mxu0
        %v2586 = vadd.f32 0.0, %v2585
        %2587 = vmatmul.f32.gmra.mxu0 %v2554
        %v2588 = vpop.f32.mrf.mxu0
        %v2589 = vadd.f32 0.0, %v2588
        %2590 = vdwg.mxu0
        %2591 = vmatpush.msra.mxu0 0.0
        %2592 = vmatpush.msra.mxu0 0.0
        %2593 = vmatpush.msra.mxu0 0.0
        %2594 = vmatpush.msra.mxu0 0.0
        %2595 = vmatpush.msra.mxu0 0.0
        %2596 = vmatpush.msra.mxu0 0.0
        %2597 = vmatpush.msra.mxu0 0.0
        %2598 = vmatpush.msra.mxu0 0.0
        %2599 = vmatpush.msra.mxu0 0.0
        %2600 = vmatpush.msra.mxu0 0.0
        %2601 = vmatpush.msra.mxu0 0.0
        %2602 = vmatpush.msra.mxu0 0.0
        %2603 = vmatpush.msra.mxu0 0.0
        %2604 = vmatpush.msra.mxu0 0.0
        %2605 = vmatpush.msra.mxu0 %v2558
        %2606 = vmatpush.msra.mxu0 %v2538
        %2607 = vmatmul.f32.gmra.mxu0 %v2545
        %v2608 = vpop.f32.mrf.mxu0
        %v2609 = vadd.f32 0.0, %v2608
        %2610 = vmatmul.f32.gmra.mxu0 %v2548
        %v2611 = vpop.f32.mrf.mxu0
        %v2612 = vadd.f32 0.0, %v2611
        %2613 = vmatmul.f32.gmra.mxu0 %v2551
        %v2614 = vpop.f32.mrf.mxu0
        %v2615 = vadd.f32 0.0, %v2614
        %2616 = vmatmul.f32.gmra.mxu0 %v2554
        %v2617 = vpop.f32.mrf.mxu0
        %v2618 = vadd.f32 0.0, %v2617
        %2619 = vdwg.mxu0
        %2620 = vmatpush.msra.mxu0 0.0
        %2621 = vmatpush.msra.mxu0 0.0
        %2622 = vmatpush.msra.mxu0 0.0
        %2623 = vmatpush.msra.mxu0 0.0
        %2624 = vmatpush.msra.mxu0 0.0
        %2625 = vmatpush.msra.mxu0 0.0
        %2626 = vmatpush.msra.mxu0 0.0
        %2627 = vmatpush.msra.mxu0 0.0
        %2628 = vmatpush.msra.mxu0 0.0
        %2629 = vmatpush.msra.mxu0 0.0
        %2630 = vmatpush.msra.mxu0 0.0
        %2631 = vmatpush.msra.mxu0 0.0
        %2632 = vmatpush.msra.mxu0 0.0
        %2633 = vmatpush.msra.mxu0 0.0
        %2634 = vmatpush.msra.mxu0 %v2560
        %2635 = vmatpush.msra.mxu0 %v2530
        %2636 = vmatmul.f32.gmra.mxu0 %v2545
        %v2637 = vpop.f32.mrf.mxu0
        %v2638 = vadd.f32 0.0, %v2637
        %2639 = vmatmul.f32.gmra.mxu0 %v2548
        %v2640 = vpop.f32.mrf.mxu0
        %v2641 = vadd.f32 0.0, %v2640
        %2642 = vmatmul.f32.gmra.mxu0 %v2551
        %v2643 = vpop.f32.mrf.mxu0
        %v2644 = vadd.f32 0.0, %v2643
        %2645 = vmatmul.f32.gmra.mxu0 %v2554
        %v2646 = vpop.f32.mrf.mxu0
        %v2647 = vadd.f32 0.0, %v2646
        %2648 = vdwg.mxu0
        %v2649 = vadd.f32 %v2405, %v2580
        %v2650 = vadd.f32 %v2434, %v2609
        %v2651 = vadd.f32 %v2463, %v2638
        %v2652 = vadd.f32 %v2408, %v2583
        %v2653 = vadd.f32 %v2437, %v2612
        %v2654 = vadd.f32 %v2466, %v2641
        %v2655 = vadd.f32 %v2411, %v2586
        %v2656 = vadd.f32 %v2440, %v2615
        %v2657 = vadd.f32 %v2469, %v2644
        %v2658 = vadd.f32 %v2414, %v2589
        %v2659 = vadd.f32 %v2443, %v2618
        %v2660 = vadd.f32 %v2472, %v2647
        %s2661 = scalar_lea.vmem %s373, 12 [#allocation3]
        %v2662 = vld [vmem:[%s2661] sm:$0xff]
        %v2663 = vld [vmem:[%s2661 + $0x8] sm:$0xf]
        %2666 = vst [vmem:[#allocation1] ss:$2 sm:$0xff] %v2662
        %s2667 = scalar_lea.vmem [#allocation1], 16
        %2668 = vst [vmem:[%s2667] ss:$2 sm:$0xff] %v2663
        %v2669 = vld.sshfl [vmem:[#allocation1] sm:$0xff pattern:$0x75316420]
        %v2670 = vld.sshfl [vmem:[#allocation1 + $0x8] sm:$0xff pattern:$0x75316420]
        %v2671 = vld.sshfl [vmem:[#allocation1 + $0x10] sm:$0xff pattern:$0x75316420]
        %s2675 = scalar_lea.vmem [#allocation1], 1
        %2676 = vst [vmem:[%s2675] ss:$2 sm:$0xff] %v2662
        %s2677 = scalar_lea.vmem [#allocation1], 17
        %2678 = vst [vmem:[%s2677] ss:$2 sm:$0xff] %v2663
        %v2679 = vld.sshfl [vmem:[#allocation1] sm:$0xff pattern:$0x75316420]
        %v2680 = vld.sshfl [vmem:[#allocation1 + $0x8] sm:$0xff pattern:$0x75316420]
        %v2681 = vld.sshfl [vmem:[#allocation1 + $0x10] sm:$0xff pattern:$0x75316420]
        %2682 = vrot.lane.b32.xlu0 %v2679, 127
        %v2683 = vpop.permute.xlu0 %2682
        %2684 = vrot.lane.b32.xlu0 %v2680, 127
        %v2685 = vpop.permute.xlu0 %2684
        %2686 = vrot.lane.b32.xlu0 %v2681, 127
        %v2687 = vpop.permute.xlu0 %2686
        %v2688 = vsel %vm459, %v2683, %v2685
        %v2689 = vsel %vm459, %v2685, %v2687
        %2693 = vst [vmem:[#allocation1] ss:$2 sm:$0xff] %v2662
        %s2694 = scalar_lea.vmem [#allocation1], 16
        %2695 = vst [vmem:[%s2694] ss:$2 sm:$0xff] %v2663
        %v2696 = vld.sshfl [vmem:[#allocation1] sm:$0xff pattern:$0x75316420]
        %v2697 = vld.sshfl [vmem:[#allocation1 + $0x8] sm:$0xff pattern:$0x75316420]
        %v2698 = vld.sshfl [vmem:[#allocation1 + $0x10] sm:$0xff pattern:$0x75316420]
        %2699 = vrot.lane.b32.xlu0 %v2696, 126
        %v2700 = vpop.permute.xlu0 %2699
        %2701 = vrot.lane.b32.xlu0 %v2697, 126
        %v2702 = vpop.permute.xlu0 %2701
        %2703 = vrot.lane.b32.xlu0 %v2698, 126
        %v2704 = vpop.permute.xlu0 %2703
        %v2705 = vsel %vm477, %v2700, %v2702
        %v2706 = vsel %vm477, %v2702, %v2704
        %v2707 = vsel %vm480, %v2669, %v2688
        %v2708 = vsel %vm480, %v2670, %v2689
        %v2709 = vsel %vm480, %v2671, %v2687
        %v2710 = vld [vmem:[%s1008] sm:$0xff]
        %v2711 = vld [vmem:[%s1008 + $0x8] sm:$0xff]
        %v2712 = vld [vmem:[%s1008 + $0x10] sm:$0xff]
        %v2713 = vld [vmem:[%s1008 + $0x18] sm:$0xff]
        %v2715 = vsel %vm560, %v2710, 0
        %v2718 = vsel %vm560, %v2711, 0
        %v2721 = vsel %vm560, %v2712, 0
        %v2724 = vsel %vm560, %v2713, 0
        %v2726 = vsel %vm480, %v2705, 0
        %v2728 = vsel %vm480, %v2706, 0
        %v2730 = vsel %vm480, %v2704, 0
        %2732 = vmatpush.msra.mxu0 0.0
        %2733 = vmatpush.msra.mxu0 0.0
        %2734 = vmatpush.msra.mxu0 0.0
        %2735 = vmatpush.msra.mxu0 0.0
        %2736 = vmatpush.msra.mxu0 0.0
        %2737 = vmatpush.msra.mxu0 0.0
        %2738 = vmatpush.msra.mxu0 0.0
        %2739 = vmatpush.msra.mxu0 0.0
        %2740 = vmatpush.msra.mxu0 0.0
        %2741 = vmatpush.msra.mxu0 0.0
        %2742 = vmatpush.msra.mxu0 0.0
        %2743 = vmatpush.msra.mxu0 0.0
        %2744 = vmatpush.msra.mxu0 0.0
        %2745 = vmatpush.msra.mxu0 0.0
        %2746 = vmatpush.msra.mxu0 %v2726
        %2747 = vmatpush.msra.mxu0 %v2707
        %2748 = vmatmul.f32.gmra.mxu0 %v2715
        %v2749 = vpop.f32.mrf.mxu0
        %v2750 = vadd.f32 0.0, %v2749
        %2751 = vmatmul.f32.gmra.mxu0 %v2718
        %v2752 = vpop.f32.mrf.mxu0
        %v2753 = vadd.f32 0.0, %v2752
        %2754 = vmatmul.f32.gmra.mxu0 %v2721
        %v2755 = vpop.f32.mrf.mxu0
        %v2756 = vadd.f32 0.0, %v2755
        %2757 = vmatmul.f32.gmra.mxu0 %v2724
        %v2758 = vpop.f32.mrf.mxu0
        %v2759 = vadd.f32 0.0, %v2758
        %2760 = vdwg.mxu0
        %2761 = vmatpush.msra.mxu0 0.0
        %2762 = vmatpush.msra.mxu0 0.0
        %2763 = vmatpush.msra.mxu0 0.0
        %2764 = vmatpush.msra.mxu0 0.0
        %2765 = vmatpush.msra.mxu0 0.0
        %2766 = vmatpush.msra.mxu0 0.0
        %2767 = vmatpush.msra.mxu0 0.0
        %2768 = vmatpush.msra.mxu0 0.0
        %2769 = vmatpush.msra.mxu0 0.0
        %2770 = vmatpush.msra.mxu0 0.0
        %2771 = vmatpush.msra.mxu0 0.0
        %2772 = vmatpush.msra.mxu0 0.0
        %2773 = vmatpush.msra.mxu0 0.0
        %2774 = vmatpush.msra.mxu0 0.0
        %2775 = vmatpush.msra.mxu0 %v2728
        %2776 = vmatpush.msra.mxu0 %v2708
        %2777 = vmatmul.f32.gmra.mxu0 %v2715
        %v2778 = vpop.f32.mrf.mxu0
        %v2779 = vadd.f32 0.0, %v2778
        %2780 = vmatmul.f32.gmra.mxu0 %v2718
        %v2781 = vpop.f32.mrf.mxu0
        %v2782 = vadd.f32 0.0, %v2781
        %2783 = vmatmul.f32.gmra.mxu0 %v2721
        %v2784 = vpop.f32.mrf.mxu0
        %v2785 = vadd.f32 0.0, %v2784
        %2786 = vmatmul.f32.gmra.mxu0 %v2724
        %v2787 = vpop.f32.mrf.mxu0
        %v2788 = vadd.f32 0.0, %v2787
        %2789 = vdwg.mxu0
        %2790 = vmatpush.msra.mxu0 0.0
        %2791 = vmatpush.msra.mxu0 0.0
        %2792 = vmatpush.msra.mxu0 0.0
        %2793 = vmatpush.msra.mxu0 0.0
        %2794 = vmatpush.msra.mxu0 0.0
        %2795 = vmatpush.msra.mxu0 0.0
        %2796 = vmatpush.msra.mxu0 0.0
        %2797 = vmatpush.msra.mxu0 0.0
        %2798 = vmatpush.msra.mxu0 0.0
        %2799 = vmatpush.msra.mxu0 0.0
        %2800 = vmatpush.msra.mxu0 0.0
        %2801 = vmatpush.msra.mxu0 0.0
        %2802 = vmatpush.msra.mxu0 0.0
        %2803 = vmatpush.msra.mxu0 0.0
        %2804 = vmatpush.msra.mxu0 %v2730
        %2805 = vmatpush.msra.mxu0 %v2709
        %2806 = vmatmul.f32.gmra.mxu0 %v2715
        %v2807 = vpop.f32.mrf.mxu0
        %v2808 = vadd.f32 0.0, %v2807
        %2809 = vmatmul.f32.gmra.mxu0 %v2718
        %v2810 = vpop.f32.mrf.mxu0
        %v2811 = vadd.f32 0.0, %v2810
        %2812 = vmatmul.f32.gmra.mxu0 %v2721
        %v2813 = vpop.f32.mrf.mxu0
        %v2814 = vadd.f32 0.0, %v2813
        %2815 = vmatmul.f32.gmra.mxu0 %v2724
        %v2816 = vpop.f32.mrf.mxu0
        %v2817 = vadd.f32 0.0, %v2816
        %2818 = vdwg.mxu0
        %v2819 = vadd.f32 %v2649, %v2750
        %v2820 = vadd.f32 %v2650, %v2779
        %v2821 = vadd.f32 %v2651, %v2808
        %v2822 = vadd.f32 %v2652, %v2753
        %v2823 = vadd.f32 %v2653, %v2782
        %v2824 = vadd.f32 %v2654, %v2811
        %v2825 = vadd.f32 %v2655, %v2756
        %v2826 = vadd.f32 %v2656, %v2785
        %v2827 = vadd.f32 %v2657, %v2814
        %v2828 = vadd.f32 %v2658, %v2759
        %v2829 = vadd.f32 %v2659, %v2788
        %v2830 = vadd.f32 %v2660, %v2817
        %2831 = vst [vmem:[#allocation1] ss:$2 sm:$0xff] %v2662
        %s2832 = scalar_lea.vmem [#allocation1], 16
        %2833 = vst [vmem:[%s2832] ss:$2 sm:$0xff] %v2663
        %v2834 = vld.sshfl [vmem:[#allocation1] sm:$0xff pattern:$0x75316420]
        %v2835 = vld.sshfl [vmem:[#allocation1 + $0x8] sm:$0xff pattern:$0x75316420]
        %v2836 = vld.sshfl [vmem:[#allocation1 + $0x10] sm:$0xff pattern:$0x75316420]
        %s2840 = scalar_lea.vmem [#allocation1], 1
        %2841 = vst [vmem:[%s2840] ss:$2 sm:$0xff] %v2662
        %s2842 = scalar_lea.vmem [#allocation1], 17
        %2843 = vst [vmem:[%s2842] ss:$2 sm:$0xff] %v2663
        %v2844 = vld.sshfl [vmem:[#allocation1] sm:$0xff pattern:$0x75316420]
        %v2845 = vld.sshfl [vmem:[#allocation1 + $0x8] sm:$0xff pattern:$0x75316420]
        %v2846 = vld.sshfl [vmem:[#allocation1 + $0x10] sm:$0xff pattern:$0x75316420]
        %2847 = vrot.lane.b32.xlu0 %v2844, 127
        %v2848 = vpop.permute.xlu0 %2847
        %2849 = vrot.lane.b32.xlu0 %v2845, 127
        %v2850 = vpop.permute.xlu0 %2849
        %2851 = vrot.lane.b32.xlu0 %v2846, 127
        %v2852 = vpop.permute.xlu0 %2851
        %v2853 = vsel %vm459, %v2848, %v2850
        %v2854 = vsel %vm459, %v2850, %v2852
        %2858 = vst [vmem:[#allocation1] ss:$2 sm:$0xff] %v2662
        %s2859 = scalar_lea.vmem [#allocation1], 16
        %2860 = vst [vmem:[%s2859] ss:$2 sm:$0xff] %v2663
        %v2861 = vld.sshfl [vmem:[#allocation1] sm:$0xff pattern:$0x75316420]
        %v2862 = vld.sshfl [vmem:[#allocation1 + $0x8] sm:$0xff pattern:$0x75316420]
        %v2863 = vld.sshfl [vmem:[#allocation1 + $0x10] sm:$0xff pattern:$0x75316420]
        %2864 = vrot.lane.b32.xlu0 %v2861, 126
        %v2865 = vpop.permute.xlu0 %2864
        %2866 = vrot.lane.b32.xlu0 %v2862, 126
        %v2867 = vpop.permute.xlu0 %2866
        %2868 = vrot.lane.b32.xlu0 %v2863, 126
        %v2869 = vpop.permute.xlu0 %2868
        %v2870 = vsel %vm477, %v2865, %v2867
        %v2871 = vsel %vm477, %v2867, %v2869
        %v2872 = vsel %vm480, %v2834, %v2853
        %v2873 = vsel %vm480, %v2835, %v2854
        %v2874 = vsel %vm480, %v2836, %v2852
        %v2875 = vld [vmem:[%s1174] sm:$0xff]
        %v2876 = vld [vmem:[%s1174 + $0x8] sm:$0xff]
        %v2877 = vld [vmem:[%s1174 + $0x10] sm:$0xff]
        %v2878 = vld [vmem:[%s1174 + $0x18] sm:$0xff]
        %2882 = vrot.lane.b32.xlu0 %v2872, 110
        %v2883 = vpop.permute.xlu0 %2882
        %2884 = vrot.lane.b32.xlu0 %v2873, 110
        %v2885 = vpop.permute.xlu0 %2884
        %2886 = vrot.lane.b32.xlu0 %v2874, 110
        %v2887 = vpop.permute.xlu0 %2886
        %2888 = vrot.lane.b32.xlu0 %v2870, 110
        %v2889 = vpop.permute.xlu0 %2888
        %2890 = vrot.lane.b32.xlu0 %v2871, 110
        %v2891 = vpop.permute.xlu0 %2890
        %2892 = vrot.lane.b32.xlu0 %v2869, 110
        %v2893 = vpop.permute.xlu0 %2892
        %v2894 = vsel %vm552, %v2883, %v2885
        %v2895 = vsel %vm552, %v2885, %v2887
        %v2896 = vsel %vm552, %v2889, %v2891
        %v2897 = vsel %vm552, %v2891, %v2893
        %v2902 = vsel %vm560, %v2875, 0
        %v2905 = vsel %vm560, %v2876, 0
        %v2908 = vsel %vm560, %v2877, 0
        %v2911 = vsel %vm560, %v2878, 0
        %v2913 = vsel %vm480, %v2896, 0
        %v2915 = vsel %vm480, %v2897, 0
        %v2917 = vsel %vm480, %v2893, 0
        %2919 = vmatpush.msra.mxu0 0.0
        %2920 = vmatpush.msra.mxu0 0.0
        %2921 = vmatpush.msra.mxu0 0.0
        %2922 = vmatpush.msra.mxu0 0.0
        %2923 = vmatpush.msra.mxu0 0.0
        %2924 = vmatpush.msra.mxu0 0.0
        %2925 = vmatpush.msra.mxu0 0.0
        %2926 = vmatpush.msra.mxu0 0.0
        %2927 = vmatpush.msra.mxu0 0.0
        %2928 = vmatpush.msra.mxu0 0.0
        %2929 = vmatpush.msra.mxu0 0.0
        %2930 = vmatpush.msra.mxu0 0.0
        %2931 = vmatpush.msra.mxu0 0.0
        %2932 = vmatpush.msra.mxu0 0.0
        %2933 = vmatpush.msra.mxu0 %v2913
        %2934 = vmatpush.msra.mxu0 %v2894
        %2935 = vmatmul.f32.gmra.mxu0 %v2902
        %v2936 = vpop.f32.mrf.mxu0
        %v2937 = vadd.f32 0.0, %v2936
        %2938 = vmatmul.f32.gmra.mxu0 %v2905
        %v2939 = vpop.f32.mrf.mxu0
        %v2940 = vadd.f32 0.0, %v2939
        %2941 = vmatmul.f32.gmra.mxu0 %v2908
        %v2942 = vpop.f32.mrf.mxu0
        %v2943 = vadd.f32 0.0, %v2942
        %2944 = vmatmul.f32.gmra.mxu0 %v2911
        %v2945 = vpop.f32.mrf.mxu0
        %v2946 = vadd.f32 0.0, %v2945
        %2947 = vdwg.mxu0
        %2948 = vmatpush.msra.mxu0 0.0
        %2949 = vmatpush.msra.mxu0 0.0
        %2950 = vmatpush.msra.mxu0 0.0
        %2951 = vmatpush.msra.mxu0 0.0
        %2952 = vmatpush.msra.mxu0 0.0
        %2953 = vmatpush.msra.mxu0 0.0
        %2954 = vmatpush.msra.mxu0 0.0
        %2955 = vmatpush.msra.mxu0 0.0
        %2956 = vmatpush.msra.mxu0 0.0
        %2957 = vmatpush.msra.mxu0 0.0
        %2958 = vmatpush.msra.mxu0 0.0
        %2959 = vmatpush.msra.mxu0 0.0
        %2960 = vmatpush.msra.mxu0 0.0
        %2961 = vmatpush.msra.mxu0 0.0
        %2962 = vmatpush.msra.mxu0 %v2915
        %2963 = vmatpush.msra.mxu0 %v2895
        %2964 = vmatmul.f32.gmra.mxu0 %v2902
        %v2965 = vpop.f32.mrf.mxu0
        %v2966 = vadd.f32 0.0, %v2965
        %2967 = vmatmul.f32.gmra.mxu0 %v2905
        %v2968 = vpop.f32.mrf.mxu0
        %v2969 = vadd.f32 0.0, %v2968
        %2970 = vmatmul.f32.gmra.mxu0 %v2908
        %v2971 = vpop.f32.mrf.mxu0
        %v2972 = vadd.f32 0.0, %v2971
        %2973 = vmatmul.f32.gmra.mxu0 %v2911
        %v2974 = vpop.f32.mrf.mxu0
        %v2975 = vadd.f32 0.0, %v2974
        %2976 = vdwg.mxu0
        %2977 = vmatpush.msra.mxu0 0.0
        %2978 = vmatpush.msra.mxu0 0.0
        %2979 = vmatpush.msra.mxu0 0.0
        %2980 = vmatpush.msra.mxu0 0.0
        %2981 = vmatpush.msra.mxu0 0.0
        %2982 = vmatpush.msra.mxu0 0.0
        %2983 = vmatpush.msra.mxu0 0.0
        %2984 = vmatpush.msra.mxu0 0.0
        %2985 = vmatpush.msra.mxu0 0.0
        %2986 = vmatpush.msra.mxu0 0.0
        %2987 = vmatpush.msra.mxu0 0.0
        %2988 = vmatpush.msra.mxu0 0.0
        %2989 = vmatpush.msra.mxu0 0.0
        %2990 = vmatpush.msra.mxu0 0.0
        %2991 = vmatpush.msra.mxu0 %v2917
        %2992 = vmatpush.msra.mxu0 %v2887
        %2993 = vmatmul.f32.gmra.mxu0 %v2902
        %v2994 = vpop.f32.mrf.mxu0
        %v2995 = vadd.f32 0.0, %v2994
        %2996 = vmatmul.f32.gmra.mxu0 %v2905
        %v2997 = vpop.f32.mrf.mxu0
        %v2998 = vadd.f32 0.0, %v2997
        %2999 = vmatmul.f32.gmra.mxu0 %v2908
        %v3000 = vpop.f32.mrf.mxu0
        %v3001 = vadd.f32 0.0, %v3000
        %3002 = vmatmul.f32.gmra.mxu0 %v2911
        %v3003 = vpop.f32.mrf.mxu0
        %v3004 = vadd.f32 0.0, %v3003
        %3005 = vdwg.mxu0
        %v3006 = vadd.f32 %v2819, %v2937
        %v3007 = vadd.f32 %v2820, %v2966
        %v3008 = vadd.f32 %v2821, %v2995
        %v3009 = vadd.f32 %v2822, %v2940
        %v3010 = vadd.f32 %v2823, %v2969
        %v3011 = vadd.f32 %v2824, %v2998
        %v3012 = vadd.f32 %v2825, %v2943
        %v3013 = vadd.f32 %v2826, %v2972
        %v3014 = vadd.f32 %v2827, %v3001
        %v3015 = vadd.f32 %v2828, %v2946
        %v3016 = vadd.f32 %v2829, %v2975
        %v3017 = vadd.f32 %v2830, %v3004
        %3018 = vst [vmem:[#allocation1] ss:$2 sm:$0xff] %v2662
        %s3019 = scalar_lea.vmem [#allocation1], 16
        %3020 = vst [vmem:[%s3019] ss:$2 sm:$0xff] %v2663
        %v3021 = vld.sshfl [vmem:[#allocation1] sm:$0xff pattern:$0x75316420]
        %v3022 = vld.sshfl [vmem:[#allocation1 + $0x8] sm:$0xff pattern:$0x75316420]
        %v3023 = vld.sshfl [vmem:[#allocation1 + $0x10] sm:$0xff pattern:$0x75316420]
        %s3027 = scalar_lea.vmem [#allocation1], 1
        %3028 = vst [vmem:[%s3027] ss:$2 sm:$0xff] %v2662
        %s3029 = scalar_lea.vmem [#allocation1], 17
        %3030 = vst [vmem:[%s3029] ss:$2 sm:$0xff] %v2663
        %v3031 = vld.sshfl [vmem:[#allocation1] sm:$0xff pattern:$0x75316420]
        %v3032 = vld.sshfl [vmem:[#allocation1 + $0x8] sm:$0xff pattern:$0x75316420]
        %v3033 = vld.sshfl [vmem:[#allocation1 + $0x10] sm:$0xff pattern:$0x75316420]
        %3034 = vrot.lane.b32.xlu0 %v3031, 127
        %v3035 = vpop.permute.xlu0 %3034
        %3036 = vrot.lane.b32.xlu0 %v3032, 127
        %v3037 = vpop.permute.xlu0 %3036
        %3038 = vrot.lane.b32.xlu0 %v3033, 127
        %v3039 = vpop.permute.xlu0 %3038
        %v3040 = vsel %vm459, %v3035, %v3037
        %v3041 = vsel %vm459, %v3037, %v3039
        %3045 = vst [vmem:[#allocation1] ss:$2 sm:$0xff] %v2662
        %s3046 = scalar_lea.vmem [#allocation1], 16
        %3047 = vst [vmem:[%s3046] ss:$2 sm:$0xff] %v2663
        %v3048 = vld.sshfl [vmem:[#allocation1] sm:$0xff pattern:$0x75316420]
        %v3049 = vld.sshfl [vmem:[#allocation1 + $0x8] sm:$0xff pattern:$0x75316420]
        %v3050 = vld.sshfl [vmem:[#allocation1 + $0x10] sm:$0xff pattern:$0x75316420]
        %3051 = vrot.lane.b32.xlu0 %v3048, 126
        %v3052 = vpop.permute.xlu0 %3051
        %3053 = vrot.lane.b32.xlu0 %v3049, 126
        %v3054 = vpop.permute.xlu0 %3053
        %3055 = vrot.lane.b32.xlu0 %v3050, 126
        %v3056 = vpop.permute.xlu0 %3055
        %v3057 = vsel %vm477, %v3052, %v3054
        %v3058 = vsel %vm477, %v3054, %v3056
        %v3059 = vsel %vm480, %v3021, %v3040
        %v3060 = vsel %vm480, %v3022, %v3041
        %v3061 = vsel %vm480, %v3023, %v3039
        %v3062 = vld [vmem:[%s1362] sm:$0xff]
        %v3063 = vld [vmem:[%s1362 + $0x8] sm:$0xff]
        %v3064 = vld [vmem:[%s1362 + $0x10] sm:$0xff]
        %v3065 = vld [vmem:[%s1362 + $0x18] sm:$0xff]
        %3069 = vrot.lane.b32.xlu0 %v3059, 92
        %v3070 = vpop.permute.xlu0 %3069
        %3071 = vrot.lane.b32.xlu0 %v3060, 92
        %v3072 = vpop.permute.xlu0 %3071
        %3073 = vrot.lane.b32.xlu0 %v3061, 92
        %v3074 = vpop.permute.xlu0 %3073
        %3075 = vrot.lane.b32.xlu0 %v3057, 92
        %v3076 = vpop.permute.xlu0 %3075
        %3077 = vrot.lane.b32.xlu0 %v3058, 92
        %v3078 = vpop.permute.xlu0 %3077
        %3079 = vrot.lane.b32.xlu0 %v3056, 92
        %v3080 = vpop.permute.xlu0 %3079
        %v3081 = vsel %vm835, %v3070, %v3072
        %v3082 = vsel %vm835, %v3072, %v3074
        %v3083 = vsel %vm835, %v3076, %v3078
        %v3084 = vsel %vm835, %v3078, %v3080
        %v3089 = vsel %vm560, %v3062, 0
        %v3092 = vsel %vm560, %v3063, 0
        %v3095 = vsel %vm560, %v3064, 0
        %v3098 = vsel %vm560, %v3065, 0
        %v3100 = vsel %vm480, %v3083, 0
        %v3102 = vsel %vm480, %v3084, 0
        %v3104 = vsel %vm480, %v3080, 0
        %3106 = vmatpush.msra.mxu0 0.0
        %3107 = vmatpush.msra.mxu0 0.0
        %3108 = vmatpush.msra.mxu0 0.0
        %3109 = vmatpush.msra.mxu0 0.0
        %3110 = vmatpush.msra.mxu0 0.0
        %3111 = vmatpush.msra.mxu0 0.0
        %3112 = vmatpush.msra.mxu0 0.0
        %3113 = vmatpush.msra.mxu0 0.0
        %3114 = vmatpush.msra.mxu0 0.0
        %3115 = vmatpush.msra.mxu0 0.0
        %3116 = vmatpush.msra.mxu0 0.0
        %3117 = vmatpush.msra.mxu0 0.0
        %3118 = vmatpush.msra.mxu0 0.0
        %3119 = vmatpush.msra.mxu0 0.0
        %3120 = vmatpush.msra.mxu0 %v3100
        %3121 = vmatpush.msra.mxu0 %v3081
        %3122 = vmatmul.f32.gmra.mxu0 %v3089
        %v3123 = vpop.f32.mrf.mxu0
        %v3124 = vadd.f32 0.0, %v3123
        %3125 = vmatmul.f32.gmra.mxu0 %v3092
        %v3126 = vpop.f32.mrf.mxu0
        %v3127 = vadd.f32 0.0, %v3126
        %3128 = vmatmul.f32.gmra.mxu0 %v3095
        %v3129 = vpop.f32.mrf.mxu0
        %v3130 = vadd.f32 0.0, %v3129
        %3131 = vmatmul.f32.gmra.mxu0 %v3098
        %v3132 = vpop.f32.mrf.mxu0
        %v3133 = vadd.f32 0.0, %v3132
        %3134 = vdwg.mxu0
        %3135 = vmatpush.msra.mxu0 0.0
        %3136 = vmatpush.msra.mxu0 0.0
        %3137 = vmatpush.msra.mxu0 0.0
        %3138 = vmatpush.msra.mxu0 0.0
        %3139 = vmatpush.msra.mxu0 0.0
        %3140 = vmatpush.msra.mxu0 0.0
        %3141 = vmatpush.msra.mxu0 0.0
        %3142 = vmatpush.msra.mxu0 0.0
        %3143 = vmatpush.msra.mxu0 0.0
        %3144 = vmatpush.msra.mxu0 0.0
        %3145 = vmatpush.msra.mxu0 0.0
        %3146 = vmatpush.msra.mxu0 0.0
        %3147 = vmatpush.msra.mxu0 0.0
        %3148 = vmatpush.msra.mxu0 0.0
        %3149 = vmatpush.msra.mxu0 %v3102
        %3150 = vmatpush.msra.mxu0 %v3082
        %3151 = vmatmul.f32.gmra.mxu0 %v3089
        %v3152 = vpop.f32.mrf.mxu0
        %v3153 = vadd.f32 0.0, %v3152
        %3154 = vmatmul.f32.gmra.mxu0 %v3092
        %v3155 = vpop.f32.mrf.mxu0
        %v3156 = vadd.f32 0.0, %v3155
        %3157 = vmatmul.f32.gmra.mxu0 %v3095
        %v3158 = vpop.f32.mrf.mxu0
        %v3159 = vadd.f32 0.0, %v3158
        %3160 = vmatmul.f32.gmra.mxu0 %v3098
        %v3161 = vpop.f32.mrf.mxu0
        %v3162 = vadd.f32 0.0, %v3161
        %3163 = vdwg.mxu0
        %3164 = vmatpush.msra.mxu0 0.0
        %3165 = vmatpush.msra.mxu0 0.0
        %3166 = vmatpush.msra.mxu0 0.0
        %3167 = vmatpush.msra.mxu0 0.0
        %3168 = vmatpush.msra.mxu0 0.0
        %3169 = vmatpush.msra.mxu0 0.0
        %3170 = vmatpush.msra.mxu0 0.0
        %3171 = vmatpush.msra.mxu0 0.0
        %3172 = vmatpush.msra.mxu0 0.0
        %3173 = vmatpush.msra.mxu0 0.0
        %3174 = vmatpush.msra.mxu0 0.0
        %3175 = vmatpush.msra.mxu0 0.0
        %3176 = vmatpush.msra.mxu0 0.0
        %3177 = vmatpush.msra.mxu0 0.0
        %3178 = vmatpush.msra.mxu0 %v3104
        %3179 = vmatpush.msra.mxu0 %v3074
        %3180 = vmatmul.f32.gmra.mxu0 %v3089
        %v3181 = vpop.f32.mrf.mxu0
        %v3182 = vadd.f32 0.0, %v3181
        %3183 = vmatmul.f32.gmra.mxu0 %v3092
        %v3184 = vpop.f32.mrf.mxu0
        %v3185 = vadd.f32 0.0, %v3184
        %3186 = vmatmul.f32.gmra.mxu0 %v3095
        %v3187 = vpop.f32.mrf.mxu0
        %v3188 = vadd.f32 0.0, %v3187
        %3189 = vmatmul.f32.gmra.mxu0 %v3098
        %v3190 = vpop.f32.mrf.mxu0
        %v3191 = vadd.f32 0.0, %v3190
        %3192 = vdwg.mxu0
        %v3193 = vadd.f32 %v3006, %v3124
        %v3194 = vadd.f32 %v3007, %v3153
        %v3195 = vadd.f32 %v3008, %v3182
        %v3196 = vadd.f32 %v3009, %v3127
        %v3197 = vadd.f32 %v3010, %v3156
        %v3198 = vadd.f32 %v3011, %v3185
        %v3199 = vadd.f32 %v3012, %v3130
        %v3200 = vadd.f32 %v3013, %v3159
        %v3201 = vadd.f32 %v3014, %v3188
        %v3202 = vadd.f32 %v3015, %v3133
        %v3203 = vadd.f32 %v3016, %v3162
        %v3204 = vadd.f32 %v3017, %v3191
        %s3205 = scalar_lea.vmem %s381, 12 [#allocation4]
        %v3206 = vld [vmem:[%s3205] sm:$0xff]
        %v3207 = vld [vmem:[%s3205 + $0x8] sm:$0xf]
        %3210 = vst [vmem:[#allocation1] ss:$2 sm:$0xff] %v3206
        %s3211 = scalar_lea.vmem [#allocation1], 16
        %3212 = vst [vmem:[%s3211] ss:$2 sm:$0xff] %v3207
        %v3213 = vld.sshfl [vmem:[#allocation1] sm:$0xff pattern:$0x75316420]
        %v3214 = vld.sshfl [vmem:[#allocation1 + $0x8] sm:$0xff pattern:$0x75316420]
        %v3215 = vld.sshfl [vmem:[#allocation1 + $0x10] sm:$0xff pattern:$0x75316420]
        %s3219 = scalar_lea.vmem [#allocation1], 1
        %3220 = vst [vmem:[%s3219] ss:$2 sm:$0xff] %v3206
        %s3221 = scalar_lea.vmem [#allocation1], 17
        %3222 = vst [vmem:[%s3221] ss:$2 sm:$0xff] %v3207
        %v3223 = vld.sshfl [vmem:[#allocation1] sm:$0xff pattern:$0x75316420]
        %v3224 = vld.sshfl [vmem:[#allocation1 + $0x8] sm:$0xff pattern:$0x75316420]
        %v3225 = vld.sshfl [vmem:[#allocation1 + $0x10] sm:$0xff pattern:$0x75316420]
        %3226 = vrot.lane.b32.xlu0 %v3223, 127
        %v3227 = vpop.permute.xlu0 %3226
        %3228 = vrot.lane.b32.xlu0 %v3224, 127
        %v3229 = vpop.permute.xlu0 %3228
        %3230 = vrot.lane.b32.xlu0 %v3225, 127
        %v3231 = vpop.permute.xlu0 %3230
        %v3232 = vsel %vm459, %v3227, %v3229
        %v3233 = vsel %vm459, %v3229, %v3231
        %3237 = vst [vmem:[#allocation1] ss:$2 sm:$0xff] %v3206
        %s3238 = scalar_lea.vmem [#allocation1], 16
        %3239 = vst [vmem:[%s3238] ss:$2 sm:$0xff] %v3207
        %v3240 = vld.sshfl [vmem:[#allocation1] sm:$0xff pattern:$0x75316420]
        %v3241 = vld.sshfl [vmem:[#allocation1 + $0x8] sm:$0xff pattern:$0x75316420]
        %v3242 = vld.sshfl [vmem:[#allocation1 + $0x10] sm:$0xff pattern:$0x75316420]
        %3243 = vrot.lane.b32.xlu0 %v3240, 126
        %v3244 = vpop.permute.xlu0 %3243
        %3245 = vrot.lane.b32.xlu0 %v3241, 126
        %v3246 = vpop.permute.xlu0 %3245
        %3247 = vrot.lane.b32.xlu0 %v3242, 126
        %v3248 = vpop.permute.xlu0 %3247
        %v3249 = vsel %vm477, %v3244, %v3246
        %v3250 = vsel %vm477, %v3246, %v3248
        %v3251 = vsel %vm480, %v3213, %v3232
        %v3252 = vsel %vm480, %v3214, %v3233
        %v3253 = vsel %vm480, %v3215, %v3231
        %v3254 = vld [vmem:[%s1554] sm:$0xff]
        %v3255 = vld [vmem:[%s1554 + $0x8] sm:$0xff]
        %v3256 = vld [vmem:[%s1554 + $0x10] sm:$0xff]
        %v3257 = vld [vmem:[%s1554 + $0x18] sm:$0xff]
        %v3259 = vsel %vm560, %v3254, 0
        %v3262 = vsel %vm560, %v3255, 0
        %v3265 = vsel %vm560, %v3256, 0
        %v3268 = vsel %vm560, %v3257, 0
        %v3270 = vsel %vm480, %v3249, 0
        %v3272 = vsel %vm480, %v3250, 0
        %v3274 = vsel %vm480, %v3248, 0
        %3276 = vmatpush.msra.mxu0 0.0
        %3277 = vmatpush.msra.mxu0 0.0
        %3278 = vmatpush.msra.mxu0 0.0
        %3279 = vmatpush.msra.mxu0 0.0
        %3280 = vmatpush.msra.mxu0 0.0
        %3281 = vmatpush.msra.mxu0 0.0
        %3282 = vmatpush.msra.mxu0 0.0
        %3283 = vmatpush.msra.mxu0 0.0
        %3284 = vmatpush.msra.mxu0 0.0
        %3285 = vmatpush.msra.mxu0 0.0
        %3286 = vmatpush.msra.mxu0 0.0
        %3287 = vmatpush.msra.mxu0 0.0
        %3288 = vmatpush.msra.mxu0 0.0
        %3289 = vmatpush.msra.mxu0 0.0
        %3290 = vmatpush.msra.mxu0 %v3270
        %3291 = vmatpush.msra.mxu0 %v3251
        %3292 = vmatmul.f32.gmra.mxu0 %v3259
        %v3293 = vpop.f32.mrf.mxu0
        %v3294 = vadd.f32 0.0, %v3293
        %3295 = vmatmul.f32.gmra.mxu0 %v3262
        %v3296 = vpop.f32.mrf.mxu0
        %v3297 = vadd.f32 0.0, %v3296
        %3298 = vmatmul.f32.gmra.mxu0 %v3265
        %v3299 = vpop.f32.mrf.mxu0
        %v3300 = vadd.f32 0.0, %v3299
        %3301 = vmatmul.f32.gmra.mxu0 %v3268
        %v3302 = vpop.f32.mrf.mxu0
        %v3303 = vadd.f32 0.0, %v3302
        %3304 = vdwg.mxu0
        %3305 = vmatpush.msra.mxu0 0.0
        %3306 = vmatpush.msra.mxu0 0.0
        %3307 = vmatpush.msra.mxu0 0.0
        %3308 = vmatpush.msra.mxu0 0.0
        %3309 = vmatpush.msra.mxu0 0.0
        %3310 = vmatpush.msra.mxu0 0.0
        %3311 = vmatpush.msra.mxu0 0.0
        %3312 = vmatpush.msra.mxu0 0.0
        %3313 = vmatpush.msra.mxu0 0.0
        %3314 = vmatpush.msra.mxu0 0.0
        %3315 = vmatpush.msra.mxu0 0.0
        %3316 = vmatpush.msra.mxu0 0.0
        %3317 = vmatpush.msra.mxu0 0.0
        %3318 = vmatpush.msra.mxu0 0.0
        %3319 = vmatpush.msra.mxu0 %v3272
        %3320 = vmatpush.msra.mxu0 %v3252
        %3321 = vmatmul.f32.gmra.mxu0 %v3259
        %v3322 = vpop.f32.mrf.mxu0
        %v3323 = vadd.f32 0.0, %v3322
        %3324 = vmatmul.f32.gmra.mxu0 %v3262
        %v3325 = vpop.f32.mrf.mxu0
        %v3326 = vadd.f32 0.0, %v3325
        %3327 = vmatmul.f32.gmra.mxu0 %v3265
        %v3328 = vpop.f32.mrf.mxu0
        %v3329 = vadd.f32 0.0, %v3328
        %3330 = vmatmul.f32.gmra.mxu0 %v3268
        %v3331 = vpop.f32.mrf.mxu0
        %v3332 = vadd.f32 0.0, %v3331
        %3333 = vdwg.mxu0
        %3334 = vmatpush.msra.mxu0 0.0
        %3335 = vmatpush.msra.mxu0 0.0
        %3336 = vmatpush.msra.mxu0 0.0
        %3337 = vmatpush.msra.mxu0 0.0
        %3338 = vmatpush.msra.mxu0 0.0
        %3339 = vmatpush.msra.mxu0 0.0
        %3340 = vmatpush.msra.mxu0 0.0
        %3341 = vmatpush.msra.mxu0 0.0
        %3342 = vmatpush.msra.mxu0 0.0
        %3343 = vmatpush.msra.mxu0 0.0
        %3344 = vmatpush.msra.mxu0 0.0
        %3345 = vmatpush.msra.mxu0 0.0
        %3346 = vmatpush.msra.mxu0 0.0
        %3347 = vmatpush.msra.mxu0 0.0
        %3348 = vmatpush.msra.mxu0 %v3274
        %3349 = vmatpush.msra.mxu0 %v3253
        %3350 = vmatmul.f32.gmra.mxu0 %v3259
        %v3351 = vpop.f32.mrf.mxu0
        %v3352 = vadd.f32 0.0, %v3351
        %3353 = vmatmul.f32.gmra.mxu0 %v3262
        %v3354 = vpop.f32.mrf.mxu0
        %v3355 = vadd.f32 0.0, %v3354
        %3356 = vmatmul.f32.gmra.mxu0 %v3265
        %v3357 = vpop.f32.mrf.mxu0
        %v3358 = vadd.f32 0.0, %v3357
        %3359 = vmatmul.f32.gmra.mxu0 %v3268
        %v3360 = vpop.f32.mrf.mxu0
        %v3361 = vadd.f32 0.0, %v3360
        %3362 = vdwg.mxu0
        %v3363 = vadd.f32 %v3193, %v3294
        %v3364 = vadd.f32 %v3194, %v3323
        %v3365 = vadd.f32 %v3195, %v3352
        %v3366 = vadd.f32 %v3196, %v3297
        %v3367 = vadd.f32 %v3197, %v3326
        %v3368 = vadd.f32 %v3198, %v3355
        %v3369 = vadd.f32 %v3199, %v3300
        %v3370 = vadd.f32 %v3200, %v3329
        %v3371 = vadd.f32 %v3201, %v3358
        %v3372 = vadd.f32 %v3202, %v3303
        %v3373 = vadd.f32 %v3203, %v3332
        %v3374 = vadd.f32 %v3204, %v3361
        %3375 = vst [vmem:[#allocation1] ss:$2 sm:$0xff] %v3206
        %s3376 = scalar_lea.vmem [#allocation1], 16
        %3377 = vst [vmem:[%s3376] ss:$2 sm:$0xff] %v3207
        %v3378 = vld.sshfl [vmem:[#allocation1] sm:$0xff pattern:$0x75316420]
        %v3379 = vld.sshfl [vmem:[#allocation1 + $0x8] sm:$0xff pattern:$0x75316420]
        %v3380 = vld.sshfl [vmem:[#allocation1 + $0x10] sm:$0xff pattern:$0x75316420]
        %s3384 = scalar_lea.vmem [#allocation1], 1
        %3385 = vst [vmem:[%s3384] ss:$2 sm:$0xff] %v3206
        %s3386 = scalar_lea.vmem [#allocation1], 17
        %3387 = vst [vmem:[%s3386] ss:$2 sm:$0xff] %v3207
        %v3388 = vld.sshfl [vmem:[#allocation1] sm:$0xff pattern:$0x75316420]
        %v3389 = vld.sshfl [vmem:[#allocation1 + $0x8] sm:$0xff pattern:$0x75316420]
        %v3390 = vld.sshfl [vmem:[#allocation1 + $0x10] sm:$0xff pattern:$0x75316420]
        %3391 = vrot.lane.b32.xlu0 %v3388, 127
        %v3392 = vpop.permute.xlu0 %3391
        %3393 = vrot.lane.b32.xlu0 %v3389, 127
        %v3394 = vpop.permute.xlu0 %3393
        %3395 = vrot.lane.b32.xlu0 %v3390, 127
        %v3396 = vpop.permute.xlu0 %3395
        %v3397 = vsel %vm459, %v3392, %v3394
        %v3398 = vsel %vm459, %v3394, %v3396
        %3402 = vst [vmem:[#allocation1] ss:$2 sm:$0xff] %v3206
        %s3403 = scalar_lea.vmem [#allocation1], 16
        %3404 = vst [vmem:[%s3403] ss:$2 sm:$0xff] %v3207
        %v3405 = vld.sshfl [vmem:[#allocation1] sm:$0xff pattern:$0x75316420]
        %v3406 = vld.sshfl [vmem:[#allocation1 + $0x8] sm:$0xff pattern:$0x75316420]
        %v3407 = vld.sshfl [vmem:[#allocation1 + $0x10] sm:$0xff pattern:$0x75316420]
        %3408 = vrot.lane.b32.xlu0 %v3405, 126
        %v3409 = vpop.permute.xlu0 %3408
        %3410 = vrot.lane.b32.xlu0 %v3406, 126
        %v3411 = vpop.permute.xlu0 %3410
        %3412 = vrot.lane.b32.xlu0 %v3407, 126
        %v3413 = vpop.permute.xlu0 %3412
        %v3414 = vsel %vm477, %v3409, %v3411
        %v3415 = vsel %vm477, %v3411, %v3413
        %v3416 = vsel %vm480, %v3378, %v3397
        %v3417 = vsel %vm480, %v3379, %v3398
        %v3418 = vsel %vm480, %v3380, %v3396
        %v3419 = vld [vmem:[%s1720] sm:$0xff]
        %v3420 = vld [vmem:[%s1720 + $0x8] sm:$0xff]
        %v3421 = vld [vmem:[%s1720 + $0x10] sm:$0xff]
        %v3422 = vld [vmem:[%s1720 + $0x18] sm:$0xff]
        %3426 = vrot.lane.b32.xlu0 %v3416, 110
        %v3427 = vpop.permute.xlu0 %3426
        %3428 = vrot.lane.b32.xlu0 %v3417, 110
        %v3429 = vpop.permute.xlu0 %3428
        %3430 = vrot.lane.b32.xlu0 %v3418, 110
        %v3431 = vpop.permute.xlu0 %3430
        %3432 = vrot.lane.b32.xlu0 %v3414, 110
        %v3433 = vpop.permute.xlu0 %3432
        %3434 = vrot.lane.b32.xlu0 %v3415, 110
        %v3435 = vpop.permute.xlu0 %3434
        %3436 = vrot.lane.b32.xlu0 %v3413, 110
        %v3437 = vpop.permute.xlu0 %3436
        %v3438 = vsel %vm552, %v3427, %v3429
        %v3439 = vsel %vm552, %v3429, %v3431
        %v3440 = vsel %vm552, %v3433, %v3435
        %v3441 = vsel %vm552, %v3435, %v3437
        %v3446 = vsel %vm560, %v3419, 0
        %v3449 = vsel %vm560, %v3420, 0
        %v3452 = vsel %vm560, %v3421, 0
        %v3455 = vsel %vm560, %v3422, 0
        %v3457 = vsel %vm480, %v3440, 0
        %v3459 = vsel %vm480, %v3441, 0
        %v3461 = vsel %vm480, %v3437, 0
        %3463 = vmatpush.msra.mxu0 0.0
        %3464 = vmatpush.msra.mxu0 0.0
        %3465 = vmatpush.msra.mxu0 0.0
        %3466 = vmatpush.msra.mxu0 0.0
        %3467 = vmatpush.msra.mxu0 0.0
        %3468 = vmatpush.msra.mxu0 0.0
        %3469 = vmatpush.msra.mxu0 0.0
        %3470 = vmatpush.msra.mxu0 0.0
        %3471 = vmatpush.msra.mxu0 0.0
        %3472 = vmatpush.msra.mxu0 0.0
        %3473 = vmatpush.msra.mxu0 0.0
        %3474 = vmatpush.msra.mxu0 0.0
        %3475 = vmatpush.msra.mxu0 0.0
        %3476 = vmatpush.msra.mxu0 0.0
        %3477 = vmatpush.msra.mxu0 %v3457
        %3478 = vmatpush.msra.mxu0 %v3438
        %3479 = vmatmul.f32.gmra.mxu0 %v3446
        %v3480 = vpop.f32.mrf.mxu0
        %v3481 = vadd.f32 0.0, %v3480
        %3482 = vmatmul.f32.gmra.mxu0 %v3449
        %v3483 = vpop.f32.mrf.mxu0
        %v3484 = vadd.f32 0.0, %v3483
        %3485 = vmatmul.f32.gmra.mxu0 %v3452
        %v3486 = vpop.f32.mrf.mxu0
        %v3487 = vadd.f32 0.0, %v3486
        %3488 = vmatmul.f32.gmra.mxu0 %v3455
        %v3489 = vpop.f32.mrf.mxu0
        %v3490 = vadd.f32 0.0, %v3489
        %3491 = vdwg.mxu0
        %3492 = vmatpush.msra.mxu0 0.0
        %3493 = vmatpush.msra.mxu0 0.0
        %3494 = vmatpush.msra.mxu0 0.0
        %3495 = vmatpush.msra.mxu0 0.0
        %3496 = vmatpush.msra.mxu0 0.0
        %3497 = vmatpush.msra.mxu0 0.0
        %3498 = vmatpush.msra.mxu0 0.0
        %3499 = vmatpush.msra.mxu0 0.0
        %3500 = vmatpush.msra.mxu0 0.0
        %3501 = vmatpush.msra.mxu0 0.0
        %3502 = vmatpush.msra.mxu0 0.0
        %3503 = vmatpush.msra.mxu0 0.0
        %3504 = vmatpush.msra.mxu0 0.0
        %3505 = vmatpush.msra.mxu0 0.0
        %3506 = vmatpush.msra.mxu0 %v3459
        %3507 = vmatpush.msra.mxu0 %v3439
        %3508 = vmatmul.f32.gmra.mxu0 %v3446
        %v3509 = vpop.f32.mrf.mxu0
        %v3510 = vadd.f32 0.0, %v3509
        %3511 = vmatmul.f32.gmra.mxu0 %v3449
        %v3512 = vpop.f32.mrf.mxu0
        %v3513 = vadd.f32 0.0, %v3512
        %3514 = vmatmul.f32.gmra.mxu0 %v3452
        %v3515 = vpop.f32.mrf.mxu0
        %v3516 = vadd.f32 0.0, %v3515
        %3517 = vmatmul.f32.gmra.mxu0 %v3455
        %v3518 = vpop.f32.mrf.mxu0
        %v3519 = vadd.f32 0.0, %v3518
        %3520 = vdwg.mxu0
        %3521 = vmatpush.msra.mxu0 0.0
        %3522 = vmatpush.msra.mxu0 0.0
        %3523 = vmatpush.msra.mxu0 0.0
        %3524 = vmatpush.msra.mxu0 0.0
        %3525 = vmatpush.msra.mxu0 0.0
        %3526 = vmatpush.msra.mxu0 0.0
        %3527 = vmatpush.msra.mxu0 0.0
        %3528 = vmatpush.msra.mxu0 0.0
        %3529 = vmatpush.msra.mxu0 0.0
        %3530 = vmatpush.msra.mxu0 0.0
        %3531 = vmatpush.msra.mxu0 0.0
        %3532 = vmatpush.msra.mxu0 0.0
        %3533 = vmatpush.msra.mxu0 0.0
        %3534 = vmatpush.msra.mxu0 0.0
        %3535 = vmatpush.msra.mxu0 %v3461
        %3536 = vmatpush.msra.mxu0 %v3431
        %3537 = vmatmul.f32.gmra.mxu0 %v3446
        %v3538 = vpop.f32.mrf.mxu0
        %v3539 = vadd.f32 0.0, %v3538
        %3540 = vmatmul.f32.gmra.mxu0 %v3449
        %v3541 = vpop.f32.mrf.mxu0
        %v3542 = vadd.f32 0.0, %v3541
        %3543 = vmatmul.f32.gmra.mxu0 %v3452
        %v3544 = vpop.f32.mrf.mxu0
        %v3545 = vadd.f32 0.0, %v3544
        %3546 = vmatmul.f32.gmra.mxu0 %v3455
        %v3547 = vpop.f32.mrf.mxu0
        %v3548 = vadd.f32 0.0, %v3547
        %3549 = vdwg.mxu0
        %v3550 = vadd.f32 %v3363, %v3481
        %v3551 = vadd.f32 %v3364, %v3510
        %v3552 = vadd.f32 %v3365, %v3539
        %v3553 = vadd.f32 %v3366, %v3484
        %v3554 = vadd.f32 %v3367, %v3513
        %v3555 = vadd.f32 %v3368, %v3542
        %v3556 = vadd.f32 %v3369, %v3487
        %v3557 = vadd.f32 %v3370, %v3516
        %v3558 = vadd.f32 %v3371, %v3545
        %v3559 = vadd.f32 %v3372, %v3490
        %v3560 = vadd.f32 %v3373, %v3519
        %v3561 = vadd.f32 %v3374, %v3548
        %3562 = vst [vmem:[#allocation1] ss:$2 sm:$0xff] %v3206
        %s3563 = scalar_lea.vmem [#allocation1], 16
        %3564 = vst [vmem:[%s3563] ss:$2 sm:$0xff] %v3207
        %v3565 = vld.sshfl [vmem:[#allocation1] sm:$0xff pattern:$0x75316420]
        %v3566 = vld.sshfl [vmem:[#allocation1 + $0x8] sm:$0xff pattern:$0x75316420]
        %v3567 = vld.sshfl [vmem:[#allocation1 + $0x10] sm:$0xff pattern:$0x75316420]
        %s3571 = scalar_lea.vmem [#allocation1], 1
        %3572 = vst [vmem:[%s3571] ss:$2 sm:$0xff] %v3206
        %s3573 = scalar_lea.vmem [#allocation1], 17
        %3574 = vst [vmem:[%s3573] ss:$2 sm:$0xff] %v3207
        %v3575 = vld.sshfl [vmem:[#allocation1] sm:$0xff pattern:$0x75316420]
        %v3576 = vld.sshfl [vmem:[#allocation1 + $0x8] sm:$0xff pattern:$0x75316420]
        %v3577 = vld.sshfl [vmem:[#allocation1 + $0x10] sm:$0xff pattern:$0x75316420]
        %3578 = vrot.lane.b32.xlu0 %v3575, 127
        %v3579 = vpop.permute.xlu0 %3578
        %3580 = vrot.lane.b32.xlu0 %v3576, 127
        %v3581 = vpop.permute.xlu0 %3580
        %3582 = vrot.lane.b32.xlu0 %v3577, 127
        %v3583 = vpop.permute.xlu0 %3582
        %v3584 = vsel %vm459, %v3579, %v3581
        %v3585 = vsel %vm459, %v3581, %v3583
        %3589 = vst [vmem:[#allocation1] ss:$2 sm:$0xff] %v3206
        %s3590 = scalar_lea.vmem [#allocation1], 16
        %3591 = vst [vmem:[%s3590] ss:$2 sm:$0xff] %v3207
        %v3592 = vld.sshfl [vmem:[#allocation1] sm:$0xff pattern:$0x75316420]
        %v3593 = vld.sshfl [vmem:[#allocation1 + $0x8] sm:$0xff pattern:$0x75316420]
        %v3594 = vld.sshfl [vmem:[#allocation1 + $0x10] sm:$0xff pattern:$0x75316420]
        %3595 = vrot.lane.b32.xlu0 %v3592, 126
        %v3596 = vpop.permute.xlu0 %3595
        %3597 = vrot.lane.b32.xlu0 %v3593, 126
        %v3598 = vpop.permute.xlu0 %3597
        %3599 = vrot.lane.b32.xlu0 %v3594, 126
        %v3600 = vpop.permute.xlu0 %3599
        %v3601 = vsel %vm477, %v3596, %v3598
        %v3602 = vsel %vm477, %v3598, %v3600
        %v3603 = vsel %vm480, %v3565, %v3584
        %v3604 = vsel %vm480, %v3566, %v3585
        %v3605 = vsel %vm480, %v3567, %v3583
        %v3606 = vld [vmem:[%s1908] sm:$0xff]
        %v3607 = vld [vmem:[%s1908 + $0x8] sm:$0xff]
        %v3608 = vld [vmem:[%s1908 + $0x10] sm:$0xff]
        %v3609 = vld [vmem:[%s1908 + $0x18] sm:$0xff]
        %3613 = vrot.lane.b32.xlu0 %v3603, 92
        %v3614 = vpop.permute.xlu0 %3613
        %3615 = vrot.lane.b32.xlu0 %v3604, 92
        %v3616 = vpop.permute.xlu0 %3615
        %3617 = vrot.lane.b32.xlu0 %v3605, 92
        %v3618 = vpop.permute.xlu0 %3617
        %3619 = vrot.lane.b32.xlu0 %v3601, 92
        %v3620 = vpop.permute.xlu0 %3619
        %3621 = vrot.lane.b32.xlu0 %v3602, 92
        %v3622 = vpop.permute.xlu0 %3621
        %3623 = vrot.lane.b32.xlu0 %v3600, 92
        %v3624 = vpop.permute.xlu0 %3623
        %v3625 = vsel %vm835, %v3614, %v3616
        %v3626 = vsel %vm835, %v3616, %v3618
        %v3627 = vsel %vm835, %v3620, %v3622
        %v3628 = vsel %vm835, %v3622, %v3624
        %v3633 = vsel %vm560, %v3606, 0
        %v3636 = vsel %vm560, %v3607, 0
        %v3639 = vsel %vm560, %v3608, 0
        %v3642 = vsel %vm560, %v3609, 0
        %v3644 = vsel %vm480, %v3627, 0
        %v3646 = vsel %vm480, %v3628, 0
        %v3648 = vsel %vm480, %v3624, 0
        %3650 = vmatpush.msra.mxu0 0.0
        %3651 = vmatpush.msra.mxu0 0.0
        %3652 = vmatpush.msra.mxu0 0.0
        %3653 = vmatpush.msra.mxu0 0.0
        %3654 = vmatpush.msra.mxu0 0.0
        %3655 = vmatpush.msra.mxu0 0.0
        %3656 = vmatpush.msra.mxu0 0.0
        %3657 = vmatpush.msra.mxu0 0.0
        %3658 = vmatpush.msra.mxu0 0.0
        %3659 = vmatpush.msra.mxu0 0.0
        %3660 = vmatpush.msra.mxu0 0.0
        %3661 = vmatpush.msra.mxu0 0.0
        %3662 = vmatpush.msra.mxu0 0.0
        %3663 = vmatpush.msra.mxu0 0.0
        %3664 = vmatpush.msra.mxu0 %v3644
        %3665 = vmatpush.msra.mxu0 %v3625
        %3666 = vmatmul.f32.gmra.mxu0 %v3633
        %v3667 = vpop.f32.mrf.mxu0
        %v3668 = vadd.f32 0.0, %v3667
        %3669 = vmatmul.f32.gmra.mxu0 %v3636
        %v3670 = vpop.f32.mrf.mxu0
        %v3671 = vadd.f32 0.0, %v3670
        %3672 = vmatmul.f32.gmra.mxu0 %v3639
        %v3673 = vpop.f32.mrf.mxu0
        %v3674 = vadd.f32 0.0, %v3673
        %3675 = vmatmul.f32.gmra.mxu0 %v3642
        %v3676 = vpop.f32.mrf.mxu0
        %v3677 = vadd.f32 0.0, %v3676
        %3678 = vdwg.mxu0
        %3679 = vmatpush.msra.mxu0 0.0
        %3680 = vmatpush.msra.mxu0 0.0
        %3681 = vmatpush.msra.mxu0 0.0
        %3682 = vmatpush.msra.mxu0 0.0
        %3683 = vmatpush.msra.mxu0 0.0
        %3684 = vmatpush.msra.mxu0 0.0
        %3685 = vmatpush.msra.mxu0 0.0
        %3686 = vmatpush.msra.mxu0 0.0
        %3687 = vmatpush.msra.mxu0 0.0
        %3688 = vmatpush.msra.mxu0 0.0
        %3689 = vmatpush.msra.mxu0 0.0
        %3690 = vmatpush.msra.mxu0 0.0
        %3691 = vmatpush.msra.mxu0 0.0
        %3692 = vmatpush.msra.mxu0 0.0
        %3693 = vmatpush.msra.mxu0 %v3646
        %3694 = vmatpush.msra.mxu0 %v3626
        %3695 = vmatmul.f32.gmra.mxu0 %v3633
        %v3696 = vpop.f32.mrf.mxu0
        %v3697 = vadd.f32 0.0, %v3696
        %3698 = vmatmul.f32.gmra.mxu0 %v3636
        %v3699 = vpop.f32.mrf.mxu0
        %v3700 = vadd.f32 0.0, %v3699
        %3701 = vmatmul.f32.gmra.mxu0 %v3639
        %v3702 = vpop.f32.mrf.mxu0
        %v3703 = vadd.f32 0.0, %v3702
        %3704 = vmatmul.f32.gmra.mxu0 %v3642
        %v3705 = vpop.f32.mrf.mxu0
        %v3706 = vadd.f32 0.0, %v3705
        %3707 = vdwg.mxu0
        %3708 = vmatpush.msra.mxu0 0.0
        %3709 = vmatpush.msra.mxu0 0.0
        %3710 = vmatpush.msra.mxu0 0.0
        %3711 = vmatpush.msra.mxu0 0.0
        %3712 = vmatpush.msra.mxu0 0.0
        %3713 = vmatpush.msra.mxu0 0.0
        %3714 = vmatpush.msra.mxu0 0.0
        %3715 = vmatpush.msra.mxu0 0.0
        %3716 = vmatpush.msra.mxu0 0.0
        %3717 = vmatpush.msra.mxu0 0.0
        %3718 = vmatpush.msra.mxu0 0.0
        %3719 = vmatpush.msra.mxu0 0.0
        %3720 = vmatpush.msra.mxu0 0.0
        %3721 = vmatpush.msra.mxu0 0.0
        %3722 = vmatpush.msra.mxu0 %v3648
        %3723 = vmatpush.msra.mxu0 %v3618
        %3724 = vmatmul.f32.gmra.mxu0 %v3633
        %v3725 = vpop.f32.mrf.mxu0
        %v3726 = vadd.f32 0.0, %v3725
        %3727 = vmatmul.f32.gmra.mxu0 %v3636
        %v3728 = vpop.f32.mrf.mxu0
        %v3729 = vadd.f32 0.0, %v3728
        %3730 = vmatmul.f32.gmra.mxu0 %v3639
        %v3731 = vpop.f32.mrf.mxu0
        %v3732 = vadd.f32 0.0, %v3731
        %3733 = vmatmul.f32.gmra.mxu0 %v3642
        %v3734 = vpop.f32.mrf.mxu0
        %v3735 = vadd.f32 0.0, %v3734
        %3736 = vdwg.mxu0
        %v3737 = vadd.f32 %v3550, %v3668
        %v3738 = vadd.f32 %v3551, %v3697
        %v3739 = vadd.f32 %v3552, %v3726
        %v3740 = vadd.f32 %v3553, %v3671
        %v3741 = vadd.f32 %v3554, %v3700
        %v3742 = vadd.f32 %v3555, %v3729
        %v3743 = vadd.f32 %v3556, %v3674
        %v3744 = vadd.f32 %v3557, %v3703
        %v3745 = vadd.f32 %v3558, %v3732
        %v3746 = vadd.f32 %v3559, %v3677
        %v3747 = vadd.f32 %v3560, %v3706
        %v3748 = vadd.f32 %v3561, %v3735
        %v3749 = vmul.f32 %v3737, %v2055
        %v3750 = vmul.f32 %v3738, %v2055
        %v3751 = vmul.f32 %v3739, %v2055
        %v3752 = vmul.f32 %v3740, %v2060
        %v3753 = vmul.f32 %v3741, %v2060
        %v3754 = vmul.f32 %v3742, %v2060
        %v3755 = vmul.f32 %v3743, %v2065
        %v3756 = vmul.f32 %v3744, %v2065
        %v3757 = vmul.f32 %v3745, %v2065
        %v3758 = vmul.f32 %v3746, %v2070
        %v3759 = vmul.f32 %v3747, %v2070
        %v3760 = vmul.f32 %v3748, %v2070
        %v3761 = vadd.f32 %v3749, %v2087
        %v3762 = vadd.f32 %v3750, %v2087
        %v3763 = vadd.f32 %v3751, %v2087
        %v3764 = vadd.f32 %v3752, %v2092
        %v3765 = vadd.f32 %v3753, %v2092
        %v3766 = vadd.f32 %v3754, %v2092
        %v3767 = vadd.f32 %v3755, %v2097
        %v3768 = vadd.f32 %v3756, %v2097
        %v3769 = vadd.f32 %v3757, %v2097
        %v3770 = vadd.f32 %v3758, %v2102
        %v3771 = vadd.f32 %v3759, %v2102
        %v3772 = vadd.f32 %v3760, %v2102
        %v3773 = vmax.f32 %v3761, 0.0
        %v3774 = vmax.f32 %v3762, 0.0
        %v3775 = vmax.f32 %v3763, 0.0
        %v3776 = vmax.f32 %v3764, 0.0
        %v3777 = vmax.f32 %v3765, 0.0
        %v3778 = vmax.f32 %v3766, 0.0
        %v3779 = vmax.f32 %v3767, 0.0
        %v3780 = vmax.f32 %v3768, 0.0
        %v3781 = vmax.f32 %v3769, 0.0
        %v3782 = vmax.f32 %v3770, 0.0
        %v3783 = vmax.f32 %v3771, 0.0
        %v3784 = vmax.f32 %v3772, 0.0
        %s3785 = scalar_lea.vmem %s418, 96 [#allocation7]
        %3786 = vst [vmem:[%s3785] sm:$0xff] %v3773
        %3787 = vst [vmem:[%s3785 + $0x8] sm:$0xff] %v3774
        %3788 = vst.msk [vmem:[%s3785 + $0x10] sm:$0xff] %vm2130, %v3775
        %3789 = vst [vmem:[%s3785 + $0x18] sm:$0xff] %v3776
        %3790 = vst [vmem:[%s3785 + $0x20] sm:$0xff] %v3777
        %3791 = vst.msk [vmem:[%s3785 + $0x28] sm:$0xff] %vm2130, %v3778
        %3792 = vst [vmem:[%s3785 + $0x30] sm:$0xff] %v3779
        %3793 = vst [vmem:[%s3785 + $0x38] sm:$0xff] %v3780
        %3794 = vst.msk [vmem:[%s3785 + $0x40] sm:$0xff] %vm2130, %v3781
        %3795 = vst [vmem:[%s3785 + $0x48] sm:$0xff] %v3782
        %3796 = vst [vmem:[%s3785 + $0x50] sm:$0xff] %v3783
        %3797 = vst.msk [vmem:[%s3785 + $0x58] sm:$0xff] %vm2130, %v3784
        %s3798 = sand.u32 %s196, 1
        %s3799 = scalar_lea.sflag [#allocation6], %s3798
        %s3800 = sand.u32 %s196, 1
        %s3801 = smul.addr %s3800, 192
        %s3802 = scalar_lea.vmem [#allocation7], %s3801
        // Predicated region
        $region101: #{tpu_custom_call.1} parent=87 // pred_check
          %p3803 = pneg %p206
        $region102: #{tpu_custom_call.1} parent=87 // pred_check_branch
          %3805 = sbr.rel (%p3803) target = $region104
        $region103: #{tpu_custom_call.1} parent=87 // pred_region
          #allocation9 [shape = 'u32[6]{0}', space=smem, size = 0x18, scoped, tag = 'DMA stride descriptor']
          %s3806 = smul.u32 2, %s27
          %3808 = vsyncadd %s3799, 0
          %s3809 = smul.addr %s28, 12
          %s3810 = smul.addr %s3806, 96
          %s3811 = sadd.s32 %s3809, %s3810
          %s3812 = smul.addr %s3811, 8
          %s3813 = scalar_lea.hbm %s6, %s3812
          %s3815 = sshll.u32 1, 14
          %s3816 = sxor.u32 4294967295, %s3815
          %s3819 = sshll.u32 7, 18
          %s3820 = sxor.u32 4294967295, %s3819
          %s3821 = sand.u32 0, %s3820
          %s3823 = sor.u32 %s3821, 0
          %s3824 = sshll.u32 %s3802, 4
          %s3825 = int_to_ptr.vmem [resolvable:$true] %s3824
          %s3826 = sshll.u32 %s3813, 4
          %s3827 = int_to_ptr.hbm [resolvable:$true] %s3826
          %3833 = sst [smem:[#allocation9]] 1536
          %s3834 = scalar_lea.smem [#allocation9], 1
          %3835 = sst [smem:[%s3834]] 12288
          %s3836 = scalar_lea.smem [#allocation9], 2
          %3837 = sst [smem:[%s3836]] 4
          %s3838 = scalar_lea.smem [#allocation9], 3
          %3839 = sst [smem:[%s3838]] 384
          %s3840 = scalar_lea.smem [#allocation9], 4
          %3841 = sst [smem:[%s3840]] 384
          %s3842 = scalar_lea.smem [#allocation9], 5
          %3843 = sst [smem:[%s3842]] 24
          %3845 = dma.general %s3825, 3072, %s3827, %s3799, [#allocation8], [#allocation9], %s3823, 0
        $region104: #{tpu_custom_call.1} parent=87 // pred_fallthru
          _
      $region88: #{tpu_custom_call.1} parent=5 // pred_fallthru
        _
      %p3846 = scmp.le.s32.totalorder 2, %s18
      // Predicated region
      $region105: #{tpu_custom_call.1} parent=5 // pred_check
        %p3847 = pneg %p3846
      $region106: #{tpu_custom_call.1} parent=5 // pred_check_branch
        %3849 = sbr.rel (%p3847) target = $region108
      $region107: #{tpu_custom_call.1} parent=5 // pred_region
        %s3850 = ssub.s32 %s18, 2
        // Predicated region
        $region109: #{tpu_custom_call.1} parent=107 // pred_check
          %p3851 = pneg %p212
        $region110: #{tpu_custom_call.1} parent=107 // pred_check_branch
          %3853 = sbr.rel (%p3851) target = $region112
        $region111: #{tpu_custom_call.1} parent=107 // pred_region
          %s3854 = sand.u32 %s197, 1
          %s3855 = scalar_lea.sflag [#allocation6], %s3854
          %s3856 = sand.u32 %s197, 1
          %s3857 = smul.addr %s3856, 192
          %s3858 = scalar_lea.vmem [#allocation7], %s3857
          %3860 = dma.done %s3855, 3072
        $region112: #{tpu_custom_call.1} parent=107 // pred_fallthru
          _
      $region108: #{tpu_custom_call.1} parent=5 // pred_fallthru
        _
    $region6: #{tpu_custom_call.1} parent=1 // loop_footer
      %s22 = sadd.s32 1, %s18
    $region7: #{tpu_custom_call.1} parent=1 // loop_footer_branch
      %17 = sbr.rel target = $region3
    $region8: #{tpu_custom_call.1} parent=1 // loop_exit
      _
    %3861 = vsyncpa [#allocation5], 1
    %s3862 = scalar_lea.sflag [#allocation5], 1
    %3863 = vsyncpa %s3862, 1
    %3864 = vsyncpa [#allocation6], 1
    %s3865 = scalar_lea.sflag [#allocation6], 1
    %3866 = vsyncpa %s3865, 1

</llo_original>
